<compile_context>
chip_gen: v6e
topology: v6e:2x2x1
jax: 0.10.0
libtpu: 0.0.40
codegen_flags: <defaults>
</compile_context>

<pallas_src>
import functools

import jax
import jax.numpy as jnp
import numpy as np
from jax.experimental import pallas as pl
from jax.experimental.pallas import tpu as pltpu


# ------------------------------ fused kernel --------------------------------
def _fused_kernel(x_ref, wsq_ref, bsq_ref, asq_ref,
                  wmid_ref, bmid_ref, amid_ref,
                  wex_ref, bex_ref, aex_ref, o_ref, *, H):
    """Whole brm_low_inner_block; batch folded into the matmul M dimension.

    x_ref    : (N*H, W*C)          lane-dense activation rows (f32)
    wsq_ref  : (3,  W*C,  W*Cq)    block-diag 1x1 squeeze weights   (bf16)
    wmid_ref : (12, 3*W*Cq, W*Cq)  block-banded 3x3 weights, dy-major (bf16)
    wex_ref  : (3,  W*Cq, W*C)     block-diag 1x1 expand weights    (bf16)
    b*/a*    : per-layer bias / PReLU slope tiled across W (f32 lane rows)
    o_ref    : (N*H, W*C)
    """
    NH = x_ref.shape[0]
    n_blocks = wsq_ref.shape[0]
    n_small = wmid_ref.shape[0] // n_blocks

    # Per-sample border masks for the sublane rolls (hoisted; VPU-only).
    row = jax.lax.broadcasted_iota(jnp.int32, (NH, 1), 0)
    is_top = (row % H) == 0           # row h-1 does not exist -> zero 'up'
    is_bot = (row % H) == (H - 1)     # row h+1 does not exist -> zero 'dn'

    res = x_ref[...].astype(jnp.float32)           # residual carrier (f32)

    for blk in range(n_blocks):
        # ---- squeeze: Conv1x1 C->C/4 + PReLU (one block-diag matmul) -------
        y = jnp.dot(res.astype(jnp.bfloat16), wsq_ref[blk],
                    preferred_element_type=jnp.float32)
        y = y + bsq_ref[blk:blk + 1, :]
        y = jnp.where(y > 0, y, asq_ref[blk:blk + 1, :] * y)

        # ---- 4 x (Conv3x3 + PReLU) ------------------------------------------
        # Neighbour rows via XLU sublane rolls (replaces the K=8 shift
        # matmuls); wrapped / cross-sample rows are zeroed with the masks.
        for l in range(n_small):
            idx = blk * n_small + l
            up = jnp.where(is_top, 0.0, pltpu.roll(y, shift=1, axis=0))
            dn = jnp.where(is_bot, 0.0, pltpu.roll(y, shift=NH - 1, axis=0))
            xcat = jnp.concatenate([up, y, dn], axis=1)        # (NH, 3*W*Cq)
            y = jnp.dot(xcat.astype(jnp.bfloat16), wmid_ref[idx],
                        preferred_element_type=jnp.float32)
            y = y + bmid_ref[idx:idx + 1, :]
            y = jnp.where(y > 0, y, amid_ref[idx:idx + 1, :] * y)

        # ---- expand: Conv1x1 C/4->C + PReLU, then mini_conv residual --------
        z = jnp.dot(y.astype(jnp.bfloat16), wex_ref[blk],
                    preferred_element_type=jnp.float32)
        z = z + bex_ref[blk:blk + 1, :]
        z = jnp.where(z > 0, z, aex_ref[blk:blk + 1, :] * z)
        res = res + z

    o_ref[...] = res.astype(o_ref.dtype)


# ------------------------------ wrapper --------------------------------------
def brm_low_inner_block_forward(x_nhwc, packed):
    """x_nhwc: (N,H,W,64) -> (N,H,W,64) with a single fused Pallas kernel."""
    N, H, W, C = x_nhwc.shape
    Cq = C // 4
    WC, WCq = W * C, W * Cq
    # Lane-density assumptions (unmasked vst, 128-aligned lane concat).
    assert WC % 128 == 0 and WCq % 128 == 0, "need W*C and W*C/4 multiples of 128"
    assert (N * H) % 8 == 0, "folded row count must be a multiple of 8 sublanes"

    x_rows = x_nhwc.reshape(N * H, WC)             # lane-dense rows (layout only)

    (wsq, bsq, asq, wmid, bmid, amid, wex, bex, aex) = packed
    n_blocks = wsq.shape[0]
    n_small = wmid.shape[0] // n_blocks

    # Advisory cost so XLA can overlap the weight DMA with neighbouring ops.
    NH = N * H
    flops = n_blocks * (2 * NH * WC * WCq
                        + n_small * 2 * NH * (3 * WCq) * WCq
                        + 2 * NH * WCq * WC)
    operands = (x_rows, wsq, bsq, asq, wmid, bmid, amid, wex, bex, aex)
    bytes_accessed = sum(int(np.prod(a.shape)) * a.dtype.itemsize
                         for a in operands)
    bytes_accessed += NH * WC * x_rows.dtype.itemsize        # output

    vmem_full = pl.BlockSpec(memory_space=pltpu.MemorySpace.VMEM)

    out_rows = pl.pallas_call(
        functools.partial(_fused_kernel, H=H),
        out_shape=jax.ShapeDtypeStruct((NH, WC), x_nhwc.dtype),
        # No grid: every operand is one VMEM-resident block (no per-step
        # overhead, no weight double-buffering; ~2.1 MB total VMEM).
        in_specs=[vmem_full] * len(operands),
        out_specs=vmem_full,
        cost_estimate=pl.CostEstimate(flops=int(flops), transcendentals=0,
                                      bytes_accessed=int(bytes_accessed)),
    )(*operands)

    return out_rows.reshape(N, H, W, C)


# --------------------------- parameter handling ------------------------------
def init_raw_params(key, n_feat=64, n_small=4, n_blocks=3):
    """Deterministic synthetic params with PyTorch (OIHW) conv shapes."""
    c = n_feat // 4
    dims = [(n_feat, c, 1)] + [(c, c, 3)] * n_small + [(c, n_feat, 1)]
    blocks = []
    for _ in range(n_blocks):
        layers = []
        for (cin, cout, k) in dims:
            key, k1, k2 = jax.random.split(key, 3)
            fan_in = cin * k * k
            w = (jax.random.normal(k1, (cout, cin, k, k), jnp.float32)
                 / np.sqrt(fan_in))
            b = jax.random.normal(k2, (cout,), jnp.float32) * 0.01
            a = jnp.full((cout,), 0.25, jnp.float32)    # PReLU default init
            layers.append((w, b, a))
        blocks.append(layers)
    return blocks


def pack_params(raw_blocks, W):
    """Repack convs into dense matrices acting on (rows, W*channels) layout.

    1x1 conv  -> kron(I_W, W1)                       (block diagonal)
    3x3 conv  -> per dy: sum_dx kron(shift_dx, Wdydx) (block banded; W shifts
                 and the zero 'same' padding folded in), stacked over dy to a
                 single (3*W*Cin, W*Cout) matrix (dy-major: rows h-1, h, h+1).
    bias/PReLU slope -> tiled across W to a lane row.
    Weights ship as bf16 (MXU inputs); bias/slope stay f32.
    """
    eye_w = np.eye(W, dtype=np.float32)
    wsq, bsq, asq, wmid, bmid, amid, wex, bex, aex = ([] for _ in range(9))
    for layers in raw_blocks:
        w0, b0, a0 = layers[0]
        m0 = np.asarray(w0)[:, :, 0, 0].T                     # (Cin, Cout)
        wsq.append(np.kron(eye_w, m0))
        bsq.append(np.tile(np.asarray(b0), W))
        asq.append(np.tile(np.asarray(a0), W))

        for (w3, b3, a3) in layers[1:-1]:
            k = np.transpose(np.asarray(w3), (2, 3, 1, 0))    # (kh,kw,Cin,Cout)
            kh, kw, cin, cout = k.shape
            mats = []
            for dy in range(kh):
                m = np.zeros((W * cin, W * cout), np.float32)
                for dx in range(kw):
                    # output col w reads input col w + dx - kw//2;
                    # out-of-range columns drop out (zero 'same' padding).
                    m += np.kron(np.eye(W, k=(kw // 2) - dx, dtype=np.float32),
                                 k[dy, dx])
                mats.append(m)
            wmid.append(np.concatenate(mats, axis=0))         # (kh*W*Cin, W*Cout)
            bmid.append(np.tile(np.asarray(b3), W))
            amid.append(np.tile(np.asarray(a3), W))

        w5, b5, a5 = layers[-1]
        m5 = np.asarray(w5)[:, :, 0, 0].T
        wex.append(np.kron(eye_w, m5))
        bex.append(np.tile(np.asarray(b5), W))
        aex.append(np.tile(np.asarray(a5), W))

    def to_w(xs):  # MXU inputs -> bf16 (halves the dominant weight DMA)
        return jnp.asarray(np.stack(xs), dtype=jnp.bfloat16)

    def to_f(xs):  # bias / PReLU slope stay f32
        return jnp.asarray(np.stack(xs), dtype=jnp.float32)

    return (to_w(wsq), to_f(bsq), to_f(asq),
            to_w(wmid), to_f(bmid), to_f(amid),
            to_w(wex), to_f(bex), to_f(aex))


# ----------------------------- pure-JAX reference ----------------------------
def _ref_forward(x_nhwc, raw_blocks):
    x = x_nhwc
    for layers in raw_blocks:
        y = x
        for (w, b, a) in layers:
            wk = jnp.transpose(w, (2, 3, 1, 0))               # OIHW -> HWIO
            y = jax.lax.conv_general_dilated(
                y, wk, window_strides=(1, 1), padding="SAME",
                dimension_numbers=("NHWC", "HWIO", "NHWC"))
            y = y + b[None, None, None, :]
            y = jnp.where(y > 0, y, a[None, None, None, :] * y)
        x = x + y                                              # mini_conv skip
    return x


if __name__ == "__main__":
    key = jax.random.PRNGKey(0)
    k_x, k_p = jax.random.split(key)

    # PyTorch-style NCHW example input; channels fixed at 64 by mini_conv().
    N, C, H, W = 2, 64, 8, 8
    x_nchw = jax.random.normal(k_x, (N, C, H, W), jnp.float32)
    x_nhwc = jnp.transpose(x_nchw, (0, 2, 3, 1))

    raw = init_raw_params(k_p)
    packed = pack_params(raw, W)

    out = jax.block_until_ready(brm_low_inner_block_forward(x_nhwc, packed))
    ref = jax.block_until_ready(_ref_forward(x_nhwc, raw))

    # bf16 MXU inputs (18 chained conv layers) -> relaxed from the f32 2e-3.
    np.testing.assert_allclose(np.asarray(out), np.asarray(ref),
                               rtol=3e-2, atol=3e-2)
    assert out.shape == (N, H, W, C)
    print("KERNEL_OK")
</pallas_src>

<mosaic_0001>
module attributes {stable_mosaic.version = 11 : i64} {
  func.func @_fused_kernel(%arg0: memref<16x512xf32, #tpu.memory_space<vmem>>, %arg1: memref<3x512x128xbf16, #tpu.memory_space<vmem>>, %arg2: memref<3x128xf32, #tpu.memory_space<vmem>>, %arg3: memref<3x128xf32, #tpu.memory_space<vmem>>, %arg4: memref<12x384x128xbf16, #tpu.memory_space<vmem>>, %arg5: memref<12x128xf32, #tpu.memory_space<vmem>>, %arg6: memref<12x128xf32, #tpu.memory_space<vmem>>, %arg7: memref<3x128x512xbf16, #tpu.memory_space<vmem>>, %arg8: memref<3x512xf32, #tpu.memory_space<vmem>>, %arg9: memref<3x512xf32, #tpu.memory_space<vmem>>, %arg10: memref<16x512xf32, #tpu.memory_space<vmem>>) attributes {dimension_semantics = [], scalar_prefetch = 0 : i64, scratch_operands = 0 : i64, tpu.core_type = #tpu.core_type<tc>} {
    %0 = tpu.iota {dimensions = array<i32: 0>} : vector<16x1xi32>
    %c8_i32 = arith.constant 8 : i32
    %c0_i32 = arith.constant 0 : i32
    %1 = arith.cmpi eq, %c8_i32, %c0_i32 : i32
    %c1_i32 = arith.constant 1 : i32
    %2 = arith.select %1, %c1_i32, %c8_i32 : i32
    %3 = vector.broadcast %2 : i32 to vector<16x1xi32>
    %4 = arith.remsi %0, %3 : vector<16x1xi32>
    %c0_i32_0 = arith.constant 0 : i32
    %5 = vector.broadcast %c0_i32_0 : i32 to vector<16x1xi32>
    %6 = arith.cmpi ne, %4, %5 : vector<16x1xi32>
    %c0_i32_1 = arith.constant 0 : i32
    %7 = vector.broadcast %c0_i32_1 : i32 to vector<16x1xi32>
    %8 = arith.cmpi slt, %4, %7 : vector<16x1xi32>
    %c0_i32_2 = arith.constant 0 : i32
    %9 = arith.cmpi slt, %2, %c0_i32_2 : i32
    %10 = vector.broadcast %9 : i1 to vector<16x1xi1>
    %11 = vector.broadcast %10 : vector<16x1xi1> to vector<16x1xi1>
    %12 = arith.xori %8, %11 : vector<16x1xi1>
    %13 = arith.andi %12, %6 : vector<16x1xi1>
    %14 = vector.broadcast %2 : i32 to vector<16x1xi32>
    %15 = arith.addi %4, %14 : vector<16x1xi32>
    %16 = arith.select %13, %15, %4 : vector<16x1xi1>, vector<16x1xi32>
    %c0_i32_3 = arith.constant 0 : i32
    %17 = vector.broadcast %c0_i32_3 : i32 to vector<16x1xi32>
    %18 = arith.cmpi eq, %16, %17 : vector<16x1xi32>
    %c8_i32_4 = arith.constant 8 : i32
    %c0_i32_5 = arith.constant 0 : i32
    %19 = arith.cmpi eq, %c8_i32_4, %c0_i32_5 : i32
    %c1_i32_6 = arith.constant 1 : i32
    %20 = arith.select %19, %c1_i32_6, %c8_i32_4 : i32
    %21 = vector.broadcast %20 : i32 to vector<16x1xi32>
    %22 = arith.remsi %0, %21 : vector<16x1xi32>
    %c0_i32_7 = arith.constant 0 : i32
    %23 = vector.broadcast %c0_i32_7 : i32 to vector<16x1xi32>
    %24 = arith.cmpi ne, %22, %23 : vector<16x1xi32>
    %c0_i32_8 = arith.constant 0 : i32
    %25 = vector.broadcast %c0_i32_8 : i32 to vector<16x1xi32>
    %26 = arith.cmpi slt, %22, %25 : vector<16x1xi32>
    %c0_i32_9 = arith.constant 0 : i32
    %27 = arith.cmpi slt, %20, %c0_i32_9 : i32
    %28 = vector.broadcast %27 : i1 to vector<16x1xi1>
    %29 = vector.broadcast %28 : vector<16x1xi1> to vector<16x1xi1>
    %30 = arith.xori %26, %29 : vector<16x1xi1>
    %31 = arith.andi %30, %24 : vector<16x1xi1>
    %32 = vector.broadcast %20 : i32 to vector<16x1xi32>
    %33 = arith.addi %22, %32 : vector<16x1xi32>
    %34 = arith.select %31, %33, %22 : vector<16x1xi1>, vector<16x1xi32>
    %c7_i32 = arith.constant 7 : i32
    %35 = vector.broadcast %c7_i32 : i32 to vector<16x1xi32>
    %36 = arith.cmpi eq, %34, %35 : vector<16x1xi32>
    %c0 = arith.constant 0 : index
    %c0_10 = arith.constant 0 : index
    %37 = vector.load %arg0[%c0, %c0_10] : memref<16x512xf32, #tpu.memory_space<vmem>>, vector<16x512xf32>
    %38 = arith.truncf %37 : vector<16x512xf32> to vector<16x512xbf16>
    %c0_11 = arith.constant 0 : index
    %c0_12 = arith.constant 0 : index
    %c0_13 = arith.constant 0 : index
    %39 = vector.load %arg1[%c0_11, %c0_12, %c0_13] : memref<3x512x128xbf16, #tpu.memory_space<vmem>>, vector<1x512x128xbf16>
    %40 = vector.shape_cast %39 : vector<1x512x128xbf16> to vector<512x128xbf16>
    %cst = arith.constant dense<0.000000e+00> : vector<16x128xf32>
    %41 = tpu.matmul %38, %40, %cst {dimension_numbers = #tpu.dot_dimension_numbers<[1], [0], [0], [1], [0, 0, 1, 1], [], []>} : vector<16x512xbf16>, vector<512x128xbf16>, vector<16x128xf32> -> vector<16x128xf32>
    %c0_14 = arith.constant 0 : index
    %c0_15 = arith.constant 0 : index
    %42 = vector.load %arg2[%c0_14, %c0_15] : memref<3x128xf32, #tpu.memory_space<vmem>>, vector<1x128xf32>
    %43 = vector.broadcast %42 : vector<1x128xf32> to vector<16x128xf32>
    %44 = arith.addf %41, %43 : vector<16x128xf32>
    %cst_16 = arith.constant 0.000000e+00 : f32
    %45 = vector.broadcast %cst_16 : f32 to vector<16x128xf32>
    %46 = arith.cmpf ogt, %44, %45 : vector<16x128xf32>
    %c0_17 = arith.constant 0 : index
    %c0_18 = arith.constant 0 : index
    %47 = vector.load %arg3[%c0_17, %c0_18] : memref<3x128xf32, #tpu.memory_space<vmem>>, vector<1x128xf32>
    %48 = vector.broadcast %47 : vector<1x128xf32> to vector<16x128xf32>
    %49 = arith.mulf %48, %44 : vector<16x128xf32>
    %50 = arith.select %46, %44, %49 : vector<16x128xi1>, vector<16x128xf32>
    %c1_i32_19 = arith.constant 1 : i32
    %51 = tpu.dynamic_rotate %50 by %c1_i32_19 dim 0 : vector<16x128xf32>, i32 -> vector<16x128xf32>
    %cst_20 = arith.constant 0.000000e+00 : f32
    %52 = vector.shape_cast %18 : vector<16x1xi1> to vector<16x1xi1>
    %53 = vector.broadcast %52 : vector<16x1xi1> to vector<16x128xi1>
    %54 = vector.broadcast %cst_20 : f32 to vector<16x128xf32>
    %55 = arith.select %53, %54, %51 : vector<16x128xi1>, vector<16x128xf32>
    %c15_i32 = arith.constant 15 : i32
    %56 = tpu.dynamic_rotate %50 by %c15_i32 dim 0 : vector<16x128xf32>, i32 -> vector<16x128xf32>
    %cst_21 = arith.constant 0.000000e+00 : f32
    %57 = vector.shape_cast %36 : vector<16x1xi1> to vector<16x1xi1>
    %58 = vector.broadcast %57 : vector<16x1xi1> to vector<16x128xi1>
    %59 = vector.broadcast %cst_21 : f32 to vector<16x128xf32>
    %60 = arith.select %58, %59, %56 : vector<16x128xi1>, vector<16x128xf32>
    %61 = tpu.concatenate %55, %50, %60 in 1 : vector<16x128xf32>, vector<16x128xf32>, vector<16x128xf32> -> vector<16x384xf32>
    %62 = arith.truncf %61 : vector<16x384xf32> to vector<16x384xbf16>
    %c0_22 = arith.constant 0 : index
    %c0_23 = arith.constant 0 : index
    %c0_24 = arith.constant 0 : index
    %63 = vector.load %arg4[%c0_22, %c0_23, %c0_24] : memref<12x384x128xbf16, #tpu.memory_space<vmem>>, vector<1x384x128xbf16>
    %64 = vector.shape_cast %63 : vector<1x384x128xbf16> to vector<384x128xbf16>
    %cst_25 = arith.constant dense<0.000000e+00> : vector<16x128xf32>
    %65 = tpu.matmul %62, %64, %cst_25 {dimension_numbers = #tpu.dot_dimension_numbers<[1], [0], [0], [1], [0, 0, 1, 1], [], []>} : vector<16x384xbf16>, vector<384x128xbf16>, vector<16x128xf32> -> vector<16x128xf32>
    %c0_26 = arith.constant 0 : index
    %c0_27 = arith.constant 0 : index
    %66 = vector.load %arg5[%c0_26, %c0_27] : memref<12x128xf32, #tpu.memory_space<vmem>>, vector<1x128xf32>
    %67 = vector.broadcast %66 : vector<1x128xf32> to vector<16x128xf32>
    %68 = arith.addf %65, %67 : vector<16x128xf32>
    %cst_28 = arith.constant 0.000000e+00 : f32
    %69 = vector.broadcast %cst_28 : f32 to vector<16x128xf32>
    %70 = arith.cmpf ogt, %68, %69 : vector<16x128xf32>
    %c0_29 = arith.constant 0 : index
    %c0_30 = arith.constant 0 : index
    %71 = vector.load %arg6[%c0_29, %c0_30] : memref<12x128xf32, #tpu.memory_space<vmem>>, vector<1x128xf32>
    %72 = vector.broadcast %71 : vector<1x128xf32> to vector<16x128xf32>
    %73 = arith.mulf %72, %68 : vector<16x128xf32>
    %74 = arith.select %70, %68, %73 : vector<16x128xi1>, vector<16x128xf32>
    %c1_i32_31 = arith.constant 1 : i32
    %75 = tpu.dynamic_rotate %74 by %c1_i32_31 dim 0 : vector<16x128xf32>, i32 -> vector<16x128xf32>
    %cst_32 = arith.constant 0.000000e+00 : f32
    %76 = vector.shape_cast %18 : vector<16x1xi1> to vector<16x1xi1>
    %77 = vector.broadcast %76 : vector<16x1xi1> to vector<16x128xi1>
    %78 = vector.broadcast %cst_32 : f32 to vector<16x128xf32>
    %79 = arith.select %77, %78, %75 : vector<16x128xi1>, vector<16x128xf32>
    %c15_i32_33 = arith.constant 15 : i32
    %80 = tpu.dynamic_rotate %74 by %c15_i32_33 dim 0 : vector<16x128xf32>, i32 -> vector<16x128xf32>
    %cst_34 = arith.constant 0.000000e+00 : f32
    %81 = vector.shape_cast %36 : vector<16x1xi1> to vector<16x1xi1>
    %82 = vector.broadcast %81 : vector<16x1xi1> to vector<16x128xi1>
    %83 = vector.broadcast %cst_34 : f32 to vector<16x128xf32>
    %84 = arith.select %82, %83, %80 : vector<16x128xi1>, vector<16x128xf32>
    %85 = tpu.concatenate %79, %74, %84 in 1 : vector<16x128xf32>, vector<16x128xf32>, vector<16x128xf32> -> vector<16x384xf32>
    %86 = arith.truncf %85 : vector<16x384xf32> to vector<16x384xbf16>
    %c1 = arith.constant 1 : index
    %c0_35 = arith.constant 0 : index
    %c0_36 = arith.constant 0 : index
    %87 = vector.load %arg4[%c1, %c0_35, %c0_36] : memref<12x384x128xbf16, #tpu.memory_space<vmem>>, vector<1x384x128xbf16>
    %88 = vector.shape_cast %87 : vector<1x384x128xbf16> to vector<384x128xbf16>
    %cst_37 = arith.constant dense<0.000000e+00> : vector<16x128xf32>
    %89 = tpu.matmul %86, %88, %cst_37 {dimension_numbers = #tpu.dot_dimension_numbers<[1], [0], [0], [1], [0, 0, 1, 1], [], []>} : vector<16x384xbf16>, vector<384x128xbf16>, vector<16x128xf32> -> vector<16x128xf32>
    %c1_38 = arith.constant 1 : index
    %c0_39 = arith.constant 0 : index
    %90 = vector.load %arg5[%c1_38, %c0_39] : memref<12x128xf32, #tpu.memory_space<vmem>>, vector<1x128xf32>
    %91 = vector.broadcast %90 : vector<1x128xf32> to vector<16x128xf32>
    %92 = arith.addf %89, %91 : vector<16x128xf32>
    %cst_40 = arith.constant 0.000000e+00 : f32
    %93 = vector.broadcast %cst_40 : f32 to vector<16x128xf32>
    %94 = arith.cmpf ogt, %92, %93 : vector<16x128xf32>
    %c1_41 = arith.constant 1 : index
    %c0_42 = arith.constant 0 : index
    %95 = vector.load %arg6[%c1_41, %c0_42] : memref<12x128xf32, #tpu.memory_space<vmem>>, vector<1x128xf32>
    %96 = vector.broadcast %95 : vector<1x128xf32> to vector<16x128xf32>
    %97 = arith.mulf %96, %92 : vector<16x128xf32>
    %98 = arith.select %94, %92, %97 : vector<16x128xi1>, vector<16x128xf32>
    %c1_i32_43 = arith.constant 1 : i32
    %99 = tpu.dynamic_rotate %98 by %c1_i32_43 dim 0 : vector<16x128xf32>, i32 -> vector<16x128xf32>
    %cst_44 = arith.constant 0.000000e+00 : f32
    %100 = vector.shape_cast %18 : vector<16x1xi1> to vector<16x1xi1>
    %101 = vector.broadcast %100 : vector<16x1xi1> to vector<16x128xi1>
    %102 = vector.broadcast %cst_44 : f32 to vector<16x128xf32>
    %103 = arith.select %101, %102, %99 : vector<16x128xi1>, vector<16x128xf32>
    %c15_i32_45 = arith.constant 15 : i32
    %104 = tpu.dynamic_rotate %98 by %c15_i32_45 dim 0 : vector<16x128xf32>, i32 -> vector<16x128xf32>
    %cst_46 = arith.constant 0.000000e+00 : f32
    %105 = vector.shape_cast %36 : vector<16x1xi1> to vector<16x1xi1>
    %106 = vector.broadcast %105 : vector<16x1xi1> to vector<16x128xi1>
    %107 = vector.broadcast %cst_46 : f32 to vector<16x128xf32>
    %108 = arith.select %106, %107, %104 : vector<16x128xi1>, vector<16x128xf32>
    %109 = tpu.concatenate %103, %98, %108 in 1 : vector<16x128xf32>, vector<16x128xf32>, vector<16x128xf32> -> vector<16x384xf32>
    %110 = arith.truncf %109 : vector<16x384xf32> to vector<16x384xbf16>
    %c2 = arith.constant 2 : index
    %c0_47 = arith.constant 0 : index
    %c0_48 = arith.constant 0 : index
    %111 = vector.load %arg4[%c2, %c0_47, %c0_48] : memref<12x384x128xbf16, #tpu.memory_space<vmem>>, vector<1x384x128xbf16>
    %112 = vector.shape_cast %111 : vector<1x384x128xbf16> to vector<384x128xbf16>
    %cst_49 = arith.constant dense<0.000000e+00> : vector<16x128xf32>
    %113 = tpu.matmul %110, %112, %cst_49 {dimension_numbers = #tpu.dot_dimension_numbers<[1], [0], [0], [1], [0, 0, 1, 1], [], []>} : vector<16x384xbf16>, vector<384x128xbf16>, vector<16x128xf32> -> vector<16x128xf32>
    %c2_50 = arith.constant 2 : index
    %c0_51 = arith.constant 0 : index
    %114 = vector.load %arg5[%c2_50, %c0_51] : memref<12x128xf32, #tpu.memory_space<vmem>>, vector<1x128xf32>
    %115 = vector.broadcast %114 : vector<1x128xf32> to vector<16x128xf32>
    %116 = arith.addf %113, %115 : vector<16x128xf32>
    %cst_52 = arith.constant 0.000000e+00 : f32
    %117 = vector.broadcast %cst_52 : f32 to vector<16x128xf32>
    %118 = arith.cmpf ogt, %116, %117 : vector<16x128xf32>
    %c2_53 = arith.constant 2 : index
    %c0_54 = arith.constant 0 : index
    %119 = vector.load %arg6[%c2_53, %c0_54] : memref<12x128xf32, #tpu.memory_space<vmem>>, vector<1x128xf32>
    %120 = vector.broadcast %119 : vector<1x128xf32> to vector<16x128xf32>
    %121 = arith.mulf %120, %116 : vector<16x128xf32>
    %122 = arith.select %118, %116, %121 : vector<16x128xi1>, vector<16x128xf32>
    %c1_i32_55 = arith.constant 1 : i32
    %123 = tpu.dynamic_rotate %122 by %c1_i32_55 dim 0 : vector<16x128xf32>, i32 -> vector<16x128xf32>
    %cst_56 = arith.constant 0.000000e+00 : f32
    %124 = vector.shape_cast %18 : vector<16x1xi1> to vector<16x1xi1>
    %125 = vector.broadcast %124 : vector<16x1xi1> to vector<16x128xi1>
    %126 = vector.broadcast %cst_56 : f32 to vector<16x128xf32>
    %127 = arith.select %125, %126, %123 : vector<16x128xi1>, vector<16x128xf32>
    %c15_i32_57 = arith.constant 15 : i32
    %128 = tpu.dynamic_rotate %122 by %c15_i32_57 dim 0 : vector<16x128xf32>, i32 -> vector<16x128xf32>
    %cst_58 = arith.constant 0.000000e+00 : f32
    %129 = vector.shape_cast %36 : vector<16x1xi1> to vector<16x1xi1>
    %130 = vector.broadcast %129 : vector<16x1xi1> to vector<16x128xi1>
    %131 = vector.broadcast %cst_58 : f32 to vector<16x128xf32>
    %132 = arith.select %130, %131, %128 : vector<16x128xi1>, vector<16x128xf32>
    %133 = tpu.concatenate %127, %122, %132 in 1 : vector<16x128xf32>, vector<16x128xf32>, vector<16x128xf32> -> vector<16x384xf32>
    %134 = arith.truncf %133 : vector<16x384xf32> to vector<16x384xbf16>
    %c3 = arith.constant 3 : index
    %c0_59 = arith.constant 0 : index
    %c0_60 = arith.constant 0 : index
    %135 = vector.load %arg4[%c3, %c0_59, %c0_60] : memref<12x384x128xbf16, #tpu.memory_space<vmem>>, vector<1x384x128xbf16>
    %136 = vector.shape_cast %135 : vector<1x384x128xbf16> to vector<384x128xbf16>
    %cst_61 = arith.constant dense<0.000000e+00> : vector<16x128xf32>
    %137 = tpu.matmul %134, %136, %cst_61 {dimension_numbers = #tpu.dot_dimension_numbers<[1], [0], [0], [1], [0, 0, 1, 1], [], []>} : vector<16x384xbf16>, vector<384x128xbf16>, vector<16x128xf32> -> vector<16x128xf32>
    %c3_62 = arith.constant 3 : index
    %c0_63 = arith.constant 0 : index
    %138 = vector.load %arg5[%c3_62, %c0_63] : memref<12x128xf32, #tpu.memory_space<vmem>>, vector<1x128xf32>
    %139 = vector.broadcast %138 : vector<1x128xf32> to vector<16x128xf32>
    %140 = arith.addf %137, %139 : vector<16x128xf32>
    %cst_64 = arith.constant 0.000000e+00 : f32
    %141 = vector.broadcast %cst_64 : f32 to vector<16x128xf32>
    %142 = arith.cmpf ogt, %140, %141 : vector<16x128xf32>
    %c3_65 = arith.constant 3 : index
    %c0_66 = arith.constant 0 : index
    %143 = vector.load %arg6[%c3_65, %c0_66] : memref<12x128xf32, #tpu.memory_space<vmem>>, vector<1x128xf32>
    %144 = vector.broadcast %143 : vector<1x128xf32> to vector<16x128xf32>
    %145 = arith.mulf %144, %140 : vector<16x128xf32>
    %146 = arith.select %142, %140, %145 : vector<16x128xi1>, vector<16x128xf32>
    %147 = arith.truncf %146 : vector<16x128xf32> to vector<16x128xbf16>
    %c0_67 = arith.constant 0 : index
    %c0_68 = arith.constant 0 : index
    %c0_69 = arith.constant 0 : index
    %148 = vector.load %arg7[%c0_67, %c0_68, %c0_69] : memref<3x128x512xbf16, #tpu.memory_space<vmem>>, vector<1x128x512xbf16>
    %149 = vector.shape_cast %148 : vector<1x128x512xbf16> to vector<128x512xbf16>
    %cst_70 = arith.constant dense<0.000000e+00> : vector<16x512xf32>
    %150 = tpu.matmul %147, %149, %cst_70 {dimension_numbers = #tpu.dot_dimension_numbers<[1], [0], [0], [1], [0, 0, 1, 1], [], []>} : vector<16x128xbf16>, vector<128x512xbf16>, vector<16x512xf32> -> vector<16x512xf32>
    %c0_71 = arith.constant 0 : index
    %c0_72 = arith.constant 0 : index
    %151 = vector.load %arg8[%c0_71, %c0_72] : memref<3x512xf32, #tpu.memory_space<vmem>>, vector<1x512xf32>
    %152 = vector.broadcast %151 : vector<1x512xf32> to vector<16x512xf32>
    %153 = arith.addf %150, %152 : vector<16x512xf32>
    %cst_73 = arith.constant 0.000000e+00 : f32
    %154 = vector.broadcast %cst_73 : f32 to vector<16x512xf32>
    %155 = arith.cmpf ogt, %153, %154 : vector<16x512xf32>
    %c0_74 = arith.constant 0 : index
    %c0_75 = arith.constant 0 : index
    %156 = vector.load %arg9[%c0_74, %c0_75] : memref<3x512xf32, #tpu.memory_space<vmem>>, vector<1x512xf32>
    %157 = vector.broadcast %156 : vector<1x512xf32> to vector<16x512xf32>
    %158 = arith.mulf %157, %153 : vector<16x512xf32>
    %159 = arith.select %155, %153, %158 : vector<16x512xi1>, vector<16x512xf32>
    %160 = arith.addf %37, %159 : vector<16x512xf32>
    %161 = arith.truncf %160 : vector<16x512xf32> to vector<16x512xbf16>
    %c1_76 = arith.constant 1 : index
    %c0_77 = arith.constant 0 : index
    %c0_78 = arith.constant 0 : index
    %162 = vector.load %arg1[%c1_76, %c0_77, %c0_78] : memref<3x512x128xbf16, #tpu.memory_space<vmem>>, vector<1x512x128xbf16>
    %163 = vector.shape_cast %162 : vector<1x512x128xbf16> to vector<512x128xbf16>
    %cst_79 = arith.constant dense<0.000000e+00> : vector<16x128xf32>
    %164 = tpu.matmul %161, %163, %cst_79 {dimension_numbers = #tpu.dot_dimension_numbers<[1], [0], [0], [1], [0, 0, 1, 1], [], []>} : vector<16x512xbf16>, vector<512x128xbf16>, vector<16x128xf32> -> vector<16x128xf32>
    %c1_80 = arith.constant 1 : index
    %c0_81 = arith.constant 0 : index
    %165 = vector.load %arg2[%c1_80, %c0_81] : memref<3x128xf32, #tpu.memory_space<vmem>>, vector<1x128xf32>
    %166 = vector.broadcast %165 : vector<1x128xf32> to vector<16x128xf32>
    %167 = arith.addf %164, %166 : vector<16x128xf32>
    %cst_82 = arith.constant 0.000000e+00 : f32
    %168 = vector.broadcast %cst_82 : f32 to vector<16x128xf32>
    %169 = arith.cmpf ogt, %167, %168 : vector<16x128xf32>
    %c1_83 = arith.constant 1 : index
    %c0_84 = arith.constant 0 : index
    %170 = vector.load %arg3[%c1_83, %c0_84] : memref<3x128xf32, #tpu.memory_space<vmem>>, vector<1x128xf32>
    %171 = vector.broadcast %170 : vector<1x128xf32> to vector<16x128xf32>
    %172 = arith.mulf %171, %167 : vector<16x128xf32>
    %173 = arith.select %169, %167, %172 : vector<16x128xi1>, vector<16x128xf32>
    %c1_i32_85 = arith.constant 1 : i32
    %174 = tpu.dynamic_rotate %173 by %c1_i32_85 dim 0 : vector<16x128xf32>, i32 -> vector<16x128xf32>
    %cst_86 = arith.constant 0.000000e+00 : f32
    %175 = vector.shape_cast %18 : vector<16x1xi1> to vector<16x1xi1>
    %176 = vector.broadcast %175 : vector<16x1xi1> to vector<16x128xi1>
    %177 = vector.broadcast %cst_86 : f32 to vector<16x128xf32>
    %178 = arith.select %176, %177, %174 : vector<16x128xi1>, vector<16x128xf32>
    %c15_i32_87 = arith.constant 15 : i32
    %179 = tpu.dynamic_rotate %173 by %c15_i32_87 dim 0 : vector<16x128xf32>, i32 -> vector<16x128xf32>
    %cst_88 = arith.constant 0.000000e+00 : f32
    %180 = vector.shape_cast %36 : vector<16x1xi1> to vector<16x1xi1>
    %181 = vector.broadcast %180 : vector<16x1xi1> to vector<16x128xi1>
    %182 = vector.broadcast %cst_88 : f32 to vector<16x128xf32>
    %183 = arith.select %181, %182, %179 : vector<16x128xi1>, vector<16x128xf32>
    %184 = tpu.concatenate %178, %173, %183 in 1 : vector<16x128xf32>, vector<16x128xf32>, vector<16x128xf32> -> vector<16x384xf32>
    %185 = arith.truncf %184 : vector<16x384xf32> to vector<16x384xbf16>
    %c4 = arith.constant 4 : index
    %c0_89 = arith.constant 0 : index
    %c0_90 = arith.constant 0 : index
    %186 = vector.load %arg4[%c4, %c0_89, %c0_90] : memref<12x384x128xbf16, #tpu.memory_space<vmem>>, vector<1x384x128xbf16>
    %187 = vector.shape_cast %186 : vector<1x384x128xbf16> to vector<384x128xbf16>
    %cst_91 = arith.constant dense<0.000000e+00> : vector<16x128xf32>
    %188 = tpu.matmul %185, %187, %cst_91 {dimension_numbers = #tpu.dot_dimension_numbers<[1], [0], [0], [1], [0, 0, 1, 1], [], []>} : vector<16x384xbf16>, vector<384x128xbf16>, vector<16x128xf32> -> vector<16x128xf32>
    %c4_92 = arith.constant 4 : index
    %c0_93 = arith.constant 0 : index
    %189 = vector.load %arg5[%c4_92, %c0_93] : memref<12x128xf32, #tpu.memory_space<vmem>>, vector<1x128xf32>
    %190 = vector.broadcast %189 : vector<1x128xf32> to vector<16x128xf32>
    %191 = arith.addf %188, %190 : vector<16x128xf32>
    %cst_94 = arith.constant 0.000000e+00 : f32
    %192 = vector.broadcast %cst_94 : f32 to vector<16x128xf32>
    %193 = arith.cmpf ogt, %191, %192 : vector<16x128xf32>
    %c4_95 = arith.constant 4 : index
    %c0_96 = arith.constant 0 : index
    %194 = vector.load %arg6[%c4_95, %c0_96] : memref<12x128xf32, #tpu.memory_space<vmem>>, vector<1x128xf32>
    %195 = vector.broadcast %194 : vector<1x128xf32> to vector<16x128xf32>
    %196 = arith.mulf %195, %191 : vector<16x128xf32>
    %197 = arith.select %193, %191, %196 : vector<16x128xi1>, vector<16x128xf32>
    %c1_i32_97 = arith.constant 1 : i32
    %198 = tpu.dynamic_rotate %197 by %c1_i32_97 dim 0 : vector<16x128xf32>, i32 -> vector<16x128xf32>
    %cst_98 = arith.constant 0.000000e+00 : f32
    %199 = vector.shape_cast %18 : vector<16x1xi1> to vector<16x1xi1>
    %200 = vector.broadcast %199 : vector<16x1xi1> to vector<16x128xi1>
    %201 = vector.broadcast %cst_98 : f32 to vector<16x128xf32>
    %202 = arith.select %200, %201, %198 : vector<16x128xi1>, vector<16x128xf32>
    %c15_i32_99 = arith.constant 15 : i32
    %203 = tpu.dynamic_rotate %197 by %c15_i32_99 dim 0 : vector<16x128xf32>, i32 -> vector<16x128xf32>
    %cst_100 = arith.constant 0.000000e+00 : f32
    %204 = vector.shape_cast %36 : vector<16x1xi1> to vector<16x1xi1>
    %205 = vector.broadcast %204 : vector<16x1xi1> to vector<16x128xi1>
    %206 = vector.broadcast %cst_100 : f32 to vector<16x128xf32>
    %207 = arith.select %205, %206, %203 : vector<16x128xi1>, vector<16x128xf32>
    %208 = tpu.concatenate %202, %197, %207 in 1 : vector<16x128xf32>, vector<16x128xf32>, vector<16x128xf32> -> vector<16x384xf32>
    %209 = arith.truncf %208 : vector<16x384xf32> to vector<16x384xbf16>
    %c5 = arith.constant 5 : index
    %c0_101 = arith.constant 0 : index
    %c0_102 = arith.constant 0 : index
    %210 = vector.load %arg4[%c5, %c0_101, %c0_102] : memref<12x384x128xbf16, #tpu.memory_space<vmem>>, vector<1x384x128xbf16>
    %211 = vector.shape_cast %210 : vector<1x384x128xbf16> to vector<384x128xbf16>
    %cst_103 = arith.constant dense<0.000000e+00> : vector<16x128xf32>
    %212 = tpu.matmul %209, %211, %cst_103 {dimension_numbers = #tpu.dot_dimension_numbers<[1], [0], [0], [1], [0, 0, 1, 1], [], []>} : vector<16x384xbf16>, vector<384x128xbf16>, vector<16x128xf32> -> vector<16x128xf32>
    %c5_104 = arith.constant 5 : index
    %c0_105 = arith.constant 0 : index
    %213 = vector.load %arg5[%c5_104, %c0_105] : memref<12x128xf32, #tpu.memory_space<vmem>>, vector<1x128xf32>
    %214 = vector.broadcast %213 : vector<1x128xf32> to vector<16x128xf32>
    %215 = arith.addf %212, %214 : vector<16x128xf32>
    %cst_106 = arith.constant 0.000000e+00 : f32
    %216 = vector.broadcast %cst_106 : f32 to vector<16x128xf32>
    %217 = arith.cmpf ogt, %215, %216 : vector<16x128xf32>
    %c5_107 = arith.constant 5 : index
    %c0_108 = arith.constant 0 : index
    %218 = vector.load %arg6[%c5_107, %c0_108] : memref<12x128xf32, #tpu.memory_space<vmem>>, vector<1x128xf32>
    %219 = vector.broadcast %218 : vector<1x128xf32> to vector<16x128xf32>
    %220 = arith.mulf %219, %215 : vector<16x128xf32>
    %221 = arith.select %217, %215, %220 : vector<16x128xi1>, vector<16x128xf32>
    %c1_i32_109 = arith.constant 1 : i32
    %222 = tpu.dynamic_rotate %221 by %c1_i32_109 dim 0 : vector<16x128xf32>, i32 -> vector<16x128xf32>
    %cst_110 = arith.constant 0.000000e+00 : f32
    %223 = vector.shape_cast %18 : vector<16x1xi1> to vector<16x1xi1>
    %224 = vector.broadcast %223 : vector<16x1xi1> to vector<16x128xi1>
    %225 = vector.broadcast %cst_110 : f32 to vector<16x128xf32>
    %226 = arith.select %224, %225, %222 : vector<16x128xi1>, vector<16x128xf32>
    %c15_i32_111 = arith.constant 15 : i32
    %227 = tpu.dynamic_rotate %221 by %c15_i32_111 dim 0 : vector<16x128xf32>, i32 -> vector<16x128xf32>
    %cst_112 = arith.constant 0.000000e+00 : f32
    %228 = vector.shape_cast %36 : vector<16x1xi1> to vector<16x1xi1>
    %229 = vector.broadcast %228 : vector<16x1xi1> to vector<16x128xi1>
    %230 = vector.broadcast %cst_112 : f32 to vector<16x128xf32>
    %231 = arith.select %229, %230, %227 : vector<16x128xi1>, vector<16x128xf32>
    %232 = tpu.concatenate %226, %221, %231 in 1 : vector<16x128xf32>, vector<16x128xf32>, vector<16x128xf32> -> vector<16x384xf32>
    %233 = arith.truncf %232 : vector<16x384xf32> to vector<16x384xbf16>
    %c6 = arith.constant 6 : index
    %c0_113 = arith.constant 0 : index
    %c0_114 = arith.constant 0 : index
    %234 = vector.load %arg4[%c6, %c0_113, %c0_114] : memref<12x384x128xbf16, #tpu.memory_space<vmem>>, vector<1x384x128xbf16>
    %235 = vector.shape_cast %234 : vector<1x384x128xbf16> to vector<384x128xbf16>
    %cst_115 = arith.constant dense<0.000000e+00> : vector<16x128xf32>
    %236 = tpu.matmul %233, %235, %cst_115 {dimension_numbers = #tpu.dot_dimension_numbers<[1], [0], [0], [1], [0, 0, 1, 1], [], []>} : vector<16x384xbf16>, vector<384x128xbf16>, vector<16x128xf32> -> vector<16x128xf32>
    %c6_116 = arith.constant 6 : index
    %c0_117 = arith.constant 0 : index
    %237 = vector.load %arg5[%c6_116, %c0_117] : memref<12x128xf32, #tpu.memory_space<vmem>>, vector<1x128xf32>
    %238 = vector.broadcast %237 : vector<1x128xf32> to vector<16x128xf32>
    %239 = arith.addf %236, %238 : vector<16x128xf32>
    %cst_118 = arith.constant 0.000000e+00 : f32
    %240 = vector.broadcast %cst_118 : f32 to vector<16x128xf32>
    %241 = arith.cmpf ogt, %239, %240 : vector<16x128xf32>
    %c6_119 = arith.constant 6 : index
    %c0_120 = arith.constant 0 : index
    %242 = vector.load %arg6[%c6_119, %c0_120] : memref<12x128xf32, #tpu.memory_space<vmem>>, vector<1x128xf32>
    %243 = vector.broadcast %242 : vector<1x128xf32> to vector<16x128xf32>
    %244 = arith.mulf %243, %239 : vector<16x128xf32>
    %245 = arith.select %241, %239, %244 : vector<16x128xi1>, vector<16x128xf32>
    %c1_i32_121 = arith.constant 1 : i32
    %246 = tpu.dynamic_rotate %245 by %c1_i32_121 dim 0 : vector<16x128xf32>, i32 -> vector<16x128xf32>
    %cst_122 = arith.constant 0.000000e+00 : f32
    %247 = vector.shape_cast %18 : vector<16x1xi1> to vector<16x1xi1>
    %248 = vector.broadcast %247 : vector<16x1xi1> to vector<16x128xi1>
    %249 = vector.broadcast %cst_122 : f32 to vector<16x128xf32>
    %250 = arith.select %248, %249, %246 : vector<16x128xi1>, vector<16x128xf32>
    %c15_i32_123 = arith.constant 15 : i32
    %251 = tpu.dynamic_rotate %245 by %c15_i32_123 dim 0 : vector<16x128xf32>, i32 -> vector<16x128xf32>
    %cst_124 = arith.constant 0.000000e+00 : f32
    %252 = vector.shape_cast %36 : vector<16x1xi1> to vector<16x1xi1>
    %253 = vector.broadcast %252 : vector<16x1xi1> to vector<16x128xi1>
    %254 = vector.broadcast %cst_124 : f32 to vector<16x128xf32>
    %255 = arith.select %253, %254, %251 : vector<16x128xi1>, vector<16x128xf32>
    %256 = tpu.concatenate %250, %245, %255 in 1 : vector<16x128xf32>, vector<16x128xf32>, vector<16x128xf32> -> vector<16x384xf32>
    %257 = arith.truncf %256 : vector<16x384xf32> to vector<16x384xbf16>
    %c7 = arith.constant 7 : index
    %c0_125 = arith.constant 0 : index
    %c0_126 = arith.constant 0 : index
    %258 = vector.load %arg4[%c7, %c0_125, %c0_126] : memref<12x384x128xbf16, #tpu.memory_space<vmem>>, vector<1x384x128xbf16>
    %259 = vector.shape_cast %258 : vector<1x384x128xbf16> to vector<384x128xbf16>
    %cst_127 = arith.constant dense<0.000000e+00> : vector<16x128xf32>
    %260 = tpu.matmul %257, %259, %cst_127 {dimension_numbers = #tpu.dot_dimension_numbers<[1], [0], [0], [1], [0, 0, 1, 1], [], []>} : vector<16x384xbf16>, vector<384x128xbf16>, vector<16x128xf32> -> vector<16x128xf32>
    %c7_128 = arith.constant 7 : index
    %c0_129 = arith.constant 0 : index
    %261 = vector.load %arg5[%c7_128, %c0_129] : memref<12x128xf32, #tpu.memory_space<vmem>>, vector<1x128xf32>
    %262 = vector.broadcast %261 : vector<1x128xf32> to vector<16x128xf32>
    %263 = arith.addf %260, %262 : vector<16x128xf32>
    %cst_130 = arith.constant 0.000000e+00 : f32
    %264 = vector.broadcast %cst_130 : f32 to vector<16x128xf32>
    %265 = arith.cmpf ogt, %263, %264 : vector<16x128xf32>
    %c7_131 = arith.constant 7 : index
    %c0_132 = arith.constant 0 : index
    %266 = vector.load %arg6[%c7_131, %c0_132] : memref<12x128xf32, #tpu.memory_space<vmem>>, vector<1x128xf32>
    %267 = vector.broadcast %266 : vector<1x128xf32> to vector<16x128xf32>
    %268 = arith.mulf %267, %263 : vector<16x128xf32>
    %269 = arith.select %265, %263, %268 : vector<16x128xi1>, vector<16x128xf32>
    %270 = arith.truncf %269 : vector<16x128xf32> to vector<16x128xbf16>
    %c1_133 = arith.constant 1 : index
    %c0_134 = arith.constant 0 : index
    %c0_135 = arith.constant 0 : index
    %271 = vector.load %arg7[%c1_133, %c0_134, %c0_135] : memref<3x128x512xbf16, #tpu.memory_space<vmem>>, vector<1x128x512xbf16>
    %272 = vector.shape_cast %271 : vector<1x128x512xbf16> to vector<128x512xbf16>
    %cst_136 = arith.constant dense<0.000000e+00> : vector<16x512xf32>
    %273 = tpu.matmul %270, %272, %cst_136 {dimension_numbers = #tpu.dot_dimension_numbers<[1], [0], [0], [1], [0, 0, 1, 1], [], []>} : vector<16x128xbf16>, vector<128x512xbf16>, vector<16x512xf32> -> vector<16x512xf32>
    %c1_137 = arith.constant 1 : index
    %c0_138 = arith.constant 0 : index
    %274 = vector.load %arg8[%c1_137, %c0_138] : memref<3x512xf32, #tpu.memory_space<vmem>>, vector<1x512xf32>
    %275 = vector.broadcast %274 : vector<1x512xf32> to vector<16x512xf32>
    %276 = arith.addf %273, %275 : vector<16x512xf32>
    %cst_139 = arith.constant 0.000000e+00 : f32
    %277 = vector.broadcast %cst_139 : f32 to vector<16x512xf32>
    %278 = arith.cmpf ogt, %276, %277 : vector<16x512xf32>
    %c1_140 = arith.constant 1 : index
    %c0_141 = arith.constant 0 : index
    %279 = vector.load %arg9[%c1_140, %c0_141] : memref<3x512xf32, #tpu.memory_space<vmem>>, vector<1x512xf32>
    %280 = vector.broadcast %279 : vector<1x512xf32> to vector<16x512xf32>
    %281 = arith.mulf %280, %276 : vector<16x512xf32>
    %282 = arith.select %278, %276, %281 : vector<16x512xi1>, vector<16x512xf32>
    %283 = arith.addf %160, %282 : vector<16x512xf32>
    %284 = arith.truncf %283 : vector<16x512xf32> to vector<16x512xbf16>
    %c2_142 = arith.constant 2 : index
    %c0_143 = arith.constant 0 : index
    %c0_144 = arith.constant 0 : index
    %285 = vector.load %arg1[%c2_142, %c0_143, %c0_144] : memref<3x512x128xbf16, #tpu.memory_space<vmem>>, vector<1x512x128xbf16>
    %286 = vector.shape_cast %285 : vector<1x512x128xbf16> to vector<512x128xbf16>
    %cst_145 = arith.constant dense<0.000000e+00> : vector<16x128xf32>
    %287 = tpu.matmul %284, %286, %cst_145 {dimension_numbers = #tpu.dot_dimension_numbers<[1], [0], [0], [1], [0, 0, 1, 1], [], []>} : vector<16x512xbf16>, vector<512x128xbf16>, vector<16x128xf32> -> vector<16x128xf32>
    %c2_146 = arith.constant 2 : index
    %c0_147 = arith.constant 0 : index
    %288 = vector.load %arg2[%c2_146, %c0_147] : memref<3x128xf32, #tpu.memory_space<vmem>>, vector<1x128xf32>
    %289 = vector.broadcast %288 : vector<1x128xf32> to vector<16x128xf32>
    %290 = arith.addf %287, %289 : vector<16x128xf32>
    %cst_148 = arith.constant 0.000000e+00 : f32
    %291 = vector.broadcast %cst_148 : f32 to vector<16x128xf32>
    %292 = arith.cmpf ogt, %290, %291 : vector<16x128xf32>
    %c2_149 = arith.constant 2 : index
    %c0_150 = arith.constant 0 : index
    %293 = vector.load %arg3[%c2_149, %c0_150] : memref<3x128xf32, #tpu.memory_space<vmem>>, vector<1x128xf32>
    %294 = vector.broadcast %293 : vector<1x128xf32> to vector<16x128xf32>
    %295 = arith.mulf %294, %290 : vector<16x128xf32>
    %296 = arith.select %292, %290, %295 : vector<16x128xi1>, vector<16x128xf32>
    %c1_i32_151 = arith.constant 1 : i32
    %297 = tpu.dynamic_rotate %296 by %c1_i32_151 dim 0 : vector<16x128xf32>, i32 -> vector<16x128xf32>
    %cst_152 = arith.constant 0.000000e+00 : f32
    %298 = vector.shape_cast %18 : vector<16x1xi1> to vector<16x1xi1>
    %299 = vector.broadcast %298 : vector<16x1xi1> to vector<16x128xi1>
    %300 = vector.broadcast %cst_152 : f32 to vector<16x128xf32>
    %301 = arith.select %299, %300, %297 : vector<16x128xi1>, vector<16x128xf32>
    %c15_i32_153 = arith.constant 15 : i32
    %302 = tpu.dynamic_rotate %296 by %c15_i32_153 dim 0 : vector<16x128xf32>, i32 -> vector<16x128xf32>
    %cst_154 = arith.constant 0.000000e+00 : f32
    %303 = vector.shape_cast %36 : vector<16x1xi1> to vector<16x1xi1>
    %304 = vector.broadcast %303 : vector<16x1xi1> to vector<16x128xi1>
    %305 = vector.broadcast %cst_154 : f32 to vector<16x128xf32>
    %306 = arith.select %304, %305, %302 : vector<16x128xi1>, vector<16x128xf32>
    %307 = tpu.concatenate %301, %296, %306 in 1 : vector<16x128xf32>, vector<16x128xf32>, vector<16x128xf32> -> vector<16x384xf32>
    %308 = arith.truncf %307 : vector<16x384xf32> to vector<16x384xbf16>
    %c8 = arith.constant 8 : index
    %c0_155 = arith.constant 0 : index
    %c0_156 = arith.constant 0 : index
    %309 = vector.load %arg4[%c8, %c0_155, %c0_156] : memref<12x384x128xbf16, #tpu.memory_space<vmem>>, vector<1x384x128xbf16>
    %310 = vector.shape_cast %309 : vector<1x384x128xbf16> to vector<384x128xbf16>
    %cst_157 = arith.constant dense<0.000000e+00> : vector<16x128xf32>
    %311 = tpu.matmul %308, %310, %cst_157 {dimension_numbers = #tpu.dot_dimension_numbers<[1], [0], [0], [1], [0, 0, 1, 1], [], []>} : vector<16x384xbf16>, vector<384x128xbf16>, vector<16x128xf32> -> vector<16x128xf32>
    %c8_158 = arith.constant 8 : index
    %c0_159 = arith.constant 0 : index
    %312 = vector.load %arg5[%c8_158, %c0_159] : memref<12x128xf32, #tpu.memory_space<vmem>>, vector<1x128xf32>
    %313 = vector.broadcast %312 : vector<1x128xf32> to vector<16x128xf32>
    %314 = arith.addf %311, %313 : vector<16x128xf32>
    %cst_160 = arith.constant 0.000000e+00 : f32
    %315 = vector.broadcast %cst_160 : f32 to vector<16x128xf32>
    %316 = arith.cmpf ogt, %314, %315 : vector<16x128xf32>
    %c8_161 = arith.constant 8 : index
    %c0_162 = arith.constant 0 : index
    %317 = vector.load %arg6[%c8_161, %c0_162] : memref<12x128xf32, #tpu.memory_space<vmem>>, vector<1x128xf32>
    %318 = vector.broadcast %317 : vector<1x128xf32> to vector<16x128xf32>
    %319 = arith.mulf %318, %314 : vector<16x128xf32>
    %320 = arith.select %316, %314, %319 : vector<16x128xi1>, vector<16x128xf32>
    %c1_i32_163 = arith.constant 1 : i32
    %321 = tpu.dynamic_rotate %320 by %c1_i32_163 dim 0 : vector<16x128xf32>, i32 -> vector<16x128xf32>
    %cst_164 = arith.constant 0.000000e+00 : f32
    %322 = vector.shape_cast %18 : vector<16x1xi1> to vector<16x1xi1>
    %323 = vector.broadcast %322 : vector<16x1xi1> to vector<16x128xi1>
    %324 = vector.broadcast %cst_164 : f32 to vector<16x128xf32>
    %325 = arith.select %323, %324, %321 : vector<16x128xi1>, vector<16x128xf32>
    %c15_i32_165 = arith.constant 15 : i32
    %326 = tpu.dynamic_rotate %320 by %c15_i32_165 dim 0 : vector<16x128xf32>, i32 -> vector<16x128xf32>
    %cst_166 = arith.constant 0.000000e+00 : f32
    %327 = vector.shape_cast %36 : vector<16x1xi1> to vector<16x1xi1>
    %328 = vector.broadcast %327 : vector<16x1xi1> to vector<16x128xi1>
    %329 = vector.broadcast %cst_166 : f32 to vector<16x128xf32>
    %330 = arith.select %328, %329, %326 : vector<16x128xi1>, vector<16x128xf32>
    %331 = tpu.concatenate %325, %320, %330 in 1 : vector<16x128xf32>, vector<16x128xf32>, vector<16x128xf32> -> vector<16x384xf32>
    %332 = arith.truncf %331 : vector<16x384xf32> to vector<16x384xbf16>
    %c9 = arith.constant 9 : index
    %c0_167 = arith.constant 0 : index
    %c0_168 = arith.constant 0 : index
    %333 = vector.load %arg4[%c9, %c0_167, %c0_168] : memref<12x384x128xbf16, #tpu.memory_space<vmem>>, vector<1x384x128xbf16>
    %334 = vector.shape_cast %333 : vector<1x384x128xbf16> to vector<384x128xbf16>
    %cst_169 = arith.constant dense<0.000000e+00> : vector<16x128xf32>
    %335 = tpu.matmul %332, %334, %cst_169 {dimension_numbers = #tpu.dot_dimension_numbers<[1], [0], [0], [1], [0, 0, 1, 1], [], []>} : vector<16x384xbf16>, vector<384x128xbf16>, vector<16x128xf32> -> vector<16x128xf32>
    %c9_170 = arith.constant 9 : index
    %c0_171 = arith.constant 0 : index
    %336 = vector.load %arg5[%c9_170, %c0_171] : memref<12x128xf32, #tpu.memory_space<vmem>>, vector<1x128xf32>
    %337 = vector.broadcast %336 : vector<1x128xf32> to vector<16x128xf32>
    %338 = arith.addf %335, %337 : vector<16x128xf32>
    %cst_172 = arith.constant 0.000000e+00 : f32
    %339 = vector.broadcast %cst_172 : f32 to vector<16x128xf32>
    %340 = arith.cmpf ogt, %338, %339 : vector<16x128xf32>
    %c9_173 = arith.constant 9 : index
    %c0_174 = arith.constant 0 : index
    %341 = vector.load %arg6[%c9_173, %c0_174] : memref<12x128xf32, #tpu.memory_space<vmem>>, vector<1x128xf32>
    %342 = vector.broadcast %341 : vector<1x128xf32> to vector<16x128xf32>
    %343 = arith.mulf %342, %338 : vector<16x128xf32>
    %344 = arith.select %340, %338, %343 : vector<16x128xi1>, vector<16x128xf32>
    %c1_i32_175 = arith.constant 1 : i32
    %345 = tpu.dynamic_rotate %344 by %c1_i32_175 dim 0 : vector<16x128xf32>, i32 -> vector<16x128xf32>
    %cst_176 = arith.constant 0.000000e+00 : f32
    %346 = vector.shape_cast %18 : vector<16x1xi1> to vector<16x1xi1>
    %347 = vector.broadcast %346 : vector<16x1xi1> to vector<16x128xi1>
    %348 = vector.broadcast %cst_176 : f32 to vector<16x128xf32>
    %349 = arith.select %347, %348, %345 : vector<16x128xi1>, vector<16x128xf32>
    %c15_i32_177 = arith.constant 15 : i32
    %350 = tpu.dynamic_rotate %344 by %c15_i32_177 dim 0 : vector<16x128xf32>, i32 -> vector<16x128xf32>
    %cst_178 = arith.constant 0.000000e+00 : f32
    %351 = vector.shape_cast %36 : vector<16x1xi1> to vector<16x1xi1>
    %352 = vector.broadcast %351 : vector<16x1xi1> to vector<16x128xi1>
    %353 = vector.broadcast %cst_178 : f32 to vector<16x128xf32>
    %354 = arith.select %352, %353, %350 : vector<16x128xi1>, vector<16x128xf32>
    %355 = tpu.concatenate %349, %344, %354 in 1 : vector<16x128xf32>, vector<16x128xf32>, vector<16x128xf32> -> vector<16x384xf32>
    %356 = arith.truncf %355 : vector<16x384xf32> to vector<16x384xbf16>
    %c10 = arith.constant 10 : index
    %c0_179 = arith.constant 0 : index
    %c0_180 = arith.constant 0 : index
    %357 = vector.load %arg4[%c10, %c0_179, %c0_180] : memref<12x384x128xbf16, #tpu.memory_space<vmem>>, vector<1x384x128xbf16>
    %358 = vector.shape_cast %357 : vector<1x384x128xbf16> to vector<384x128xbf16>
    %cst_181 = arith.constant dense<0.000000e+00> : vector<16x128xf32>
    %359 = tpu.matmul %356, %358, %cst_181 {dimension_numbers = #tpu.dot_dimension_numbers<[1], [0], [0], [1], [0, 0, 1, 1], [], []>} : vector<16x384xbf16>, vector<384x128xbf16>, vector<16x128xf32> -> vector<16x128xf32>
    %c10_182 = arith.constant 10 : index
    %c0_183 = arith.constant 0 : index
    %360 = vector.load %arg5[%c10_182, %c0_183] : memref<12x128xf32, #tpu.memory_space<vmem>>, vector<1x128xf32>
    %361 = vector.broadcast %360 : vector<1x128xf32> to vector<16x128xf32>
    %362 = arith.addf %359, %361 : vector<16x128xf32>
    %cst_184 = arith.constant 0.000000e+00 : f32
    %363 = vector.broadcast %cst_184 : f32 to vector<16x128xf32>
    %364 = arith.cmpf ogt, %362, %363 : vector<16x128xf32>
    %c10_185 = arith.constant 10 : index
    %c0_186 = arith.constant 0 : index
    %365 = vector.load %arg6[%c10_185, %c0_186] : memref<12x128xf32, #tpu.memory_space<vmem>>, vector<1x128xf32>
    %366 = vector.broadcast %365 : vector<1x128xf32> to vector<16x128xf32>
    %367 = arith.mulf %366, %362 : vector<16x128xf32>
    %368 = arith.select %364, %362, %367 : vector<16x128xi1>, vector<16x128xf32>
    %c1_i32_187 = arith.constant 1 : i32
    %369 = tpu.dynamic_rotate %368 by %c1_i32_187 dim 0 : vector<16x128xf32>, i32 -> vector<16x128xf32>
    %cst_188 = arith.constant 0.000000e+00 : f32
    %370 = vector.shape_cast %18 : vector<16x1xi1> to vector<16x1xi1>
    %371 = vector.broadcast %370 : vector<16x1xi1> to vector<16x128xi1>
    %372 = vector.broadcast %cst_188 : f32 to vector<16x128xf32>
    %373 = arith.select %371, %372, %369 : vector<16x128xi1>, vector<16x128xf32>
    %c15_i32_189 = arith.constant 15 : i32
    %374 = tpu.dynamic_rotate %368 by %c15_i32_189 dim 0 : vector<16x128xf32>, i32 -> vector<16x128xf32>
    %cst_190 = arith.constant 0.000000e+00 : f32
    %375 = vector.shape_cast %36 : vector<16x1xi1> to vector<16x1xi1>
    %376 = vector.broadcast %375 : vector<16x1xi1> to vector<16x128xi1>
    %377 = vector.broadcast %cst_190 : f32 to vector<16x128xf32>
    %378 = arith.select %376, %377, %374 : vector<16x128xi1>, vector<16x128xf32>
    %379 = tpu.concatenate %373, %368, %378 in 1 : vector<16x128xf32>, vector<16x128xf32>, vector<16x128xf32> -> vector<16x384xf32>
    %380 = arith.truncf %379 : vector<16x384xf32> to vector<16x384xbf16>
    %c11 = arith.constant 11 : index
    %c0_191 = arith.constant 0 : index
    %c0_192 = arith.constant 0 : index
    %381 = vector.load %arg4[%c11, %c0_191, %c0_192] : memref<12x384x128xbf16, #tpu.memory_space<vmem>>, vector<1x384x128xbf16>
    %382 = vector.shape_cast %381 : vector<1x384x128xbf16> to vector<384x128xbf16>
    %cst_193 = arith.constant dense<0.000000e+00> : vector<16x128xf32>
    %383 = tpu.matmul %380, %382, %cst_193 {dimension_numbers = #tpu.dot_dimension_numbers<[1], [0], [0], [1], [0, 0, 1, 1], [], []>} : vector<16x384xbf16>, vector<384x128xbf16>, vector<16x128xf32> -> vector<16x128xf32>
    %c11_194 = arith.constant 11 : index
    %c0_195 = arith.constant 0 : index
    %384 = vector.load %arg5[%c11_194, %c0_195] : memref<12x128xf32, #tpu.memory_space<vmem>>, vector<1x128xf32>
    %385 = vector.broadcast %384 : vector<1x128xf32> to vector<16x128xf32>
    %386 = arith.addf %383, %385 : vector<16x128xf32>
    %cst_196 = arith.constant 0.000000e+00 : f32
    %387 = vector.broadcast %cst_196 : f32 to vector<16x128xf32>
    %388 = arith.cmpf ogt, %386, %387 : vector<16x128xf32>
    %c11_197 = arith.constant 11 : index
    %c0_198 = arith.constant 0 : index
    %389 = vector.load %arg6[%c11_197, %c0_198] : memref<12x128xf32, #tpu.memory_space<vmem>>, vector<1x128xf32>
    %390 = vector.broadcast %389 : vector<1x128xf32> to vector<16x128xf32>
    %391 = arith.mulf %390, %386 : vector<16x128xf32>
    %392 = arith.select %388, %386, %391 : vector<16x128xi1>, vector<16x128xf32>
    %393 = arith.truncf %392 : vector<16x128xf32> to vector<16x128xbf16>
    %c2_199 = arith.constant 2 : index
    %c0_200 = arith.constant 0 : index
    %c0_201 = arith.constant 0 : index
    %394 = vector.load %arg7[%c2_199, %c0_200, %c0_201] : memref<3x128x512xbf16, #tpu.memory_space<vmem>>, vector<1x128x512xbf16>
    %395 = vector.shape_cast %394 : vector<1x128x512xbf16> to vector<128x512xbf16>
    %cst_202 = arith.constant dense<0.000000e+00> : vector<16x512xf32>
    %396 = tpu.matmul %393, %395, %cst_202 {dimension_numbers = #tpu.dot_dimension_numbers<[1], [0], [0], [1], [0, 0, 1, 1], [], []>} : vector<16x128xbf16>, vector<128x512xbf16>, vector<16x512xf32> -> vector<16x512xf32>
    %c2_203 = arith.constant 2 : index
    %c0_204 = arith.constant 0 : index
    %397 = vector.load %arg8[%c2_203, %c0_204] : memref<3x512xf32, #tpu.memory_space<vmem>>, vector<1x512xf32>
    %398 = vector.broadcast %397 : vector<1x512xf32> to vector<16x512xf32>
    %399 = arith.addf %396, %398 : vector<16x512xf32>
    %cst_205 = arith.constant 0.000000e+00 : f32
    %400 = vector.broadcast %cst_205 : f32 to vector<16x512xf32>
    %401 = arith.cmpf ogt, %399, %400 : vector<16x512xf32>
    %c2_206 = arith.constant 2 : index
    %c0_207 = arith.constant 0 : index
    %402 = vector.load %arg9[%c2_206, %c0_207] : memref<3x512xf32, #tpu.memory_space<vmem>>, vector<1x512xf32>
    %403 = vector.broadcast %402 : vector<1x512xf32> to vector<16x512xf32>
    %404 = arith.mulf %403, %399 : vector<16x512xf32>
    %405 = arith.select %401, %399, %404 : vector<16x512xi1>, vector<16x512xf32>
    %406 = arith.addf %283, %405 : vector<16x512xf32>
    %c0_208 = arith.constant 0 : index
    %c0_209 = arith.constant 0 : index
    %407 = vector.load %arg10[%c0_208, %c0_209] : memref<16x512xf32, #tpu.memory_space<vmem>>, vector<16x512xf32>
    tpu.vector_store %arg10[%c0_208, %c0_209], %406 {strides = array<i32>} : memref<16x512xf32, #tpu.memory_space<vmem>>, vector<16x512xf32>,
    return
  }
}

</mosaic_0001>

<llo_original>
// kernel: tpu_custom_call.1
$region0: #{tpu_custom_call.1}
  #allocation0 [shape = 'u32[]', space=smem, size = 0x4, offset = 0x4, fixed_abs, tag = 'smem constant byte address 0x4 - core index']
  #allocation1 [shape = 'u32[144,128]{1,0:T(1,128)}', space=vmem, size = 0x12000, scoped, tag = 'internal scratch']
  %s0 = inlined_call_operand.hbm [shape: f32[16,512], index: 0, kind: input, shape index: {}]
  %s1 = inlined_call_operand.hbm [shape: bf16[3,512,128], index: 1, kind: input, shape index: {}]
  %s2 = inlined_call_operand.hbm [shape: f32[3,128], index: 2, kind: input, shape index: {}]
  %s3 = inlined_call_operand.hbm [shape: f32[3,128], index: 3, kind: input, shape index: {}]
  %s4 = inlined_call_operand.hbm [shape: bf16[12,384,128], index: 4, kind: input, shape index: {}]
  %s5 = inlined_call_operand.hbm [shape: f32[12,128], index: 5, kind: input, shape index: {}]
  %s6 = inlined_call_operand.hbm [shape: f32[12,128], index: 6, kind: input, shape index: {}]
  %s7 = inlined_call_operand.hbm [shape: bf16[3,128,512], index: 7, kind: input, shape index: {}]
  %s8 = inlined_call_operand.hbm [shape: f32[3,512], index: 8, kind: input, shape index: {}]
  %s9 = inlined_call_operand.hbm [shape: f32[3,512], index: 9, kind: input, shape index: {}]
  %s10 = inlined_call_operand.hbm [shape: f32[16,512], index: 10, kind: output, shape index: {}]
  %s11 = sld [smem:[#allocation0]]
  $region90: #{tpu_custom_call.1} parent=0
    _
  %s13 = ssub.s32 1, %s11
  %s14 = scalar_select 0, %s13, %s11
  $region1: #{tpu_custom_call.1} parent=0
    #allocation2 [shape = 'u8[32768]{0}', space=vmem, size = 0x8000, scoped, tag = 'input window, operand 0, single buffered']
    #allocation3 [shape = 's32[1]{0}', space=sflag, size = 0x4, scoped, tag = 'scoped memory for tpu_custom_call.1']
    #allocation4 [shape = 's32[1]{0}', space=sflag, size = 0x4, scoped, tag = 'scoped memory for tpu_custom_call.1']
    #allocation5 [shape = 'u8[393216]{0}', space=vmem, size = 0x60000, scoped, tag = 'input window, operand 1, single buffered']
    #allocation6 [shape = 's32[1]{0}', space=sflag, size = 0x4, scoped, tag = 'scoped memory for tpu_custom_call.1']
    #allocation7 [shape = 'u8[2048]{0}', space=vmem, size = 0x800, scoped, tag = 'input window, operand 2, single buffered']
    #allocation8 [shape = 'u8[2048]{0}', space=vmem, size = 0x800, scoped, tag = 'input window, operand 3, single buffered']
    #allocation9 [shape = 's32[1]{0}', space=sflag, size = 0x4, scoped, tag = 'scoped memory for tpu_custom_call.1']
    #allocation10 [shape = 'u8[1179648]{0}', space=vmem, size = 0x120000, scoped, tag = 'input window, operand 4, single buffered']
    #allocation11 [shape = 'u8[8192]{0}', space=vmem, size = 0x2000, scoped, tag = 'input window, operand 5, single buffered']
    #allocation12 [shape = 's32[1]{0}', space=sflag, size = 0x4, scoped, tag = 'scoped memory for tpu_custom_call.1']
    #allocation13 [shape = 'u8[8192]{0}', space=vmem, size = 0x2000, scoped, tag = 'input window, operand 6, single buffered']
    #allocation14 [shape = 'u8[393216]{0}', space=vmem, size = 0x60000, scoped, tag = 'input window, operand 7, single buffered']
    #allocation15 [shape = 's32[1]{0}', space=sflag, size = 0x4, scoped, tag = 'scoped memory for tpu_custom_call.1']
    #allocation16 [shape = 'u8[8192]{0}', space=vmem, size = 0x2000, scoped, tag = 'input window, operand 8, single buffered']
    #allocation17 [shape = 'u8[8192]{0}', space=vmem, size = 0x2000, scoped, tag = 'input window, operand 9, single buffered']
    #allocation18 [shape = 's32[1]{0}', space=sflag, size = 0x4, scoped, tag = 'scoped memory for tpu_custom_call.1']
    #allocation19 [shape = 'u8[32768]{0}', space=vmem, size = 0x8000, scoped, tag = 'output window, operand 0, single buffered']
    %15 = vsyncpa [#allocation3], 0
    %16 = vsyncpa [#allocation6], 0
    %17 = vsyncpa [#allocation9], 0
    %18 = vsyncpa [#allocation12], 0
    %19 = vsyncpa [#allocation15], 0
    %20 = vsyncpa [#allocation18], 0
    %21 = vsyncpa [#allocation4], 0
    // Predicated region
    $region2: #{tpu_custom_call.1} parent=1 // pred_check
      _
    $region3: #{tpu_custom_call.1} parent=1 // pred_check_branch
      %23 = sbr.rel (0) target = $region5
    $region4: #{tpu_custom_call.1} parent=1 // pred_region
      %s25 = ssub.s32 1024, 1024
      %26 = vsyncadd [#allocation3], %s25
      %s27 = sshll.u32 [#allocation2], 4
      %s28 = int_to_ptr.vmem [resolvable:$true] %s27
      %33 = dma.hbm_to_vmem [thread:$0]  %s0, 1024, %s28, [#allocation3], 512, 512, 32
    $region5: #{tpu_custom_call.1} parent=1 // pred_fallthru
      _
    // Predicated region
    $region6: #{tpu_custom_call.1} parent=1 // pred_check
      _
    $region7: #{tpu_custom_call.1} parent=1 // pred_check_branch
      %35 = sbr.rel (0) target = $region9
    $region8: #{tpu_custom_call.1} parent=1 // pred_region
      %s37 = ssub.s32 12288, 12288
      %38 = vsyncadd [#allocation6], %s37
      %s39 = sshll.u32 [#allocation5], 4
      %s40 = int_to_ptr.vmem [resolvable:$true] %s39
      %45 = dma.hbm_to_vmem [thread:$0]  %s1, 12288, %s40, [#allocation6], 64, 64, 4
    $region9: #{tpu_custom_call.1} parent=1 // pred_fallthru
      _
    // Predicated region
    $region10: #{tpu_custom_call.1} parent=1 // pred_check
      _
    $region11: #{tpu_custom_call.1} parent=1 // pred_check_branch
      %47 = sbr.rel (0) target = $region13
    $region12: #{tpu_custom_call.1} parent=1 // pred_region
      %s49 = ssub.s32 64, 64
      %50 = vsyncadd [#allocation6], %s49
      %s52 = sshll.u32 [#allocation7], 4
      %s53 = int_to_ptr.vmem [resolvable:$true] %s52
      %55 = dma.hbm_to_vmem [thread:$0]  %s2, 64, %s53, [#allocation6]
    $region13: #{tpu_custom_call.1} parent=1 // pred_fallthru
      _
    // Predicated region
    $region14: #{tpu_custom_call.1} parent=1 // pred_check
      _
    $region15: #{tpu_custom_call.1} parent=1 // pred_check_branch
      %57 = sbr.rel (0) target = $region17
    $region16: #{tpu_custom_call.1} parent=1 // pred_region
      %s59 = ssub.s32 64, 64
      %60 = vsyncadd [#allocation9], %s59
      %s62 = sshll.u32 [#allocation8], 4
      %s63 = int_to_ptr.vmem [resolvable:$true] %s62
      %65 = dma.hbm_to_vmem [thread:$0]  %s3, 64, %s63, [#allocation9]
    $region17: #{tpu_custom_call.1} parent=1 // pred_fallthru
      _
    // Predicated region
    $region18: #{tpu_custom_call.1} parent=1 // pred_check
      _
    $region19: #{tpu_custom_call.1} parent=1 // pred_check_branch
      %67 = sbr.rel (0) target = $region21
    $region20: #{tpu_custom_call.1} parent=1 // pred_region
      %s69 = ssub.s32 36864, 36864
      %70 = vsyncadd [#allocation9], %s69
      %s71 = sshll.u32 [#allocation10], 4
      %s72 = int_to_ptr.vmem [resolvable:$true] %s71
      %77 = dma.hbm_to_vmem [thread:$0]  %s4, 36864, %s72, [#allocation9], 64, 64, 4
    $region21: #{tpu_custom_call.1} parent=1 // pred_fallthru
      _
    // Predicated region
    $region22: #{tpu_custom_call.1} parent=1 // pred_check
      _
    $region23: #{tpu_custom_call.1} parent=1 // pred_check_branch
      %79 = sbr.rel (0) target = $region25
    $region24: #{tpu_custom_call.1} parent=1 // pred_region
      %s81 = ssub.s32 256, 256
      %82 = vsyncadd [#allocation12], %s81
      %s83 = sshll.u32 [#allocation11], 4
      %s84 = int_to_ptr.vmem [resolvable:$true] %s83
      %89 = dma.hbm_to_vmem [thread:$0]  %s5, 256, %s84, [#allocation12], 128, 128, 8
    $region25: #{tpu_custom_call.1} parent=1 // pred_fallthru
      _
    // Predicated region
    $region26: #{tpu_custom_call.1} parent=1 // pred_check
      _
    $region27: #{tpu_custom_call.1} parent=1 // pred_check_branch
      %91 = sbr.rel (0) target = $region29
    $region28: #{tpu_custom_call.1} parent=1 // pred_region
      %s93 = ssub.s32 256, 256
      %94 = vsyncadd [#allocation12], %s93
      %s95 = sshll.u32 [#allocation13], 4
      %s96 = int_to_ptr.vmem [resolvable:$true] %s95
      %101 = dma.hbm_to_vmem [thread:$0]  %s6, 256, %s96, [#allocation12], 128, 128, 8
    $region29: #{tpu_custom_call.1} parent=1 // pred_fallthru
      _
    // Predicated region
    $region30: #{tpu_custom_call.1} parent=1 // pred_check
      _
    $region31: #{tpu_custom_call.1} parent=1 // pred_check_branch
      %103 = sbr.rel (0) target = $region33
    $region32: #{tpu_custom_call.1} parent=1 // pred_region
      %s105 = ssub.s32 12288, 12288
      %106 = vsyncadd [#allocation15], %s105
      %s107 = sshll.u32 [#allocation14], 4
      %s108 = int_to_ptr.vmem [resolvable:$true] %s107
      %113 = dma.hbm_to_vmem [thread:$0]  %s7, 12288, %s108, [#allocation15], 256, 256, 16
    $region33: #{tpu_custom_call.1} parent=1 // pred_fallthru
      _
    // Predicated region
    $region34: #{tpu_custom_call.1} parent=1 // pred_check
      _
    $region35: #{tpu_custom_call.1} parent=1 // pred_check_branch
      %115 = sbr.rel (0) target = $region37
    $region36: #{tpu_custom_call.1} parent=1 // pred_region
      %s117 = ssub.s32 256, 256
      %118 = vsyncadd [#allocation15], %s117
      %s120 = sshll.u32 [#allocation16], 4
      %s121 = int_to_ptr.vmem [resolvable:$true] %s120
      %123 = dma.hbm_to_vmem [thread:$0]  %s8, 256, %s121, [#allocation15]
    $region37: #{tpu_custom_call.1} parent=1 // pred_fallthru
      _
    // Predicated region
    $region38: #{tpu_custom_call.1} parent=1 // pred_check
      _
    $region39: #{tpu_custom_call.1} parent=1 // pred_check_branch
      %125 = sbr.rel (0) target = $region41
    $region40: #{tpu_custom_call.1} parent=1 // pred_region
      %s127 = ssub.s32 256, 256
      %128 = vsyncadd [#allocation18], %s127
      %s130 = sshll.u32 [#allocation17], 4
      %s131 = int_to_ptr.vmem [resolvable:$true] %s130
      %133 = dma.hbm_to_vmem [thread:$0]  %s9, 256, %s131, [#allocation18]
    $region41: #{tpu_custom_call.1} parent=1 // pred_fallthru
      _
    // Predicated region
    $region42: #{tpu_custom_call.1} parent=1 // pred_check
      _
    $region43: #{tpu_custom_call.1} parent=1 // pred_check_branch
      %135 = sbr.rel (0) target = $region45
    $region44: #{tpu_custom_call.1} parent=1 // pred_region
      %136 = dma.done [#allocation3], 1024
    $region45: #{tpu_custom_call.1} parent=1 // pred_fallthru
      _
    // Predicated region
    $region46: #{tpu_custom_call.1} parent=1 // pred_check
      _
    $region47: #{tpu_custom_call.1} parent=1 // pred_check_branch
      %138 = sbr.rel (0) target = $region49
    $region48: #{tpu_custom_call.1} parent=1 // pred_region
      %139 = dma.done [#allocation6], 12288
    $region49: #{tpu_custom_call.1} parent=1 // pred_fallthru
      _
    // Predicated region
    $region50: #{tpu_custom_call.1} parent=1 // pred_check
      _
    $region51: #{tpu_custom_call.1} parent=1 // pred_check_branch
      %141 = sbr.rel (0) target = $region53
    $region52: #{tpu_custom_call.1} parent=1 // pred_region
      %142 = dma.done [#allocation6], 64
    $region53: #{tpu_custom_call.1} parent=1 // pred_fallthru
      _
    // Predicated region
    $region54: #{tpu_custom_call.1} parent=1 // pred_check
      _
    $region55: #{tpu_custom_call.1} parent=1 // pred_check_branch
      %144 = sbr.rel (0) target = $region57
    $region56: #{tpu_custom_call.1} parent=1 // pred_region
      %145 = dma.done [#allocation9], 64
    $region57: #{tpu_custom_call.1} parent=1 // pred_fallthru
      _
    // Predicated region
    $region58: #{tpu_custom_call.1} parent=1 // pred_check
      _
    $region59: #{tpu_custom_call.1} parent=1 // pred_check_branch
      %147 = sbr.rel (0) target = $region61
    $region60: #{tpu_custom_call.1} parent=1 // pred_region
      %148 = dma.done [#allocation9], 36864
    $region61: #{tpu_custom_call.1} parent=1 // pred_fallthru
      _
    // Predicated region
    $region62: #{tpu_custom_call.1} parent=1 // pred_check
      _
    $region63: #{tpu_custom_call.1} parent=1 // pred_check_branch
      %150 = sbr.rel (0) target = $region65
    $region64: #{tpu_custom_call.1} parent=1 // pred_region
      %151 = dma.done [#allocation12], 256
    $region65: #{tpu_custom_call.1} parent=1 // pred_fallthru
      _
    // Predicated region
    $region66: #{tpu_custom_call.1} parent=1 // pred_check
      _
    $region67: #{tpu_custom_call.1} parent=1 // pred_check_branch
      %153 = sbr.rel (0) target = $region69
    $region68: #{tpu_custom_call.1} parent=1 // pred_region
      %154 = dma.done [#allocation12], 256
    $region69: #{tpu_custom_call.1} parent=1 // pred_fallthru
      _
    // Predicated region
    $region70: #{tpu_custom_call.1} parent=1 // pred_check
      _
    $region71: #{tpu_custom_call.1} parent=1 // pred_check_branch
      %156 = sbr.rel (0) target = $region73
    $region72: #{tpu_custom_call.1} parent=1 // pred_region
      %157 = dma.done [#allocation15], 12288
    $region73: #{tpu_custom_call.1} parent=1 // pred_fallthru
      _
    // Predicated region
    $region74: #{tpu_custom_call.1} parent=1 // pred_check
      _
    $region75: #{tpu_custom_call.1} parent=1 // pred_check_branch
      %159 = sbr.rel (0) target = $region77
    $region76: #{tpu_custom_call.1} parent=1 // pred_region
      %160 = dma.done [#allocation15], 256
    $region77: #{tpu_custom_call.1} parent=1 // pred_fallthru
      _
    // Predicated region
    $region78: #{tpu_custom_call.1} parent=1 // pred_check
      _
    $region79: #{tpu_custom_call.1} parent=1 // pred_check_branch
      %162 = sbr.rel (0) target = $region81
    $region80: #{tpu_custom_call.1} parent=1 // pred_region
      %163 = dma.done [#allocation18], 256
    $region81: #{tpu_custom_call.1} parent=1 // pred_fallthru
      _
    %v165 = vlaneseq
    %v166 = vshrl.u32 %v165, 7
    %v167 = vadd.s32 %v166, 8
    %vm168 = vcmp.lt.s32.totalorder %v166, 0
    %v169 = vsub.s32 0, %v166
    %v170 = vsel %vm168, %v169, %v166
    %v171 = vshrl.u32 %v170, 3
    %v172 = vand.u32 %v170, 7
    %v173 = vsub.s32 0, %v172
    %v174 = vsel %vm168, %v173, %v172
    %vm175 = vcmp.lt.s32.totalorder %v167, 0
    %v176 = vsub.s32 0, %v167
    %v177 = vsel %vm175, %v176, %v167
    %v178 = vshrl.u32 %v177, 3
    %v179 = vand.u32 %v177, 7
    %v180 = vsub.s32 0, %v179
    %v181 = vsel %vm175, %v180, %v179
    %vm182 = vcmp.ne.s32.totalorder %v174, 0
    %vm183 = vcmp.ne.s32.totalorder %v181, 0
    %vm184 = vcmp.lt.s32.totalorder %v174, 0
    %vm185 = vcmp.lt.s32.totalorder %v181, 0
    %vm186 = vmand %vm184, %vm182
    %vm187 = vmand %vm185, %vm183
    %v188 = vadd.s32 %v174, 8
    %v189 = vadd.s32 %v181, 8
    %v190 = vsel %vm186, %v188, %v174
    %v191 = vsel %vm187, %v189, %v181
    %vm192 = vcmp.eq.s32.totalorder %v190, 0
    %vm193 = vcmp.eq.s32.totalorder %v191, 0
    %vm194 = vcmp.eq.s32.totalorder %v190, 7
    %vm195 = vcmp.eq.s32.totalorder %v191, 7
    %v196 = vld [vmem:[#allocation2] sm:$0xff]
    %v197 = vld [vmem:[#allocation2 + $0x8] sm:$0xff]
    %v198 = vld [vmem:[#allocation2 + $0x10] sm:$0xff]
    %v199 = vld [vmem:[#allocation2 + $0x18] sm:$0xff]
    %v200 = vld [vmem:[#allocation2 + $0x20] sm:$0xff]
    %v201 = vld [vmem:[#allocation2 + $0x28] sm:$0xff]
    %v202 = vld [vmem:[#allocation2 + $0x30] sm:$0xff]
    %v203 = vld [vmem:[#allocation2 + $0x38] sm:$0xff]
    %v204 = vpack.c.bf16 %v200, %v196
    %v205 = vpack.c.bf16 %v201, %v197
    %v206 = vpack.c.bf16 %v202, %v198
    %v207 = vpack.c.bf16 %v203, %v199
    %v208 = vld [vmem:[#allocation5] sm:$0xf]
    %v209 = vld [vmem:[#allocation5 + $0x4] sm:$0xf]
    %v210 = vld [vmem:[#allocation5 + $0x8] sm:$0xf]
    %v211 = vld [vmem:[#allocation5 + $0xc] sm:$0xf]
    %v212 = vld [vmem:[#allocation5 + $0x10] sm:$0xf]
    %v213 = vld [vmem:[#allocation5 + $0x14] sm:$0xf]
    %v214 = vld [vmem:[#allocation5 + $0x18] sm:$0xf]
    %v215 = vld [vmem:[#allocation5 + $0x1c] sm:$0xf]
    %v216 = vld [vmem:[#allocation5 + $0x20] sm:$0xf]
    %v217 = vld [vmem:[#allocation5 + $0x24] sm:$0xf]
    %v218 = vld [vmem:[#allocation5 + $0x28] sm:$0xf]
    %v219 = vld [vmem:[#allocation5 + $0x2c] sm:$0xf]
    %v220 = vld [vmem:[#allocation5 + $0x30] sm:$0xf]
    %v221 = vld [vmem:[#allocation5 + $0x34] sm:$0xf]
    %v222 = vld [vmem:[#allocation5 + $0x38] sm:$0xf]
    %v223 = vld [vmem:[#allocation5 + $0x3c] sm:$0xf]
    %v224 = vld [vmem:[#allocation5 + $0x40] sm:$0xf]
    %v225 = vld [vmem:[#allocation5 + $0x44] sm:$0xf]
    %v226 = vld [vmem:[#allocation5 + $0x48] sm:$0xf]
    %v227 = vld [vmem:[#allocation5 + $0x4c] sm:$0xf]
    %v228 = vld [vmem:[#allocation5 + $0x50] sm:$0xf]
    %v229 = vld [vmem:[#allocation5 + $0x54] sm:$0xf]
    %v230 = vld [vmem:[#allocation5 + $0x58] sm:$0xf]
    %v231 = vld [vmem:[#allocation5 + $0x5c] sm:$0xf]
    %v232 = vld [vmem:[#allocation5 + $0x60] sm:$0xf]
    %v233 = vld [vmem:[#allocation5 + $0x64] sm:$0xf]
    %v234 = vld [vmem:[#allocation5 + $0x68] sm:$0xf]
    %v235 = vld [vmem:[#allocation5 + $0x6c] sm:$0xf]
    %v236 = vld [vmem:[#allocation5 + $0x70] sm:$0xf]
    %v237 = vld [vmem:[#allocation5 + $0x74] sm:$0xf]
    %v238 = vld [vmem:[#allocation5 + $0x78] sm:$0xf]
    %v239 = vld [vmem:[#allocation5 + $0x7c] sm:$0xf]
    %v240 = vld [vmem:[#allocation5 + $0x80] sm:$0xf]
    %v241 = vld [vmem:[#allocation5 + $0x84] sm:$0xf]
    %v242 = vld [vmem:[#allocation5 + $0x88] sm:$0xf]
    %v243 = vld [vmem:[#allocation5 + $0x8c] sm:$0xf]
    %v244 = vld [vmem:[#allocation5 + $0x90] sm:$0xf]
    %v245 = vld [vmem:[#allocation5 + $0x94] sm:$0xf]
    %v246 = vld [vmem:[#allocation5 + $0x98] sm:$0xf]
    %v247 = vld [vmem:[#allocation5 + $0x9c] sm:$0xf]
    %v248 = vld [vmem:[#allocation5 + $0xa0] sm:$0xf]
    %v249 = vld [vmem:[#allocation5 + $0xa4] sm:$0xf]
    %v250 = vld [vmem:[#allocation5 + $0xa8] sm:$0xf]
    %v251 = vld [vmem:[#allocation5 + $0xac] sm:$0xf]
    %v252 = vld [vmem:[#allocation5 + $0xb0] sm:$0xf]
    %v253 = vld [vmem:[#allocation5 + $0xb4] sm:$0xf]
    %v254 = vld [vmem:[#allocation5 + $0xb8] sm:$0xf]
    %v255 = vld [vmem:[#allocation5 + $0xbc] sm:$0xf]
    %v256 = vld [vmem:[#allocation5 + $0xc0] sm:$0xf]
    %v257 = vld [vmem:[#allocation5 + $0xc4] sm:$0xf]
    %v258 = vld [vmem:[#allocation5 + $0xc8] sm:$0xf]
    %v259 = vld [vmem:[#allocation5 + $0xcc] sm:$0xf]
    %v260 = vld [vmem:[#allocation5 + $0xd0] sm:$0xf]
    %v261 = vld [vmem:[#allocation5 + $0xd4] sm:$0xf]
    %v262 = vld [vmem:[#allocation5 + $0xd8] sm:$0xf]
    %v263 = vld [vmem:[#allocation5 + $0xdc] sm:$0xf]
    %v264 = vld [vmem:[#allocation5 + $0xe0] sm:$0xf]
    %v265 = vld [vmem:[#allocation5 + $0xe4] sm:$0xf]
    %v266 = vld [vmem:[#allocation5 + $0xe8] sm:$0xf]
    %v267 = vld [vmem:[#allocation5 + $0xec] sm:$0xf]
    %v268 = vld [vmem:[#allocation5 + $0xf0] sm:$0xf]
    %v269 = vld [vmem:[#allocation5 + $0xf4] sm:$0xf]
    %v270 = vld [vmem:[#allocation5 + $0xf8] sm:$0xf]
    %v271 = vld [vmem:[#allocation5 + $0xfc] sm:$0xf]
    %v272 = vld [vmem:[#allocation7] sm:$0x1]
    %v273 = vlaneseq
    %v274 = vshrl.u32 %v273, 7
    %v275 = vsub.s32 0, %v274
    %v276 = vrot.slane %v272, %v275
    %v341 = vunpack.c.l.b16 %v208
    %v342 = vunpack.c.l.b16 %v209
    %v343 = vunpack.c.l.b16 %v210
    %v344 = vunpack.c.l.b16 %v211
    %v345 = vunpack.c.l.b16 %v212
    %v346 = vunpack.c.l.b16 %v213
    %v347 = vunpack.c.l.b16 %v214
    %v348 = vunpack.c.l.b16 %v215
    %v349 = vunpack.c.l.b16 %v216
    %v350 = vunpack.c.l.b16 %v217
    %v351 = vunpack.c.l.b16 %v218
    %v352 = vunpack.c.l.b16 %v219
    %v353 = vunpack.c.l.b16 %v220
    %v354 = vunpack.c.l.b16 %v221
    %v355 = vunpack.c.l.b16 %v222
    %v356 = vunpack.c.l.b16 %v223
    %v357 = vunpack.c.l.b16 %v224
    %v358 = vunpack.c.l.b16 %v225
    %v359 = vunpack.c.l.b16 %v226
    %v360 = vunpack.c.l.b16 %v227
    %v361 = vunpack.c.l.b16 %v228
    %v362 = vunpack.c.l.b16 %v229
    %v363 = vunpack.c.l.b16 %v230
    %v364 = vunpack.c.l.b16 %v231
    %v365 = vunpack.c.l.b16 %v232
    %v366 = vunpack.c.l.b16 %v233
    %v367 = vunpack.c.l.b16 %v234
    %v368 = vunpack.c.l.b16 %v235
    %v369 = vunpack.c.l.b16 %v236
    %v370 = vunpack.c.l.b16 %v237
    %v371 = vunpack.c.l.b16 %v238
    %v372 = vunpack.c.l.b16 %v239
    %v373 = vunpack.c.l.b16 %v240
    %v374 = vunpack.c.l.b16 %v241
    %v375 = vunpack.c.l.b16 %v242
    %v376 = vunpack.c.l.b16 %v243
    %v377 = vunpack.c.l.b16 %v244
    %v378 = vunpack.c.l.b16 %v245
    %v379 = vunpack.c.l.b16 %v246
    %v380 = vunpack.c.l.b16 %v247
    %v381 = vunpack.c.l.b16 %v248
    %v382 = vunpack.c.l.b16 %v249
    %v383 = vunpack.c.l.b16 %v250
    %v384 = vunpack.c.l.b16 %v251
    %v385 = vunpack.c.l.b16 %v252
    %v386 = vunpack.c.l.b16 %v253
    %v387 = vunpack.c.l.b16 %v254
    %v388 = vunpack.c.l.b16 %v255
    %v389 = vunpack.c.l.b16 %v256
    %v390 = vunpack.c.l.b16 %v257
    %v391 = vunpack.c.l.b16 %v258
    %v392 = vunpack.c.l.b16 %v259
    %v393 = vunpack.c.l.b16 %v260
    %v394 = vunpack.c.l.b16 %v261
    %v395 = vunpack.c.l.b16 %v262
    %v396 = vunpack.c.l.b16 %v263
    %v397 = vunpack.c.l.b16 %v264
    %v398 = vunpack.c.l.b16 %v265
    %v399 = vunpack.c.l.b16 %v266
    %v400 = vunpack.c.l.b16 %v267
    %v401 = vunpack.c.l.b16 %v268
    %v402 = vunpack.c.l.b16 %v269
    %v403 = vunpack.c.l.b16 %v270
    %v404 = vunpack.c.l.b16 %v271
    %v405 = vpack.c.b16 %v342, %v341
    %v406 = vpack.c.b16 %v344, %v343
    %v407 = vpack.c.b16 %v346, %v345
    %v408 = vpack.c.b16 %v348, %v347
    %v409 = vpack.c.b16 %v350, %v349
    %v410 = vpack.c.b16 %v352, %v351
    %v411 = vpack.c.b16 %v354, %v353
    %v412 = vpack.c.b16 %v356, %v355
    %v413 = vpack.c.b16 %v358, %v357
    %v414 = vpack.c.b16 %v360, %v359
    %v415 = vpack.c.b16 %v362, %v361
    %v416 = vpack.c.b16 %v364, %v363
    %v417 = vpack.c.b16 %v366, %v365
    %v418 = vpack.c.b16 %v368, %v367
    %v419 = vpack.c.b16 %v370, %v369
    %v420 = vpack.c.b16 %v372, %v371
    %v421 = vpack.c.b16 %v374, %v373
    %v422 = vpack.c.b16 %v376, %v375
    %v423 = vpack.c.b16 %v378, %v377
    %v424 = vpack.c.b16 %v380, %v379
    %v425 = vpack.c.b16 %v382, %v381
    %v426 = vpack.c.b16 %v384, %v383
    %v427 = vpack.c.b16 %v386, %v385
    %v428 = vpack.c.b16 %v388, %v387
    %v429 = vpack.c.b16 %v390, %v389
    %v430 = vpack.c.b16 %v392, %v391
    %v431 = vpack.c.b16 %v394, %v393
    %v432 = vpack.c.b16 %v396, %v395
    %v433 = vpack.c.b16 %v398, %v397
    %v434 = vpack.c.b16 %v400, %v399
    %v435 = vpack.c.b16 %v402, %v401
    %v436 = vpack.c.b16 %v404, %v403
    %469 = vmatprep.subr.bf16.mxu0 0
    %470 = vmatpush1.bf16.msra.mxu0 %v412
    %471 = vmatprep.subr.bf16.mxu0 0
    %472 = vmatpush1.bf16.msra.mxu0 %v411
    %473 = vmatprep.subr.bf16.mxu0 0
    %474 = vmatpush1.bf16.msra.mxu0 %v410
    %475 = vmatprep.subr.bf16.mxu0 0
    %476 = vmatpush1.bf16.msra.mxu0 %v409
    %477 = vmatprep.subr.bf16.mxu0 0
    %478 = vmatpush1.bf16.msra.mxu0 %v408
    %479 = vmatprep.subr.bf16.mxu0 0
    %480 = vmatpush1.bf16.msra.mxu0 %v407
    %481 = vmatprep.subr.bf16.mxu0 0
    %482 = vmatpush1.bf16.msra.mxu0 %v406
    %483 = vmatprep.subr.bf16.mxu0 0
    %484 = vmatpush1.bf16.msra.mxu0 %v405
    %485 = vmatprep.subr.bf16.mxu0 0
    %486 = vmatpush2.bf16.msra.mxu0 %v420
    %487 = vmatprep.subr.bf16.mxu0 0
    %488 = vmatpush2.bf16.msra.mxu0 %v419
    %489 = vmatprep.subr.bf16.mxu0 0
    %490 = vmatpush2.bf16.msra.mxu0 %v418
    %491 = vmatprep.subr.bf16.mxu0 0
    %492 = vmatpush2.bf16.msra.mxu0 %v417
    %493 = vmatprep.subr.bf16.mxu0 0
    %494 = vmatpush2.bf16.msra.mxu0 %v416
    %495 = vmatprep.subr.bf16.mxu0 0
    %496 = vmatpush2.bf16.msra.mxu0 %v415
    %497 = vmatprep.subr.bf16.mxu0 0
    %498 = vmatpush2.bf16.msra.mxu0 %v414
    %499 = vmatprep.subr.bf16.mxu0 0
    %500 = vmatpush2.bf16.msra.mxu0 %v413
    %501 = vmatprep.mubr.bf16.mxu0 %v205
    %502 = vmatmul.mubr.bf16.gmra.mxu0 %v204
    %v503 = vpop.f32.mrf.mxu0
    %v504 = vadd.f32 %v276, %v503
    %v505 = vpop.f32.mrf.mxu0
    %v506 = vpop.f32.mrf.mxu0
    %v507 = vadd.f32 %v276, %v506
    %v508 = vpop.f32.mrf.mxu0
    %509 = vdwg.mxu0
    %510 = vmatprep.subr.bf16.mxu0 0
    %511 = vmatpush1.bf16.msra.mxu0 %v428
    %512 = vmatprep.subr.bf16.mxu0 0
    %513 = vmatpush1.bf16.msra.mxu0 %v427
    %514 = vmatprep.subr.bf16.mxu0 0
    %515 = vmatpush1.bf16.msra.mxu0 %v426
    %516 = vmatprep.subr.bf16.mxu0 0
    %517 = vmatpush1.bf16.msra.mxu0 %v425
    %518 = vmatprep.subr.bf16.mxu0 0
    %519 = vmatpush1.bf16.msra.mxu0 %v424
    %520 = vmatprep.subr.bf16.mxu0 0
    %521 = vmatpush1.bf16.msra.mxu0 %v423
    %522 = vmatprep.subr.bf16.mxu0 0
    %523 = vmatpush1.bf16.msra.mxu0 %v422
    %524 = vmatprep.subr.bf16.mxu0 0
    %525 = vmatpush1.bf16.msra.mxu0 %v421
    %526 = vmatprep.subr.bf16.mxu0 0
    %527 = vmatpush2.bf16.msra.mxu0 %v436
    %528 = vmatprep.subr.bf16.mxu0 0
    %529 = vmatpush2.bf16.msra.mxu0 %v435
    %530 = vmatprep.subr.bf16.mxu0 0
    %531 = vmatpush2.bf16.msra.mxu0 %v434
    %532 = vmatprep.subr.bf16.mxu0 0
    %533 = vmatpush2.bf16.msra.mxu0 %v433
    %534 = vmatprep.subr.bf16.mxu0 0
    %535 = vmatpush2.bf16.msra.mxu0 %v432
    %536 = vmatprep.subr.bf16.mxu0 0
    %537 = vmatpush2.bf16.msra.mxu0 %v431
    %538 = vmatprep.subr.bf16.mxu0 0
    %539 = vmatpush2.bf16.msra.mxu0 %v430
    %540 = vmatprep.subr.bf16.mxu0 0
    %541 = vmatpush2.bf16.msra.mxu0 %v429
    %542 = vmatprep.mubr.bf16.mxu0 %v207
    %543 = vmatmul.mubr.bf16.gmra.mxu0 %v206
    %v544 = vpop.f32.mrf.mxu0
    %v545 = vadd.f32 %v504, %v544
    %v546 = vpop.f32.mrf.mxu0
    %v547 = vpop.f32.mrf.mxu0
    %v548 = vadd.f32 %v507, %v547
    %v549 = vpop.f32.mrf.mxu0
    %550 = vdwg.mxu0
    %vm551 = vcmp.gt.f32.partialorder %v545, 0.0
    %vm552 = vcmp.gt.f32.partialorder %v548, 0.0
    %v553 = vld [vmem:[#allocation8] sm:$0x1]
    %v554 = vlaneseq
    %v555 = vshrl.u32 %v554, 7
    %v556 = vsub.s32 0, %v555
    %v557 = vrot.slane %v553, %v556
    %v558 = vmul.f32 %v557, %v545
    %v559 = vmul.f32 %v557, %v548
    %v560 = vsel %vm551, %v545, %v558
    %v561 = vsel %vm552, %v548, %v559
    %v562 = vrot.slane %v560, 7
    %v563 = vrot.slane %v561, 7
    %vm564 = vcmp.lt.s32.totalorder %v166, 1
    %v565 = vsel %vm564, %v562, %v563
    %v566 = vsel %vm564, %v563, %v562
    %v567 = vsel %vm192, 1, 0
    %v568 = vsel %vm193, 1, 0
    %vm569 = vcmp.eq.s32.totalorder %v567, 1
    %vm570 = vcmp.eq.s32.totalorder %v568, 1
    %v571 = vsel %vm569, 0.0, %v566
    %v572 = vsel %vm570, 0.0, %v565
    %v573 = vrot.slane %v560, 1
    %v574 = vrot.slane %v561, 1
    %vm575 = vcmp.lt.s32.totalorder %v166, 7
    %v576 = vsel %vm575, %v573, %v574
    %v577 = vsel %vm575, %v574, %v573
    %v578 = vsel %vm194, 1, 0
    %v579 = vsel %vm195, 1, 0
    %vm580 = vcmp.eq.s32.totalorder %v578, 1
    %vm581 = vcmp.eq.s32.totalorder %v579, 1
    %v582 = vsel %vm580, 0.0, %v576
    %v583 = vsel %vm581, 0.0, %v577
    %v584 = vpack.c.bf16 %v572, %v571
    %v585 = vpack.c.bf16 %v561, %v560
    %v586 = vpack.c.bf16 %v583, %v582
    %v587 = vld [vmem:[#allocation10] sm:$0xf]
    %v588 = vld [vmem:[#allocation10 + $0x4] sm:$0xf]
    %v589 = vld [vmem:[#allocation10 + $0x8] sm:$0xf]
    %v590 = vld [vmem:[#allocation10 + $0xc] sm:$0xf]
    %v591 = vld [vmem:[#allocation10 + $0x10] sm:$0xf]
    %v592 = vld [vmem:[#allocation10 + $0x14] sm:$0xf]
    %v593 = vld [vmem:[#allocation10 + $0x18] sm:$0xf]
    %v594 = vld [vmem:[#allocation10 + $0x1c] sm:$0xf]
    %v595 = vld [vmem:[#allocation10 + $0x20] sm:$0xf]
    %v596 = vld [vmem:[#allocation10 + $0x24] sm:$0xf]
    %v597 = vld [vmem:[#allocation10 + $0x28] sm:$0xf]
    %v598 = vld [vmem:[#allocation10 + $0x2c] sm:$0xf]
    %v599 = vld [vmem:[#allocation10 + $0x30] sm:$0xf]
    %v600 = vld [vmem:[#allocation10 + $0x34] sm:$0xf]
    %v601 = vld [vmem:[#allocation10 + $0x38] sm:$0xf]
    %v602 = vld [vmem:[#allocation10 + $0x3c] sm:$0xf]
    %v603 = vld [vmem:[#allocation10 + $0x40] sm:$0xf]
    %v604 = vld [vmem:[#allocation10 + $0x44] sm:$0xf]
    %v605 = vld [vmem:[#allocation10 + $0x48] sm:$0xf]
    %v606 = vld [vmem:[#allocation10 + $0x4c] sm:$0xf]
    %v607 = vld [vmem:[#allocation10 + $0x50] sm:$0xf]
    %v608 = vld [vmem:[#allocation10 + $0x54] sm:$0xf]
    %v609 = vld [vmem:[#allocation10 + $0x58] sm:$0xf]
    %v610 = vld [vmem:[#allocation10 + $0x5c] sm:$0xf]
    %v611 = vld [vmem:[#allocation10 + $0x60] sm:$0xf]
    %v612 = vld [vmem:[#allocation10 + $0x64] sm:$0xf]
    %v613 = vld [vmem:[#allocation10 + $0x68] sm:$0xf]
    %v614 = vld [vmem:[#allocation10 + $0x6c] sm:$0xf]
    %v615 = vld [vmem:[#allocation10 + $0x70] sm:$0xf]
    %v616 = vld [vmem:[#allocation10 + $0x74] sm:$0xf]
    %v617 = vld [vmem:[#allocation10 + $0x78] sm:$0xf]
    %v618 = vld [vmem:[#allocation10 + $0x7c] sm:$0xf]
    %v619 = vld [vmem:[#allocation10 + $0x80] sm:$0xf]
    %v620 = vld [vmem:[#allocation10 + $0x84] sm:$0xf]
    %v621 = vld [vmem:[#allocation10 + $0x88] sm:$0xf]
    %v622 = vld [vmem:[#allocation10 + $0x8c] sm:$0xf]
    %v623 = vld [vmem:[#allocation10 + $0x90] sm:$0xf]
    %v624 = vld [vmem:[#allocation10 + $0x94] sm:$0xf]
    %v625 = vld [vmem:[#allocation10 + $0x98] sm:$0xf]
    %v626 = vld [vmem:[#allocation10 + $0x9c] sm:$0xf]
    %v627 = vld [vmem:[#allocation10 + $0xa0] sm:$0xf]
    %v628 = vld [vmem:[#allocation10 + $0xa4] sm:$0xf]
    %v629 = vld [vmem:[#allocation10 + $0xa8] sm:$0xf]
    %v630 = vld [vmem:[#allocation10 + $0xac] sm:$0xf]
    %v631 = vld [vmem:[#allocation10 + $0xb0] sm:$0xf]
    %v632 = vld [vmem:[#allocation10 + $0xb4] sm:$0xf]
    %v633 = vld [vmem:[#allocation10 + $0xb8] sm:$0xf]
    %v634 = vld [vmem:[#allocation10 + $0xbc] sm:$0xf]
    %v635 = vld [vmem:[#allocation11] sm:$0x1]
    %v636 = vlaneseq
    %v637 = vshrl.u32 %v636, 7
    %v638 = vsub.s32 0, %v637
    %v639 = vrot.slane %v635, %v638
    %v688 = vunpack.c.l.b16 %v587
    %v689 = vunpack.c.l.b16 %v588
    %v690 = vunpack.c.l.b16 %v589
    %v691 = vunpack.c.l.b16 %v590
    %v692 = vunpack.c.l.b16 %v591
    %v693 = vunpack.c.l.b16 %v592
    %v694 = vunpack.c.l.b16 %v593
    %v695 = vunpack.c.l.b16 %v594
    %v696 = vunpack.c.l.b16 %v595
    %v697 = vunpack.c.l.b16 %v596
    %v698 = vunpack.c.l.b16 %v597
    %v699 = vunpack.c.l.b16 %v598
    %v700 = vunpack.c.l.b16 %v599
    %v701 = vunpack.c.l.b16 %v600
    %v702 = vunpack.c.l.b16 %v601
    %v703 = vunpack.c.l.b16 %v602
    %v704 = vunpack.c.l.b16 %v603
    %v705 = vunpack.c.l.b16 %v604
    %v706 = vunpack.c.l.b16 %v605
    %v707 = vunpack.c.l.b16 %v606
    %v708 = vunpack.c.l.b16 %v607
    %v709 = vunpack.c.l.b16 %v608
    %v710 = vunpack.c.l.b16 %v609
    %v711 = vunpack.c.l.b16 %v610
    %v712 = vunpack.c.l.b16 %v611
    %v713 = vunpack.c.l.b16 %v612
    %v714 = vunpack.c.l.b16 %v613
    %v715 = vunpack.c.l.b16 %v614
    %v716 = vunpack.c.l.b16 %v615
    %v717 = vunpack.c.l.b16 %v616
    %v718 = vunpack.c.l.b16 %v617
    %v719 = vunpack.c.l.b16 %v618
    %v720 = vunpack.c.l.b16 %v619
    %v721 = vunpack.c.l.b16 %v620
    %v722 = vunpack.c.l.b16 %v621
    %v723 = vunpack.c.l.b16 %v622
    %v724 = vunpack.c.l.b16 %v623
    %v725 = vunpack.c.l.b16 %v624
    %v726 = vunpack.c.l.b16 %v625
    %v727 = vunpack.c.l.b16 %v626
    %v728 = vunpack.c.l.b16 %v627
    %v729 = vunpack.c.l.b16 %v628
    %v730 = vunpack.c.l.b16 %v629
    %v731 = vunpack.c.l.b16 %v630
    %v732 = vunpack.c.l.b16 %v631
    %v733 = vunpack.c.l.b16 %v632
    %v734 = vunpack.c.l.b16 %v633
    %v735 = vunpack.c.l.b16 %v634
    %v736 = vpack.c.b16 %v689, %v688
    %v737 = vpack.c.b16 %v691, %v690
    %v738 = vpack.c.b16 %v693, %v692
    %v739 = vpack.c.b16 %v695, %v694
    %v740 = vpack.c.b16 %v697, %v696
    %v741 = vpack.c.b16 %v699, %v698
    %v742 = vpack.c.b16 %v701, %v700
    %v743 = vpack.c.b16 %v703, %v702
    %v744 = vpack.c.b16 %v705, %v704
    %v745 = vpack.c.b16 %v707, %v706
    %v746 = vpack.c.b16 %v709, %v708
    %v747 = vpack.c.b16 %v711, %v710
    %v748 = vpack.c.b16 %v713, %v712
    %v749 = vpack.c.b16 %v715, %v714
    %v750 = vpack.c.b16 %v717, %v716
    %v751 = vpack.c.b16 %v719, %v718
    %v752 = vpack.c.b16 %v721, %v720
    %v753 = vpack.c.b16 %v723, %v722
    %v754 = vpack.c.b16 %v725, %v724
    %v755 = vpack.c.b16 %v727, %v726
    %v756 = vpack.c.b16 %v729, %v728
    %v757 = vpack.c.b16 %v731, %v730
    %v758 = vpack.c.b16 %v733, %v732
    %v759 = vpack.c.b16 %v735, %v734
    %784 = vmatprep.subr.bf16.mxu0 0
    %785 = vmatpush1.bf16.msra.mxu0 %v743
    %786 = vmatprep.subr.bf16.mxu0 0
    %787 = vmatpush1.bf16.msra.mxu0 %v742
    %788 = vmatprep.subr.bf16.mxu0 0
    %789 = vmatpush1.bf16.msra.mxu0 %v741
    %790 = vmatprep.subr.bf16.mxu0 0
    %791 = vmatpush1.bf16.msra.mxu0 %v740
    %792 = vmatprep.subr.bf16.mxu0 0
    %793 = vmatpush1.bf16.msra.mxu0 %v739
    %794 = vmatprep.subr.bf16.mxu0 0
    %795 = vmatpush1.bf16.msra.mxu0 %v738
    %796 = vmatprep.subr.bf16.mxu0 0
    %797 = vmatpush1.bf16.msra.mxu0 %v737
    %798 = vmatprep.subr.bf16.mxu0 0
    %799 = vmatpush1.bf16.msra.mxu0 %v736
    %800 = vmatprep.subr.bf16.mxu0 0
    %801 = vmatpush2.bf16.msra.mxu0 %v751
    %802 = vmatprep.subr.bf16.mxu0 0
    %803 = vmatpush2.bf16.msra.mxu0 %v750
    %804 = vmatprep.subr.bf16.mxu0 0
    %805 = vmatpush2.bf16.msra.mxu0 %v749
    %806 = vmatprep.subr.bf16.mxu0 0
    %807 = vmatpush2.bf16.msra.mxu0 %v748
    %808 = vmatprep.subr.bf16.mxu0 0
    %809 = vmatpush2.bf16.msra.mxu0 %v747
    %810 = vmatprep.subr.bf16.mxu0 0
    %811 = vmatpush2.bf16.msra.mxu0 %v746
    %812 = vmatprep.subr.bf16.mxu0 0
    %813 = vmatpush2.bf16.msra.mxu0 %v745
    %814 = vmatprep.subr.bf16.mxu0 0
    %815 = vmatpush2.bf16.msra.mxu0 %v744
    %816 = vmatprep.mubr.bf16.mxu0 %v585
    %817 = vmatmul.mubr.bf16.gmra.mxu0 %v584
    %v818 = vpop.f32.mrf.mxu0
    %v819 = vadd.f32 %v639, %v818
    %v820 = vpop.f32.mrf.mxu0
    %v821 = vpop.f32.mrf.mxu0
    %v822 = vadd.f32 %v639, %v821
    %v823 = vpop.f32.mrf.mxu0
    %824 = vdwg.mxu0
    %825 = vmatprep.subr.bf16.mxu0 0
    %826 = vmatpush1.bf16.msra.mxu0 %v759
    %827 = vmatprep.subr.bf16.mxu0 0
    %828 = vmatpush1.bf16.msra.mxu0 %v758
    %829 = vmatprep.subr.bf16.mxu0 0
    %830 = vmatpush1.bf16.msra.mxu0 %v757
    %831 = vmatprep.subr.bf16.mxu0 0
    %832 = vmatpush1.bf16.msra.mxu0 %v756
    %833 = vmatprep.subr.bf16.mxu0 0
    %834 = vmatpush1.bf16.msra.mxu0 %v755
    %835 = vmatprep.subr.bf16.mxu0 0
    %836 = vmatpush1.bf16.msra.mxu0 %v754
    %837 = vmatprep.subr.bf16.mxu0 0
    %838 = vmatpush1.bf16.msra.mxu0 %v753
    %839 = vmatprep.subr.bf16.mxu0 0
    %840 = vmatpush1.bf16.msra.mxu0 %v752
    %841 = vmatprep.subr.bf16.mxu0 0
    %842 = vmatpush2.bf16.msra.mxu0 0
    %843 = vmatprep.subr.bf16.mxu0 0
    %844 = vmatpush2.bf16.msra.mxu0 0
    %845 = vmatprep.subr.bf16.mxu0 0
    %846 = vmatpush2.bf16.msra.mxu0 0
    %847 = vmatprep.subr.bf16.mxu0 0
    %848 = vmatpush2.bf16.msra.mxu0 0
    %849 = vmatprep.subr.bf16.mxu0 0
    %850 = vmatpush2.bf16.msra.mxu0 0
    %851 = vmatprep.subr.bf16.mxu0 0
    %852 = vmatpush2.bf16.msra.mxu0 0
    %853 = vmatprep.subr.bf16.mxu0 0
    %854 = vmatpush2.bf16.msra.mxu0 0
    %855 = vmatprep.subr.bf16.mxu0 0
    %856 = vmatpush2.bf16.msra.mxu0 0
    %857 = vmatprep.mubr.bf16.mxu0 0
    %858 = vmatmul.mubr.bf16.gmra.mxu0 %v586
    %v859 = vpop.f32.mrf.mxu0
    %v860 = vadd.f32 %v819, %v859
    %v861 = vpop.f32.mrf.mxu0
    %v862 = vpop.f32.mrf.mxu0
    %v863 = vadd.f32 %v822, %v862
    %v864 = vpop.f32.mrf.mxu0
    %865 = vdwg.mxu0
    %vm866 = vcmp.gt.f32.partialorder %v860, 0.0
    %vm867 = vcmp.gt.f32.partialorder %v863, 0.0
    %v868 = vld [vmem:[#allocation13] sm:$0x1]
    %v869 = vlaneseq
    %v870 = vshrl.u32 %v869, 7
    %v871 = vsub.s32 0, %v870
    %v872 = vrot.slane %v868, %v871
    %v873 = vmul.f32 %v872, %v860
    %v874 = vmul.f32 %v872, %v863
    %v875 = vsel %vm866, %v860, %v873
    %v876 = vsel %vm867, %v863, %v874
    %v877 = vrot.slane %v875, 7
    %v878 = vrot.slane %v876, 7
    %v879 = vsel %vm564, %v877, %v878
    %v880 = vsel %vm564, %v878, %v877
    %v881 = vsel %vm569, 0.0, %v880
    %v882 = vsel %vm570, 0.0, %v879
    %v883 = vrot.slane %v875, 1
    %v884 = vrot.slane %v876, 1
    %v885 = vsel %vm575, %v883, %v884
    %v886 = vsel %vm575, %v884, %v883
    %v887 = vsel %vm580, 0.0, %v885
    %v888 = vsel %vm581, 0.0, %v886
    %v889 = vpack.c.bf16 %v882, %v881
    %v890 = vpack.c.bf16 %v876, %v875
    %v891 = vpack.c.bf16 %v888, %v887
    %s892 = scalar_lea.vmem [#allocation10], 192
    %v893 = vld [vmem:[%s892] sm:$0xf]
    %v894 = vld [vmem:[%s892 + $0x4] sm:$0xf]
    %v895 = vld [vmem:[%s892 + $0x8] sm:$0xf]
    %v896 = vld [vmem:[%s892 + $0xc] sm:$0xf]
    %v897 = vld [vmem:[%s892 + $0x10] sm:$0xf]
    %v898 = vld [vmem:[%s892 + $0x14] sm:$0xf]
    %v899 = vld [vmem:[%s892 + $0x18] sm:$0xf]
    %v900 = vld [vmem:[%s892 + $0x1c] sm:$0xf]
    %v901 = vld [vmem:[%s892 + $0x20] sm:$0xf]
    %v902 = vld [vmem:[%s892 + $0x24] sm:$0xf]
    %v903 = vld [vmem:[%s892 + $0x28] sm:$0xf]
    %v904 = vld [vmem:[%s892 + $0x2c] sm:$0xf]
    %v905 = vld [vmem:[%s892 + $0x30] sm:$0xf]
    %v906 = vld [vmem:[%s892 + $0x34] sm:$0xf]
    %v907 = vld [vmem:[%s892 + $0x38] sm:$0xf]
    %v908 = vld [vmem:[%s892 + $0x3c] sm:$0xf]
    %v909 = vld [vmem:[%s892 + $0x40] sm:$0xf]
    %v910 = vld [vmem:[%s892 + $0x44] sm:$0xf]
    %v911 = vld [vmem:[%s892 + $0x48] sm:$0xf]
    %v912 = vld [vmem:[%s892 + $0x4c] sm:$0xf]
    %v913 = vld [vmem:[%s892 + $0x50] sm:$0xf]
    %v914 = vld [vmem:[%s892 + $0x54] sm:$0xf]
    %v915 = vld [vmem:[%s892 + $0x58] sm:$0xf]
    %v916 = vld [vmem:[%s892 + $0x5c] sm:$0xf]
    %v917 = vld [vmem:[%s892 + $0x60] sm:$0xf]
    %v918 = vld [vmem:[%s892 + $0x64] sm:$0xf]
    %v919 = vld [vmem:[%s892 + $0x68] sm:$0xf]
    %v920 = vld [vmem:[%s892 + $0x6c] sm:$0xf]
    %v921 = vld [vmem:[%s892 + $0x70] sm:$0xf]
    %v922 = vld [vmem:[%s892 + $0x74] sm:$0xf]
    %v923 = vld [vmem:[%s892 + $0x78] sm:$0xf]
    %v924 = vld [vmem:[%s892 + $0x7c] sm:$0xf]
    %v925 = vld [vmem:[%s892 + $0x80] sm:$0xf]
    %v926 = vld [vmem:[%s892 + $0x84] sm:$0xf]
    %v927 = vld [vmem:[%s892 + $0x88] sm:$0xf]
    %v928 = vld [vmem:[%s892 + $0x8c] sm:$0xf]
    %v929 = vld [vmem:[%s892 + $0x90] sm:$0xf]
    %v930 = vld [vmem:[%s892 + $0x94] sm:$0xf]
    %v931 = vld [vmem:[%s892 + $0x98] sm:$0xf]
    %v932 = vld [vmem:[%s892 + $0x9c] sm:$0xf]
    %v933 = vld [vmem:[%s892 + $0xa0] sm:$0xf]
    %v934 = vld [vmem:[%s892 + $0xa4] sm:$0xf]
    %v935 = vld [vmem:[%s892 + $0xa8] sm:$0xf]
    %v936 = vld [vmem:[%s892 + $0xac] sm:$0xf]
    %v937 = vld [vmem:[%s892 + $0xb0] sm:$0xf]
    %v938 = vld [vmem:[%s892 + $0xb4] sm:$0xf]
    %v939 = vld [vmem:[%s892 + $0xb8] sm:$0xf]
    %v940 = vld [vmem:[%s892 + $0xbc] sm:$0xf]
    %v941 = vld [vmem:[#allocation11 + $0x1] sm:$0x1]
    %v942 = vlaneseq
    %v943 = vshrl.u32 %v942, 7
    %v944 = vsub.s32 0, %v943
    %v945 = vrot.slane %v941, %v944
    %v994 = vunpack.c.l.b16 %v893
    %v995 = vunpack.c.l.b16 %v894
    %v996 = vunpack.c.l.b16 %v895
    %v997 = vunpack.c.l.b16 %v896
    %v998 = vunpack.c.l.b16 %v897
    %v999 = vunpack.c.l.b16 %v898
    %v1000 = vunpack.c.l.b16 %v899
    %v1001 = vunpack.c.l.b16 %v900
    %v1002 = vunpack.c.l.b16 %v901
    %v1003 = vunpack.c.l.b16 %v902
    %v1004 = vunpack.c.l.b16 %v903
    %v1005 = vunpack.c.l.b16 %v904
    %v1006 = vunpack.c.l.b16 %v905
    %v1007 = vunpack.c.l.b16 %v906
    %v1008 = vunpack.c.l.b16 %v907
    %v1009 = vunpack.c.l.b16 %v908
    %v1010 = vunpack.c.l.b16 %v909
    %v1011 = vunpack.c.l.b16 %v910
    %v1012 = vunpack.c.l.b16 %v911
    %v1013 = vunpack.c.l.b16 %v912
    %v1014 = vunpack.c.l.b16 %v913
    %v1015 = vunpack.c.l.b16 %v914
    %v1016 = vunpack.c.l.b16 %v915
    %v1017 = vunpack.c.l.b16 %v916
    %v1018 = vunpack.c.l.b16 %v917
    %v1019 = vunpack.c.l.b16 %v918
    %v1020 = vunpack.c.l.b16 %v919
    %v1021 = vunpack.c.l.b16 %v920
    %v1022 = vunpack.c.l.b16 %v921
    %v1023 = vunpack.c.l.b16 %v922
    %v1024 = vunpack.c.l.b16 %v923
    %v1025 = vunpack.c.l.b16 %v924
    %v1026 = vunpack.c.l.b16 %v925
    %v1027 = vunpack.c.l.b16 %v926
    %v1028 = vunpack.c.l.b16 %v927
    %v1029 = vunpack.c.l.b16 %v928
    %v1030 = vunpack.c.l.b16 %v929
    %v1031 = vunpack.c.l.b16 %v930
    %v1032 = vunpack.c.l.b16 %v931
    %v1033 = vunpack.c.l.b16 %v932
    %v1034 = vunpack.c.l.b16 %v933
    %v1035 = vunpack.c.l.b16 %v934
    %v1036 = vunpack.c.l.b16 %v935
    %v1037 = vunpack.c.l.b16 %v936
    %v1038 = vunpack.c.l.b16 %v937
    %v1039 = vunpack.c.l.b16 %v938
    %v1040 = vunpack.c.l.b16 %v939
    %v1041 = vunpack.c.l.b16 %v940
    %v1042 = vpack.c.b16 %v995, %v994
    %v1043 = vpack.c.b16 %v997, %v996
    %v1044 = vpack.c.b16 %v999, %v998
    %v1045 = vpack.c.b16 %v1001, %v1000
    %v1046 = vpack.c.b16 %v1003, %v1002
    %v1047 = vpack.c.b16 %v1005, %v1004
    %v1048 = vpack.c.b16 %v1007, %v1006
    %v1049 = vpack.c.b16 %v1009, %v1008
    %v1050 = vpack.c.b16 %v1011, %v1010
    %v1051 = vpack.c.b16 %v1013, %v1012
    %v1052 = vpack.c.b16 %v1015, %v1014
    %v1053 = vpack.c.b16 %v1017, %v1016
    %v1054 = vpack.c.b16 %v1019, %v1018
    %v1055 = vpack.c.b16 %v1021, %v1020
    %v1056 = vpack.c.b16 %v1023, %v1022
    %v1057 = vpack.c.b16 %v1025, %v1024
    %v1058 = vpack.c.b16 %v1027, %v1026
    %v1059 = vpack.c.b16 %v1029, %v1028
    %v1060 = vpack.c.b16 %v1031, %v1030
    %v1061 = vpack.c.b16 %v1033, %v1032
    %v1062 = vpack.c.b16 %v1035, %v1034
    %v1063 = vpack.c.b16 %v1037, %v1036
    %v1064 = vpack.c.b16 %v1039, %v1038
    %v1065 = vpack.c.b16 %v1041, %v1040
    %1090 = vmatprep.subr.bf16.mxu0 0
    %1091 = vmatpush1.bf16.msra.mxu0 %v1049
    %1092 = vmatprep.subr.bf16.mxu0 0
    %1093 = vmatpush1.bf16.msra.mxu0 %v1048
    %1094 = vmatprep.subr.bf16.mxu0 0
    %1095 = vmatpush1.bf16.msra.mxu0 %v1047
    %1096 = vmatprep.subr.bf16.mxu0 0
    %1097 = vmatpush1.bf16.msra.mxu0 %v1046
    %1098 = vmatprep.subr.bf16.mxu0 0
    %1099 = vmatpush1.bf16.msra.mxu0 %v1045
    %1100 = vmatprep.subr.bf16.mxu0 0
    %1101 = vmatpush1.bf16.msra.mxu0 %v1044
    %1102 = vmatprep.subr.bf16.mxu0 0
    %1103 = vmatpush1.bf16.msra.mxu0 %v1043
    %1104 = vmatprep.subr.bf16.mxu0 0
    %1105 = vmatpush1.bf16.msra.mxu0 %v1042
    %1106 = vmatprep.subr.bf16.mxu0 0
    %1107 = vmatpush2.bf16.msra.mxu0 %v1057
    %1108 = vmatprep.subr.bf16.mxu0 0
    %1109 = vmatpush2.bf16.msra.mxu0 %v1056
    %1110 = vmatprep.subr.bf16.mxu0 0
    %1111 = vmatpush2.bf16.msra.mxu0 %v1055
    %1112 = vmatprep.subr.bf16.mxu0 0
    %1113 = vmatpush2.bf16.msra.mxu0 %v1054
    %1114 = vmatprep.subr.bf16.mxu0 0
    %1115 = vmatpush2.bf16.msra.mxu0 %v1053
    %1116 = vmatprep.subr.bf16.mxu0 0
    %1117 = vmatpush2.bf16.msra.mxu0 %v1052
    %1118 = vmatprep.subr.bf16.mxu0 0
    %1119 = vmatpush2.bf16.msra.mxu0 %v1051
    %1120 = vmatprep.subr.bf16.mxu0 0
    %1121 = vmatpush2.bf16.msra.mxu0 %v1050
    %1122 = vmatprep.mubr.bf16.mxu0 %v890
    %1123 = vmatmul.mubr.bf16.gmra.mxu0 %v889
    %v1124 = vpop.f32.mrf.mxu0
    %v1125 = vadd.f32 %v945, %v1124
    %v1126 = vpop.f32.mrf.mxu0
    %v1127 = vpop.f32.mrf.mxu0
    %v1128 = vadd.f32 %v945, %v1127
    %v1129 = vpop.f32.mrf.mxu0
    %1130 = vdwg.mxu0
    %1131 = vmatprep.subr.bf16.mxu0 0
    %1132 = vmatpush1.bf16.msra.mxu0 %v1065
    %1133 = vmatprep.subr.bf16.mxu0 0
    %1134 = vmatpush1.bf16.msra.mxu0 %v1064
    %1135 = vmatprep.subr.bf16.mxu0 0
    %1136 = vmatpush1.bf16.msra.mxu0 %v1063
    %1137 = vmatprep.subr.bf16.mxu0 0
    %1138 = vmatpush1.bf16.msra.mxu0 %v1062
    %1139 = vmatprep.subr.bf16.mxu0 0
    %1140 = vmatpush1.bf16.msra.mxu0 %v1061
    %1141 = vmatprep.subr.bf16.mxu0 0
    %1142 = vmatpush1.bf16.msra.mxu0 %v1060
    %1143 = vmatprep.subr.bf16.mxu0 0
    %1144 = vmatpush1.bf16.msra.mxu0 %v1059
    %1145 = vmatprep.subr.bf16.mxu0 0
    %1146 = vmatpush1.bf16.msra.mxu0 %v1058
    %1147 = vmatprep.subr.bf16.mxu0 0
    %1148 = vmatpush2.bf16.msra.mxu0 0
    %1149 = vmatprep.subr.bf16.mxu0 0
    %1150 = vmatpush2.bf16.msra.mxu0 0
    %1151 = vmatprep.subr.bf16.mxu0 0
    %1152 = vmatpush2.bf16.msra.mxu0 0
    %1153 = vmatprep.subr.bf16.mxu0 0
    %1154 = vmatpush2.bf16.msra.mxu0 0
    %1155 = vmatprep.subr.bf16.mxu0 0
    %1156 = vmatpush2.bf16.msra.mxu0 0
    %1157 = vmatprep.subr.bf16.mxu0 0
    %1158 = vmatpush2.bf16.msra.mxu0 0
    %1159 = vmatprep.subr.bf16.mxu0 0
    %1160 = vmatpush2.bf16.msra.mxu0 0
    %1161 = vmatprep.subr.bf16.mxu0 0
    %1162 = vmatpush2.bf16.msra.mxu0 0
    %1163 = vmatprep.mubr.bf16.mxu0 0
    %1164 = vmatmul.mubr.bf16.gmra.mxu0 %v891
    %v1165 = vpop.f32.mrf.mxu0
    %v1166 = vadd.f32 %v1125, %v1165
    %v1167 = vpop.f32.mrf.mxu0
    %v1168 = vpop.f32.mrf.mxu0
    %v1169 = vadd.f32 %v1128, %v1168
    %v1170 = vpop.f32.mrf.mxu0
    %1171 = vdwg.mxu0
    %vm1172 = vcmp.gt.f32.partialorder %v1166, 0.0
    %vm1173 = vcmp.gt.f32.partialorder %v1169, 0.0
    %v1174 = vld [vmem:[#allocation13 + $0x1] sm:$0x1]
    %v1175 = vlaneseq
    %v1176 = vshrl.u32 %v1175, 7
    %v1177 = vsub.s32 0, %v1176
    %v1178 = vrot.slane %v1174, %v1177
    %v1179 = vmul.f32 %v1178, %v1166
    %v1180 = vmul.f32 %v1178, %v1169
    %v1181 = vsel %vm1172, %v1166, %v1179
    %v1182 = vsel %vm1173, %v1169, %v1180
    %v1183 = vrot.slane %v1181, 7
    %v1184 = vrot.slane %v1182, 7
    %v1185 = vsel %vm564, %v1183, %v1184
    %v1186 = vsel %vm564, %v1184, %v1183
    %v1187 = vsel %vm569, 0.0, %v1186
    %v1188 = vsel %vm570, 0.0, %v1185
    %v1189 = vrot.slane %v1181, 1
    %v1190 = vrot.slane %v1182, 1
    %v1191 = vsel %vm575, %v1189, %v1190
    %v1192 = vsel %vm575, %v1190, %v1189
    %v1193 = vsel %vm580, 0.0, %v1191
    %v1194 = vsel %vm581, 0.0, %v1192
    %v1195 = vpack.c.bf16 %v1188, %v1187
    %v1196 = vpack.c.bf16 %v1182, %v1181
    %v1197 = vpack.c.bf16 %v1194, %v1193
    %s1198 = scalar_lea.vmem [#allocation10], 384
    %v1199 = vld [vmem:[%s1198] sm:$0xf]
    %v1200 = vld [vmem:[%s1198 + $0x4] sm:$0xf]
    %v1201 = vld [vmem:[%s1198 + $0x8] sm:$0xf]
    %v1202 = vld [vmem:[%s1198 + $0xc] sm:$0xf]
    %v1203 = vld [vmem:[%s1198 + $0x10] sm:$0xf]
    %v1204 = vld [vmem:[%s1198 + $0x14] sm:$0xf]
    %v1205 = vld [vmem:[%s1198 + $0x18] sm:$0xf]
    %v1206 = vld [vmem:[%s1198 + $0x1c] sm:$0xf]
    %v1207 = vld [vmem:[%s1198 + $0x20] sm:$0xf]
    %v1208 = vld [vmem:[%s1198 + $0x24] sm:$0xf]
    %v1209 = vld [vmem:[%s1198 + $0x28] sm:$0xf]
    %v1210 = vld [vmem:[%s1198 + $0x2c] sm:$0xf]
    %v1211 = vld [vmem:[%s1198 + $0x30] sm:$0xf]
    %v1212 = vld [vmem:[%s1198 + $0x34] sm:$0xf]
    %v1213 = vld [vmem:[%s1198 + $0x38] sm:$0xf]
    %v1214 = vld [vmem:[%s1198 + $0x3c] sm:$0xf]
    %v1215 = vld [vmem:[%s1198 + $0x40] sm:$0xf]
    %v1216 = vld [vmem:[%s1198 + $0x44] sm:$0xf]
    %v1217 = vld [vmem:[%s1198 + $0x48] sm:$0xf]
    %v1218 = vld [vmem:[%s1198 + $0x4c] sm:$0xf]
    %v1219 = vld [vmem:[%s1198 + $0x50] sm:$0xf]
    %v1220 = vld [vmem:[%s1198 + $0x54] sm:$0xf]
    %v1221 = vld [vmem:[%s1198 + $0x58] sm:$0xf]
    %v1222 = vld [vmem:[%s1198 + $0x5c] sm:$0xf]
    %v1223 = vld [vmem:[%s1198 + $0x60] sm:$0xf]
    %v1224 = vld [vmem:[%s1198 + $0x64] sm:$0xf]
    %v1225 = vld [vmem:[%s1198 + $0x68] sm:$0xf]
    %v1226 = vld [vmem:[%s1198 + $0x6c] sm:$0xf]
    %v1227 = vld [vmem:[%s1198 + $0x70] sm:$0xf]
    %v1228 = vld [vmem:[%s1198 + $0x74] sm:$0xf]
    %v1229 = vld [vmem:[%s1198 + $0x78] sm:$0xf]
    %v1230 = vld [vmem:[%s1198 + $0x7c] sm:$0xf]
    %v1231 = vld [vmem:[%s1198 + $0x80] sm:$0xf]
    %v1232 = vld [vmem:[%s1198 + $0x84] sm:$0xf]
    %v1233 = vld [vmem:[%s1198 + $0x88] sm:$0xf]
    %v1234 = vld [vmem:[%s1198 + $0x8c] sm:$0xf]
    %v1235 = vld [vmem:[%s1198 + $0x90] sm:$0xf]
    %v1236 = vld [vmem:[%s1198 + $0x94] sm:$0xf]
    %v1237 = vld [vmem:[%s1198 + $0x98] sm:$0xf]
    %v1238 = vld [vmem:[%s1198 + $0x9c] sm:$0xf]
    %v1239 = vld [vmem:[%s1198 + $0xa0] sm:$0xf]
    %v1240 = vld [vmem:[%s1198 + $0xa4] sm:$0xf]
    %v1241 = vld [vmem:[%s1198 + $0xa8] sm:$0xf]
    %v1242 = vld [vmem:[%s1198 + $0xac] sm:$0xf]
    %v1243 = vld [vmem:[%s1198 + $0xb0] sm:$0xf]
    %v1244 = vld [vmem:[%s1198 + $0xb4] sm:$0xf]
    %v1245 = vld [vmem:[%s1198 + $0xb8] sm:$0xf]
    %v1246 = vld [vmem:[%s1198 + $0xbc] sm:$0xf]
    %v1247 = vld [vmem:[#allocation11 + $0x2] sm:$0x1]
    %v1248 = vlaneseq
    %v1249 = vshrl.u32 %v1248, 7
    %v1250 = vsub.s32 0, %v1249
    %v1251 = vrot.slane %v1247, %v1250
    %v1300 = vunpack.c.l.b16 %v1199
    %v1301 = vunpack.c.l.b16 %v1200
    %v1302 = vunpack.c.l.b16 %v1201
    %v1303 = vunpack.c.l.b16 %v1202
    %v1304 = vunpack.c.l.b16 %v1203
    %v1305 = vunpack.c.l.b16 %v1204
    %v1306 = vunpack.c.l.b16 %v1205
    %v1307 = vunpack.c.l.b16 %v1206
    %v1308 = vunpack.c.l.b16 %v1207
    %v1309 = vunpack.c.l.b16 %v1208
    %v1310 = vunpack.c.l.b16 %v1209
    %v1311 = vunpack.c.l.b16 %v1210
    %v1312 = vunpack.c.l.b16 %v1211
    %v1313 = vunpack.c.l.b16 %v1212
    %v1314 = vunpack.c.l.b16 %v1213
    %v1315 = vunpack.c.l.b16 %v1214
    %v1316 = vunpack.c.l.b16 %v1215
    %v1317 = vunpack.c.l.b16 %v1216
    %v1318 = vunpack.c.l.b16 %v1217
    %v1319 = vunpack.c.l.b16 %v1218
    %v1320 = vunpack.c.l.b16 %v1219
    %v1321 = vunpack.c.l.b16 %v1220
    %v1322 = vunpack.c.l.b16 %v1221
    %v1323 = vunpack.c.l.b16 %v1222
    %v1324 = vunpack.c.l.b16 %v1223
    %v1325 = vunpack.c.l.b16 %v1224
    %v1326 = vunpack.c.l.b16 %v1225
    %v1327 = vunpack.c.l.b16 %v1226
    %v1328 = vunpack.c.l.b16 %v1227
    %v1329 = vunpack.c.l.b16 %v1228
    %v1330 = vunpack.c.l.b16 %v1229
    %v1331 = vunpack.c.l.b16 %v1230
    %v1332 = vunpack.c.l.b16 %v1231
    %v1333 = vunpack.c.l.b16 %v1232
    %v1334 = vunpack.c.l.b16 %v1233
    %v1335 = vunpack.c.l.b16 %v1234
    %v1336 = vunpack.c.l.b16 %v1235
    %v1337 = vunpack.c.l.b16 %v1236
    %v1338 = vunpack.c.l.b16 %v1237
    %v1339 = vunpack.c.l.b16 %v1238
    %v1340 = vunpack.c.l.b16 %v1239
    %v1341 = vunpack.c.l.b16 %v1240
    %v1342 = vunpack.c.l.b16 %v1241
    %v1343 = vunpack.c.l.b16 %v1242
    %v1344 = vunpack.c.l.b16 %v1243
    %v1345 = vunpack.c.l.b16 %v1244
    %v1346 = vunpack.c.l.b16 %v1245
    %v1347 = vunpack.c.l.b16 %v1246
    %v1348 = vpack.c.b16 %v1301, %v1300
    %v1349 = vpack.c.b16 %v1303, %v1302
    %v1350 = vpack.c.b16 %v1305, %v1304
    %v1351 = vpack.c.b16 %v1307, %v1306
    %v1352 = vpack.c.b16 %v1309, %v1308
    %v1353 = vpack.c.b16 %v1311, %v1310
    %v1354 = vpack.c.b16 %v1313, %v1312
    %v1355 = vpack.c.b16 %v1315, %v1314
    %v1356 = vpack.c.b16 %v1317, %v1316
    %v1357 = vpack.c.b16 %v1319, %v1318
    %v1358 = vpack.c.b16 %v1321, %v1320
    %v1359 = vpack.c.b16 %v1323, %v1322
    %v1360 = vpack.c.b16 %v1325, %v1324
    %v1361 = vpack.c.b16 %v1327, %v1326
    %v1362 = vpack.c.b16 %v1329, %v1328
    %v1363 = vpack.c.b16 %v1331, %v1330
    %v1364 = vpack.c.b16 %v1333, %v1332
    %v1365 = vpack.c.b16 %v1335, %v1334
    %v1366 = vpack.c.b16 %v1337, %v1336
    %v1367 = vpack.c.b16 %v1339, %v1338
    %v1368 = vpack.c.b16 %v1341, %v1340
    %v1369 = vpack.c.b16 %v1343, %v1342
    %v1370 = vpack.c.b16 %v1345, %v1344
    %v1371 = vpack.c.b16 %v1347, %v1346
    %1396 = vmatprep.subr.bf16.mxu0 0
    %1397 = vmatpush1.bf16.msra.mxu0 %v1355
    %1398 = vmatprep.subr.bf16.mxu0 0
    %1399 = vmatpush1.bf16.msra.mxu0 %v1354
    %1400 = vmatprep.subr.bf16.mxu0 0
    %1401 = vmatpush1.bf16.msra.mxu0 %v1353
    %1402 = vmatprep.subr.bf16.mxu0 0
    %1403 = vmatpush1.bf16.msra.mxu0 %v1352
    %1404 = vmatprep.subr.bf16.mxu0 0
    %1405 = vmatpush1.bf16.msra.mxu0 %v1351
    %1406 = vmatprep.subr.bf16.mxu0 0
    %1407 = vmatpush1.bf16.msra.mxu0 %v1350
    %1408 = vmatprep.subr.bf16.mxu0 0
    %1409 = vmatpush1.bf16.msra.mxu0 %v1349
    %1410 = vmatprep.subr.bf16.mxu0 0
    %1411 = vmatpush1.bf16.msra.mxu0 %v1348
    %1412 = vmatprep.subr.bf16.mxu0 0
    %1413 = vmatpush2.bf16.msra.mxu0 %v1363
    %1414 = vmatprep.subr.bf16.mxu0 0
    %1415 = vmatpush2.bf16.msra.mxu0 %v1362
    %1416 = vmatprep.subr.bf16.mxu0 0
    %1417 = vmatpush2.bf16.msra.mxu0 %v1361
    %1418 = vmatprep.subr.bf16.mxu0 0
    %1419 = vmatpush2.bf16.msra.mxu0 %v1360
    %1420 = vmatprep.subr.bf16.mxu0 0
    %1421 = vmatpush2.bf16.msra.mxu0 %v1359
    %1422 = vmatprep.subr.bf16.mxu0 0
    %1423 = vmatpush2.bf16.msra.mxu0 %v1358
    %1424 = vmatprep.subr.bf16.mxu0 0
    %1425 = vmatpush2.bf16.msra.mxu0 %v1357
    %1426 = vmatprep.subr.bf16.mxu0 0
    %1427 = vmatpush2.bf16.msra.mxu0 %v1356
    %1428 = vmatprep.mubr.bf16.mxu0 %v1196
    %1429 = vmatmul.mubr.bf16.gmra.mxu0 %v1195
    %v1430 = vpop.f32.mrf.mxu0
    %v1431 = vadd.f32 %v1251, %v1430
    %v1432 = vpop.f32.mrf.mxu0
    %v1433 = vpop.f32.mrf.mxu0
    %v1434 = vadd.f32 %v1251, %v1433
    %v1435 = vpop.f32.mrf.mxu0
    %1436 = vdwg.mxu0
    %1437 = vmatprep.subr.bf16.mxu0 0
    %1438 = vmatpush1.bf16.msra.mxu0 %v1371
    %1439 = vmatprep.subr.bf16.mxu0 0
    %1440 = vmatpush1.bf16.msra.mxu0 %v1370
    %1441 = vmatprep.subr.bf16.mxu0 0
    %1442 = vmatpush1.bf16.msra.mxu0 %v1369
    %1443 = vmatprep.subr.bf16.mxu0 0
    %1444 = vmatpush1.bf16.msra.mxu0 %v1368
    %1445 = vmatprep.subr.bf16.mxu0 0
    %1446 = vmatpush1.bf16.msra.mxu0 %v1367
    %1447 = vmatprep.subr.bf16.mxu0 0
    %1448 = vmatpush1.bf16.msra.mxu0 %v1366
    %1449 = vmatprep.subr.bf16.mxu0 0
    %1450 = vmatpush1.bf16.msra.mxu0 %v1365
    %1451 = vmatprep.subr.bf16.mxu0 0
    %1452 = vmatpush1.bf16.msra.mxu0 %v1364
    %1453 = vmatprep.subr.bf16.mxu0 0
    %1454 = vmatpush2.bf16.msra.mxu0 0
    %1455 = vmatprep.subr.bf16.mxu0 0
    %1456 = vmatpush2.bf16.msra.mxu0 0
    %1457 = vmatprep.subr.bf16.mxu0 0
    %1458 = vmatpush2.bf16.msra.mxu0 0
    %1459 = vmatprep.subr.bf16.mxu0 0
    %1460 = vmatpush2.bf16.msra.mxu0 0
    %1461 = vmatprep.subr.bf16.mxu0 0
    %1462 = vmatpush2.bf16.msra.mxu0 0
    %1463 = vmatprep.subr.bf16.mxu0 0
    %1464 = vmatpush2.bf16.msra.mxu0 0
    %1465 = vmatprep.subr.bf16.mxu0 0
    %1466 = vmatpush2.bf16.msra.mxu0 0
    %1467 = vmatprep.subr.bf16.mxu0 0
    %1468 = vmatpush2.bf16.msra.mxu0 0
    %1469 = vmatprep.mubr.bf16.mxu0 0
    %1470 = vmatmul.mubr.bf16.gmra.mxu0 %v1197
    %v1471 = vpop.f32.mrf.mxu0
    %v1472 = vadd.f32 %v1431, %v1471
    %v1473 = vpop.f32.mrf.mxu0
    %v1474 = vpop.f32.mrf.mxu0
    %v1475 = vadd.f32 %v1434, %v1474
    %v1476 = vpop.f32.mrf.mxu0
    %1477 = vdwg.mxu0
    %vm1478 = vcmp.gt.f32.partialorder %v1472, 0.0
    %vm1479 = vcmp.gt.f32.partialorder %v1475, 0.0
    %v1480 = vld [vmem:[#allocation13 + $0x2] sm:$0x1]
    %v1481 = vlaneseq
    %v1482 = vshrl.u32 %v1481, 7
    %v1483 = vsub.s32 0, %v1482
    %v1484 = vrot.slane %v1480, %v1483
    %v1485 = vmul.f32 %v1484, %v1472
    %v1486 = vmul.f32 %v1484, %v1475
    %v1487 = vsel %vm1478, %v1472, %v1485
    %v1488 = vsel %vm1479, %v1475, %v1486
    %v1489 = vrot.slane %v1487, 7
    %v1490 = vrot.slane %v1488, 7
    %v1491 = vsel %vm564, %v1489, %v1490
    %v1492 = vsel %vm564, %v1490, %v1489
    %v1493 = vsel %vm569, 0.0, %v1492
    %v1494 = vsel %vm570, 0.0, %v1491
    %v1495 = vrot.slane %v1487, 1
    %v1496 = vrot.slane %v1488, 1
    %v1497 = vsel %vm575, %v1495, %v1496
    %v1498 = vsel %vm575, %v1496, %v1495
    %v1499 = vsel %vm580, 0.0, %v1497
    %v1500 = vsel %vm581, 0.0, %v1498
    %v1501 = vpack.c.bf16 %v1494, %v1493
    %v1502 = vpack.c.bf16 %v1488, %v1487
    %v1503 = vpack.c.bf16 %v1500, %v1499
    %s1504 = scalar_lea.vmem [#allocation10], 576
    %v1505 = vld [vmem:[%s1504] sm:$0xf]
    %v1506 = vld [vmem:[%s1504 + $0x4] sm:$0xf]
    %v1507 = vld [vmem:[%s1504 + $0x8] sm:$0xf]
    %v1508 = vld [vmem:[%s1504 + $0xc] sm:$0xf]
    %v1509 = vld [vmem:[%s1504 + $0x10] sm:$0xf]
    %v1510 = vld [vmem:[%s1504 + $0x14] sm:$0xf]
    %v1511 = vld [vmem:[%s1504 + $0x18] sm:$0xf]
    %v1512 = vld [vmem:[%s1504 + $0x1c] sm:$0xf]
    %v1513 = vld [vmem:[%s1504 + $0x20] sm:$0xf]
    %v1514 = vld [vmem:[%s1504 + $0x24] sm:$0xf]
    %v1515 = vld [vmem:[%s1504 + $0x28] sm:$0xf]
    %v1516 = vld [vmem:[%s1504 + $0x2c] sm:$0xf]
    %v1517 = vld [vmem:[%s1504 + $0x30] sm:$0xf]
    %v1518 = vld [vmem:[%s1504 + $0x34] sm:$0xf]
    %v1519 = vld [vmem:[%s1504 + $0x38] sm:$0xf]
    %v1520 = vld [vmem:[%s1504 + $0x3c] sm:$0xf]
    %v1521 = vld [vmem:[%s1504 + $0x40] sm:$0xf]
    %v1522 = vld [vmem:[%s1504 + $0x44] sm:$0xf]
    %v1523 = vld [vmem:[%s1504 + $0x48] sm:$0xf]
    %v1524 = vld [vmem:[%s1504 + $0x4c] sm:$0xf]
    %v1525 = vld [vmem:[%s1504 + $0x50] sm:$0xf]
    %v1526 = vld [vmem:[%s1504 + $0x54] sm:$0xf]
    %v1527 = vld [vmem:[%s1504 + $0x58] sm:$0xf]
    %v1528 = vld [vmem:[%s1504 + $0x5c] sm:$0xf]
    %v1529 = vld [vmem:[%s1504 + $0x60] sm:$0xf]
    %v1530 = vld [vmem:[%s1504 + $0x64] sm:$0xf]
    %v1531 = vld [vmem:[%s1504 + $0x68] sm:$0xf]
    %v1532 = vld [vmem:[%s1504 + $0x6c] sm:$0xf]
    %v1533 = vld [vmem:[%s1504 + $0x70] sm:$0xf]
    %v1534 = vld [vmem:[%s1504 + $0x74] sm:$0xf]
    %v1535 = vld [vmem:[%s1504 + $0x78] sm:$0xf]
    %v1536 = vld [vmem:[%s1504 + $0x7c] sm:$0xf]
    %v1537 = vld [vmem:[%s1504 + $0x80] sm:$0xf]
    %v1538 = vld [vmem:[%s1504 + $0x84] sm:$0xf]
    %v1539 = vld [vmem:[%s1504 + $0x88] sm:$0xf]
    %v1540 = vld [vmem:[%s1504 + $0x8c] sm:$0xf]
    %v1541 = vld [vmem:[%s1504 + $0x90] sm:$0xf]
    %v1542 = vld [vmem:[%s1504 + $0x94] sm:$0xf]
    %v1543 = vld [vmem:[%s1504 + $0x98] sm:$0xf]
    %v1544 = vld [vmem:[%s1504 + $0x9c] sm:$0xf]
    %v1545 = vld [vmem:[%s1504 + $0xa0] sm:$0xf]
    %v1546 = vld [vmem:[%s1504 + $0xa4] sm:$0xf]
    %v1547 = vld [vmem:[%s1504 + $0xa8] sm:$0xf]
    %v1548 = vld [vmem:[%s1504 + $0xac] sm:$0xf]
    %v1549 = vld [vmem:[%s1504 + $0xb0] sm:$0xf]
    %v1550 = vld [vmem:[%s1504 + $0xb4] sm:$0xf]
    %v1551 = vld [vmem:[%s1504 + $0xb8] sm:$0xf]
    %v1552 = vld [vmem:[%s1504 + $0xbc] sm:$0xf]
    %v1553 = vld [vmem:[#allocation11 + $0x3] sm:$0x1]
    %v1554 = vlaneseq
    %v1555 = vshrl.u32 %v1554, 7
    %v1556 = vsub.s32 0, %v1555
    %v1557 = vrot.slane %v1553, %v1556
    %v1606 = vunpack.c.l.b16 %v1505
    %v1607 = vunpack.c.l.b16 %v1506
    %v1608 = vunpack.c.l.b16 %v1507
    %v1609 = vunpack.c.l.b16 %v1508
    %v1610 = vunpack.c.l.b16 %v1509
    %v1611 = vunpack.c.l.b16 %v1510
    %v1612 = vunpack.c.l.b16 %v1511
    %v1613 = vunpack.c.l.b16 %v1512
    %v1614 = vunpack.c.l.b16 %v1513
    %v1615 = vunpack.c.l.b16 %v1514
    %v1616 = vunpack.c.l.b16 %v1515
    %v1617 = vunpack.c.l.b16 %v1516
    %v1618 = vunpack.c.l.b16 %v1517
    %v1619 = vunpack.c.l.b16 %v1518
    %v1620 = vunpack.c.l.b16 %v1519
    %v1621 = vunpack.c.l.b16 %v1520
    %v1622 = vunpack.c.l.b16 %v1521
    %v1623 = vunpack.c.l.b16 %v1522
    %v1624 = vunpack.c.l.b16 %v1523
    %v1625 = vunpack.c.l.b16 %v1524
    %v1626 = vunpack.c.l.b16 %v1525
    %v1627 = vunpack.c.l.b16 %v1526
    %v1628 = vunpack.c.l.b16 %v1527
    %v1629 = vunpack.c.l.b16 %v1528
    %v1630 = vunpack.c.l.b16 %v1529
    %v1631 = vunpack.c.l.b16 %v1530
    %v1632 = vunpack.c.l.b16 %v1531
    %v1633 = vunpack.c.l.b16 %v1532
    %v1634 = vunpack.c.l.b16 %v1533
    %v1635 = vunpack.c.l.b16 %v1534
    %v1636 = vunpack.c.l.b16 %v1535
    %v1637 = vunpack.c.l.b16 %v1536
    %v1638 = vunpack.c.l.b16 %v1537
    %v1639 = vunpack.c.l.b16 %v1538
    %v1640 = vunpack.c.l.b16 %v1539
    %v1641 = vunpack.c.l.b16 %v1540
    %v1642 = vunpack.c.l.b16 %v1541
    %v1643 = vunpack.c.l.b16 %v1542
    %v1644 = vunpack.c.l.b16 %v1543
    %v1645 = vunpack.c.l.b16 %v1544
    %v1646 = vunpack.c.l.b16 %v1545
    %v1647 = vunpack.c.l.b16 %v1546
    %v1648 = vunpack.c.l.b16 %v1547
    %v1649 = vunpack.c.l.b16 %v1548
    %v1650 = vunpack.c.l.b16 %v1549
    %v1651 = vunpack.c.l.b16 %v1550
    %v1652 = vunpack.c.l.b16 %v1551
    %v1653 = vunpack.c.l.b16 %v1552
    %v1654 = vpack.c.b16 %v1607, %v1606
    %v1655 = vpack.c.b16 %v1609, %v1608
    %v1656 = vpack.c.b16 %v1611, %v1610
    %v1657 = vpack.c.b16 %v1613, %v1612
    %v1658 = vpack.c.b16 %v1615, %v1614
    %v1659 = vpack.c.b16 %v1617, %v1616
    %v1660 = vpack.c.b16 %v1619, %v1618
    %v1661 = vpack.c.b16 %v1621, %v1620
    %v1662 = vpack.c.b16 %v1623, %v1622
    %v1663 = vpack.c.b16 %v1625, %v1624
    %v1664 = vpack.c.b16 %v1627, %v1626
    %v1665 = vpack.c.b16 %v1629, %v1628
    %v1666 = vpack.c.b16 %v1631, %v1630
    %v1667 = vpack.c.b16 %v1633, %v1632
    %v1668 = vpack.c.b16 %v1635, %v1634
    %v1669 = vpack.c.b16 %v1637, %v1636
    %v1670 = vpack.c.b16 %v1639, %v1638
    %v1671 = vpack.c.b16 %v1641, %v1640
    %v1672 = vpack.c.b16 %v1643, %v1642
    %v1673 = vpack.c.b16 %v1645, %v1644
    %v1674 = vpack.c.b16 %v1647, %v1646
    %v1675 = vpack.c.b16 %v1649, %v1648
    %v1676 = vpack.c.b16 %v1651, %v1650
    %v1677 = vpack.c.b16 %v1653, %v1652
    %1702 = vmatprep.subr.bf16.mxu0 0
    %1703 = vmatpush1.bf16.msra.mxu0 %v1661
    %1704 = vmatprep.subr.bf16.mxu0 0
    %1705 = vmatpush1.bf16.msra.mxu0 %v1660
    %1706 = vmatprep.subr.bf16.mxu0 0
    %1707 = vmatpush1.bf16.msra.mxu0 %v1659
    %1708 = vmatprep.subr.bf16.mxu0 0
    %1709 = vmatpush1.bf16.msra.mxu0 %v1658
    %1710 = vmatprep.subr.bf16.mxu0 0
    %1711 = vmatpush1.bf16.msra.mxu0 %v1657
    %1712 = vmatprep.subr.bf16.mxu0 0
    %1713 = vmatpush1.bf16.msra.mxu0 %v1656
    %1714 = vmatprep.subr.bf16.mxu0 0
    %1715 = vmatpush1.bf16.msra.mxu0 %v1655
    %1716 = vmatprep.subr.bf16.mxu0 0
    %1717 = vmatpush1.bf16.msra.mxu0 %v1654
    %1718 = vmatprep.subr.bf16.mxu0 0
    %1719 = vmatpush2.bf16.msra.mxu0 %v1669
    %1720 = vmatprep.subr.bf16.mxu0 0
    %1721 = vmatpush2.bf16.msra.mxu0 %v1668
    %1722 = vmatprep.subr.bf16.mxu0 0
    %1723 = vmatpush2.bf16.msra.mxu0 %v1667
    %1724 = vmatprep.subr.bf16.mxu0 0
    %1725 = vmatpush2.bf16.msra.mxu0 %v1666
    %1726 = vmatprep.subr.bf16.mxu0 0
    %1727 = vmatpush2.bf16.msra.mxu0 %v1665
    %1728 = vmatprep.subr.bf16.mxu0 0
    %1729 = vmatpush2.bf16.msra.mxu0 %v1664
    %1730 = vmatprep.subr.bf16.mxu0 0
    %1731 = vmatpush2.bf16.msra.mxu0 %v1663
    %1732 = vmatprep.subr.bf16.mxu0 0
    %1733 = vmatpush2.bf16.msra.mxu0 %v1662
    %1734 = vmatprep.mubr.bf16.mxu0 %v1502
    %1735 = vmatmul.mubr.bf16.gmra.mxu0 %v1501
    %v1736 = vpop.f32.mrf.mxu0
    %v1737 = vadd.f32 %v1557, %v1736
    %v1738 = vpop.f32.mrf.mxu0
    %v1739 = vpop.f32.mrf.mxu0
    %v1740 = vadd.f32 %v1557, %v1739
    %v1741 = vpop.f32.mrf.mxu0
    %1742 = vdwg.mxu0
    %1743 = vmatprep.subr.bf16.mxu0 0
    %1744 = vmatpush1.bf16.msra.mxu0 %v1677
    %1745 = vmatprep.subr.bf16.mxu0 0
    %1746 = vmatpush1.bf16.msra.mxu0 %v1676
    %1747 = vmatprep.subr.bf16.mxu0 0
    %1748 = vmatpush1.bf16.msra.mxu0 %v1675
    %1749 = vmatprep.subr.bf16.mxu0 0
    %1750 = vmatpush1.bf16.msra.mxu0 %v1674
    %1751 = vmatprep.subr.bf16.mxu0 0
    %1752 = vmatpush1.bf16.msra.mxu0 %v1673
    %1753 = vmatprep.subr.bf16.mxu0 0
    %1754 = vmatpush1.bf16.msra.mxu0 %v1672
    %1755 = vmatprep.subr.bf16.mxu0 0
    %1756 = vmatpush1.bf16.msra.mxu0 %v1671
    %1757 = vmatprep.subr.bf16.mxu0 0
    %1758 = vmatpush1.bf16.msra.mxu0 %v1670
    %1759 = vmatprep.subr.bf16.mxu0 0
    %1760 = vmatpush2.bf16.msra.mxu0 0
    %1761 = vmatprep.subr.bf16.mxu0 0
    %1762 = vmatpush2.bf16.msra.mxu0 0
    %1763 = vmatprep.subr.bf16.mxu0 0
    %1764 = vmatpush2.bf16.msra.mxu0 0
    %1765 = vmatprep.subr.bf16.mxu0 0
    %1766 = vmatpush2.bf16.msra.mxu0 0
    %1767 = vmatprep.subr.bf16.mxu0 0
    %1768 = vmatpush2.bf16.msra.mxu0 0
    %1769 = vmatprep.subr.bf16.mxu0 0
    %1770 = vmatpush2.bf16.msra.mxu0 0
    %1771 = vmatprep.subr.bf16.mxu0 0
    %1772 = vmatpush2.bf16.msra.mxu0 0
    %1773 = vmatprep.subr.bf16.mxu0 0
    %1774 = vmatpush2.bf16.msra.mxu0 0
    %1775 = vmatprep.mubr.bf16.mxu0 0
    %1776 = vmatmul.mubr.bf16.gmra.mxu0 %v1503
    %v1777 = vpop.f32.mrf.mxu0
    %v1778 = vadd.f32 %v1737, %v1777
    %v1779 = vpop.f32.mrf.mxu0
    %v1780 = vpop.f32.mrf.mxu0
    %v1781 = vadd.f32 %v1740, %v1780
    %v1782 = vpop.f32.mrf.mxu0
    %1783 = vdwg.mxu0
    %vm1784 = vcmp.gt.f32.partialorder %v1778, 0.0
    %vm1785 = vcmp.gt.f32.partialorder %v1781, 0.0
    %v1786 = vld [vmem:[#allocation13 + $0x3] sm:$0x1]
    %v1787 = vlaneseq
    %v1788 = vshrl.u32 %v1787, 7
    %v1789 = vsub.s32 0, %v1788
    %v1790 = vrot.slane %v1786, %v1789
    %v1791 = vmul.f32 %v1790, %v1778
    %v1792 = vmul.f32 %v1790, %v1781
    %v1793 = vsel %vm1784, %v1778, %v1791
    %v1794 = vsel %vm1785, %v1781, %v1792
    %v1795 = vpack.c.bf16 %v1794, %v1793
    %v1796 = vld [vmem:[#allocation14] sm:$0xff]
    %v1797 = vld [vmem:[#allocation14 + $0x8] sm:$0xff]
    %v1798 = vld [vmem:[#allocation14 + $0x10] sm:$0xff]
    %v1799 = vld [vmem:[#allocation14 + $0x18] sm:$0xff]
    %v1800 = vld [vmem:[#allocation14 + $0x20] sm:$0xff]
    %v1801 = vld [vmem:[#allocation14 + $0x28] sm:$0xff]
    %v1802 = vld [vmem:[#allocation14 + $0x30] sm:$0xff]
    %v1803 = vld [vmem:[#allocation14 + $0x38] sm:$0xff]
    %v1804 = vld [vmem:[#allocation14 + $0x40] sm:$0xff]
    %v1805 = vld [vmem:[#allocation14 + $0x48] sm:$0xff]
    %v1806 = vld [vmem:[#allocation14 + $0x50] sm:$0xff]
    %v1807 = vld [vmem:[#allocation14 + $0x58] sm:$0xff]
    %v1808 = vld [vmem:[#allocation14 + $0x60] sm:$0xff]
    %v1809 = vld [vmem:[#allocation14 + $0x68] sm:$0xff]
    %v1810 = vld [vmem:[#allocation14 + $0x70] sm:$0xff]
    %v1811 = vld [vmem:[#allocation14 + $0x78] sm:$0xff]
    %v1812 = vld [vmem:[#allocation14 + $0x80] sm:$0xff]
    %v1813 = vld [vmem:[#allocation14 + $0x88] sm:$0xff]
    %v1814 = vld [vmem:[#allocation14 + $0x90] sm:$0xff]
    %v1815 = vld [vmem:[#allocation14 + $0x98] sm:$0xff]
    %v1816 = vld [vmem:[#allocation14 + $0xa0] sm:$0xff]
    %v1817 = vld [vmem:[#allocation14 + $0xa8] sm:$0xff]
    %v1818 = vld [vmem:[#allocation14 + $0xb0] sm:$0xff]
    %v1819 = vld [vmem:[#allocation14 + $0xb8] sm:$0xff]
    %v1820 = vld [vmem:[#allocation14 + $0xc0] sm:$0xff]
    %v1821 = vld [vmem:[#allocation14 + $0xc8] sm:$0xff]
    %v1822 = vld [vmem:[#allocation14 + $0xd0] sm:$0xff]
    %v1823 = vld [vmem:[#allocation14 + $0xd8] sm:$0xff]
    %v1824 = vld [vmem:[#allocation14 + $0xe0] sm:$0xff]
    %v1825 = vld [vmem:[#allocation14 + $0xe8] sm:$0xff]
    %v1826 = vld [vmem:[#allocation14 + $0xf0] sm:$0xff]
    %v1827 = vld [vmem:[#allocation14 + $0xf8] sm:$0xff]
    %v1828 = vld [vmem:[#allocation16] ss:$4 sm:$0xf]
    %v1830 = vlaneseq
    %v1831 = vshrl.u32 %v1830, 7
    %v1832 = vsub.s32 0, %v1831
    %v1833 = vrot.slane %v1828, %v1832
    %v1834 = vlaneseq
    %v1835 = vshrl.u32 %v1834, 7
    %v1836 = vsub.s32 1, %v1835
    %v1837 = vrot.slane %v1828, %v1836
    %v1838 = vlaneseq
    %v1839 = vshrl.u32 %v1838, 7
    %v1840 = vsub.s32 2, %v1839
    %v1841 = vrot.slane %v1828, %v1840
    %v1842 = vlaneseq
    %v1843 = vshrl.u32 %v1842, 7
    %v1844 = vsub.s32 3, %v1843
    %v1845 = vrot.slane %v1828, %v1844
    %v1882 = vunpack.c.l.b16 %v1796
    %v1883 = vunpack.c.h.b16 %v1796
    %v1884 = vunpack.c.l.b16 %v1797
    %v1885 = vunpack.c.h.b16 %v1797
    %v1886 = vunpack.c.l.b16 %v1798
    %v1887 = vunpack.c.h.b16 %v1798
    %v1888 = vunpack.c.l.b16 %v1799
    %v1889 = vunpack.c.h.b16 %v1799
    %v1890 = vunpack.c.l.b16 %v1800
    %v1891 = vunpack.c.h.b16 %v1800
    %v1892 = vunpack.c.l.b16 %v1801
    %v1893 = vunpack.c.h.b16 %v1801
    %v1894 = vunpack.c.l.b16 %v1802
    %v1895 = vunpack.c.h.b16 %v1802
    %v1896 = vunpack.c.l.b16 %v1803
    %v1897 = vunpack.c.h.b16 %v1803
    %v1898 = vunpack.c.l.b16 %v1804
    %v1899 = vunpack.c.h.b16 %v1804
    %v1900 = vunpack.c.l.b16 %v1805
    %v1901 = vunpack.c.h.b16 %v1805
    %v1902 = vunpack.c.l.b16 %v1806
    %v1903 = vunpack.c.h.b16 %v1806
    %v1904 = vunpack.c.l.b16 %v1807
    %v1905 = vunpack.c.h.b16 %v1807
    %v1906 = vunpack.c.l.b16 %v1808
    %v1907 = vunpack.c.h.b16 %v1808
    %v1908 = vunpack.c.l.b16 %v1809
    %v1909 = vunpack.c.h.b16 %v1809
    %v1910 = vunpack.c.l.b16 %v1810
    %v1911 = vunpack.c.h.b16 %v1810
    %v1912 = vunpack.c.l.b16 %v1811
    %v1913 = vunpack.c.h.b16 %v1811
    %v1914 = vunpack.c.l.b16 %v1812
    %v1915 = vunpack.c.h.b16 %v1812
    %v1916 = vunpack.c.l.b16 %v1813
    %v1917 = vunpack.c.h.b16 %v1813
    %v1918 = vunpack.c.l.b16 %v1814
    %v1919 = vunpack.c.h.b16 %v1814
    %v1920 = vunpack.c.l.b16 %v1815
    %v1921 = vunpack.c.h.b16 %v1815
    %v1922 = vunpack.c.l.b16 %v1816
    %v1923 = vunpack.c.h.b16 %v1816
    %v1924 = vunpack.c.l.b16 %v1817
    %v1925 = vunpack.c.h.b16 %v1817
    %v1926 = vunpack.c.l.b16 %v1818
    %v1927 = vunpack.c.h.b16 %v1818
    %v1928 = vunpack.c.l.b16 %v1819
    %v1929 = vunpack.c.h.b16 %v1819
    %v1930 = vunpack.c.l.b16 %v1820
    %v1931 = vunpack.c.h.b16 %v1820
    %v1932 = vunpack.c.l.b16 %v1821
    %v1933 = vunpack.c.h.b16 %v1821
    %v1934 = vunpack.c.l.b16 %v1822
    %v1935 = vunpack.c.h.b16 %v1822
    %v1936 = vunpack.c.l.b16 %v1823
    %v1937 = vunpack.c.h.b16 %v1823
    %v1938 = vunpack.c.l.b16 %v1824
    %v1939 = vunpack.c.h.b16 %v1824
    %v1940 = vunpack.c.l.b16 %v1825
    %v1941 = vunpack.c.h.b16 %v1825
    %v1942 = vunpack.c.l.b16 %v1826
    %v1943 = vunpack.c.h.b16 %v1826
    %v1944 = vunpack.c.l.b16 %v1827
    %v1945 = vunpack.c.h.b16 %v1827
    %v1946 = vpack.c.b16 %v1886, %v1882
    %v1947 = vpack.c.b16 %v1887, %v1883
    %v1948 = vpack.c.b16 %v1888, %v1884
    %v1949 = vpack.c.b16 %v1889, %v1885
    %v1950 = vpack.c.b16 %v1894, %v1890
    %v1951 = vpack.c.b16 %v1895, %v1891
    %v1952 = vpack.c.b16 %v1896, %v1892
    %v1953 = vpack.c.b16 %v1897, %v1893
    %v1954 = vpack.c.b16 %v1902, %v1898
    %v1955 = vpack.c.b16 %v1903, %v1899
    %v1956 = vpack.c.b16 %v1904, %v1900
    %v1957 = vpack.c.b16 %v1905, %v1901
    %v1958 = vpack.c.b16 %v1910, %v1906
    %v1959 = vpack.c.b16 %v1911, %v1907
    %v1960 = vpack.c.b16 %v1912, %v1908
    %v1961 = vpack.c.b16 %v1913, %v1909
    %v1962 = vpack.c.b16 %v1918, %v1914
    %v1963 = vpack.c.b16 %v1919, %v1915
    %v1964 = vpack.c.b16 %v1920, %v1916
    %v1965 = vpack.c.b16 %v1921, %v1917
    %v1966 = vpack.c.b16 %v1926, %v1922
    %v1967 = vpack.c.b16 %v1927, %v1923
    %v1968 = vpack.c.b16 %v1928, %v1924
    %v1969 = vpack.c.b16 %v1929, %v1925
    %v1970 = vpack.c.b16 %v1934, %v1930
    %v1971 = vpack.c.b16 %v1935, %v1931
    %v1972 = vpack.c.b16 %v1936, %v1932
    %v1973 = vpack.c.b16 %v1937, %v1933
    %v1974 = vpack.c.b16 %v1942, %v1938
    %v1975 = vpack.c.b16 %v1943, %v1939
    %v1976 = vpack.c.b16 %v1944, %v1940
    %v1977 = vpack.c.b16 %v1945, %v1941
    %2010 = vmatprep.subr.bf16.mxu0 %v1975
    %2011 = vmatpush1.bf16.msra.mxu0 %v1974
    %2012 = vmatprep.subr.bf16.mxu0 %v1971
    %2013 = vmatpush1.bf16.msra.mxu0 %v1970
    %2014 = vmatprep.subr.bf16.mxu0 %v1967
    %2015 = vmatpush1.bf16.msra.mxu0 %v1966
    %2016 = vmatprep.subr.bf16.mxu0 %v1963
    %2017 = vmatpush1.bf16.msra.mxu0 %v1962
    %2018 = vmatprep.subr.bf16.mxu0 %v1959
    %2019 = vmatpush1.bf16.msra.mxu0 %v1958
    %2020 = vmatprep.subr.bf16.mxu0 %v1955
    %2021 = vmatpush1.bf16.msra.mxu0 %v1954
    %2022 = vmatprep.subr.bf16.mxu0 %v1951
    %2023 = vmatpush1.bf16.msra.mxu0 %v1950
    %2024 = vmatprep.subr.bf16.mxu0 %v1947
    %2025 = vmatpush1.bf16.msra.mxu0 %v1946
    %2026 = vmatprep.subr.bf16.mxu0 0
    %2027 = vmatpush2.bf16.msra.mxu0 0
    %2028 = vmatprep.subr.bf16.mxu0 0
    %2029 = vmatpush2.bf16.msra.mxu0 0
    %2030 = vmatprep.subr.bf16.mxu0 0
    %2031 = vmatpush2.bf16.msra.mxu0 0
    %2032 = vmatprep.subr.bf16.mxu0 0
    %2033 = vmatpush2.bf16.msra.mxu0 0
    %2034 = vmatprep.subr.bf16.mxu0 0
    %2035 = vmatpush2.bf16.msra.mxu0 0
    %2036 = vmatprep.subr.bf16.mxu0 0
    %2037 = vmatpush2.bf16.msra.mxu0 0
    %2038 = vmatprep.subr.bf16.mxu0 0
    %2039 = vmatpush2.bf16.msra.mxu0 0
    %2040 = vmatprep.subr.bf16.mxu0 0
    %2041 = vmatpush2.bf16.msra.mxu0 0
    %2042 = vmatprep.mubr.bf16.mxu0 0
    %2043 = vmatmul.mubr.bf16.gmra.mxu0 %v1795
    %v2044 = vpop.f32.mrf.mxu0
    %v2045 = vadd.f32 %v1833, %v2044
    %v2046 = vpop.f32.mrf.mxu0
    %v2047 = vadd.f32 %v1837, %v2046
    %v2048 = vpop.f32.mrf.mxu0
    %v2049 = vadd.f32 %v1833, %v2048
    %v2050 = vpop.f32.mrf.mxu0
    %v2051 = vadd.f32 %v1837, %v2050
    %2052 = vdwg.mxu0
    %2053 = vmatprep.subr.bf16.mxu0 %v1977
    %2054 = vmatpush1.bf16.msra.mxu0 %v1976
    %2055 = vmatprep.subr.bf16.mxu0 %v1973
    %2056 = vmatpush1.bf16.msra.mxu0 %v1972
    %2057 = vmatprep.subr.bf16.mxu0 %v1969
    %2058 = vmatpush1.bf16.msra.mxu0 %v1968
    %2059 = vmatprep.subr.bf16.mxu0 %v1965
    %2060 = vmatpush1.bf16.msra.mxu0 %v1964
    %2061 = vmatprep.subr.bf16.mxu0 %v1961
    %2062 = vmatpush1.bf16.msra.mxu0 %v1960
    %2063 = vmatprep.subr.bf16.mxu0 %v1957
    %2064 = vmatpush1.bf16.msra.mxu0 %v1956
    %2065 = vmatprep.subr.bf16.mxu0 %v1953
    %2066 = vmatpush1.bf16.msra.mxu0 %v1952
    %2067 = vmatprep.subr.bf16.mxu0 %v1949
    %2068 = vmatpush1.bf16.msra.mxu0 %v1948
    %2069 = vmatprep.subr.bf16.mxu0 0
    %2070 = vmatpush2.bf16.msra.mxu0 0
    %2071 = vmatprep.subr.bf16.mxu0 0
    %2072 = vmatpush2.bf16.msra.mxu0 0
    %2073 = vmatprep.subr.bf16.mxu0 0
    %2074 = vmatpush2.bf16.msra.mxu0 0
    %2075 = vmatprep.subr.bf16.mxu0 0
    %2076 = vmatpush2.bf16.msra.mxu0 0
    %2077 = vmatprep.subr.bf16.mxu0 0
    %2078 = vmatpush2.bf16.msra.mxu0 0
    %2079 = vmatprep.subr.bf16.mxu0 0
    %2080 = vmatpush2.bf16.msra.mxu0 0
    %2081 = vmatprep.subr.bf16.mxu0 0
    %2082 = vmatpush2.bf16.msra.mxu0 0
    %2083 = vmatprep.subr.bf16.mxu0 0
    %2084 = vmatpush2.bf16.msra.mxu0 0
    %2085 = vmatprep.mubr.bf16.mxu0 0
    %2086 = vmatmul.mubr.bf16.gmra.mxu0 %v1795
    %v2087 = vpop.f32.mrf.mxu0
    %v2088 = vadd.f32 %v1841, %v2087
    %v2089 = vpop.f32.mrf.mxu0
    %v2090 = vadd.f32 %v1845, %v2089
    %v2091 = vpop.f32.mrf.mxu0
    %v2092 = vadd.f32 %v1841, %v2091
    %v2093 = vpop.f32.mrf.mxu0
    %v2094 = vadd.f32 %v1845, %v2093
    %2095 = vdwg.mxu0
    %vm2096 = vcmp.gt.f32.partialorder %v2045, 0.0
    %vm2097 = vcmp.gt.f32.partialorder %v2047, 0.0
    %vm2098 = vcmp.gt.f32.partialorder %v2088, 0.0
    %vm2099 = vcmp.gt.f32.partialorder %v2090, 0.0
    %vm2100 = vcmp.gt.f32.partialorder %v2049, 0.0
    %vm2101 = vcmp.gt.f32.partialorder %v2051, 0.0
    %vm2102 = vcmp.gt.f32.partialorder %v2092, 0.0
    %vm2103 = vcmp.gt.f32.partialorder %v2094, 0.0
    %v2104 = vld [vmem:[#allocation17] ss:$4 sm:$0xf]
    %v2106 = vlaneseq
    %v2107 = vshrl.u32 %v2106, 7
    %v2108 = vsub.s32 0, %v2107
    %v2109 = vrot.slane %v2104, %v2108
    %v2110 = vlaneseq
    %v2111 = vshrl.u32 %v2110, 7
    %v2112 = vsub.s32 1, %v2111
    %v2113 = vrot.slane %v2104, %v2112
    %v2114 = vlaneseq
    %v2115 = vshrl.u32 %v2114, 7
    %v2116 = vsub.s32 2, %v2115
    %v2117 = vrot.slane %v2104, %v2116
    %v2118 = vlaneseq
    %v2119 = vshrl.u32 %v2118, 7
    %v2120 = vsub.s32 3, %v2119
    %v2121 = vrot.slane %v2104, %v2120
    %v2126 = vmul.f32 %v2109, %v2045
    %v2127 = vmul.f32 %v2113, %v2047
    %v2128 = vmul.f32 %v2117, %v2088
    %v2129 = vmul.f32 %v2121, %v2090
    %v2130 = vmul.f32 %v2109, %v2049
    %v2131 = vmul.f32 %v2113, %v2051
    %v2132 = vmul.f32 %v2117, %v2092
    %v2133 = vmul.f32 %v2121, %v2094
    %v2134 = vsel %vm2096, %v2045, %v2126
    %v2135 = vsel %vm2097, %v2047, %v2127
    %v2136 = vsel %vm2098, %v2088, %v2128
    %v2137 = vsel %vm2099, %v2090, %v2129
    %v2138 = vsel %vm2100, %v2049, %v2130
    %v2139 = vsel %vm2101, %v2051, %v2131
    %v2140 = vsel %vm2102, %v2092, %v2132
    %v2141 = vsel %vm2103, %v2094, %v2133
    %v2142 = vadd.f32 %v196, %v2134
    %v2143 = vadd.f32 %v197, %v2135
    %v2144 = vadd.f32 %v198, %v2136
    %v2145 = vadd.f32 %v199, %v2137
    %v2146 = vadd.f32 %v200, %v2138
    %v2147 = vadd.f32 %v201, %v2139
    %v2148 = vadd.f32 %v202, %v2140
    %v2149 = vadd.f32 %v203, %v2141
    %v2150 = vpack.c.bf16 %v2146, %v2142
    %v2151 = vpack.c.bf16 %v2147, %v2143
    %v2152 = vpack.c.bf16 %v2148, %v2144
    %v2153 = vpack.c.bf16 %v2149, %v2145
    %s2154 = scalar_lea.vmem [#allocation5], 256
    %v2155 = vld [vmem:[%s2154] sm:$0xf]
    %v2156 = vld [vmem:[%s2154 + $0x4] sm:$0xf]
    %v2157 = vld [vmem:[%s2154 + $0x8] sm:$0xf]
    %v2158 = vld [vmem:[%s2154 + $0xc] sm:$0xf]
    %v2159 = vld [vmem:[%s2154 + $0x10] sm:$0xf]
    %v2160 = vld [vmem:[%s2154 + $0x14] sm:$0xf]
    %v2161 = vld [vmem:[%s2154 + $0x18] sm:$0xf]
    %v2162 = vld [vmem:[%s2154 + $0x1c] sm:$0xf]
    %v2163 = vld [vmem:[%s2154 + $0x20] sm:$0xf]
    %v2164 = vld [vmem:[%s2154 + $0x24] sm:$0xf]
    %v2165 = vld [vmem:[%s2154 + $0x28] sm:$0xf]
    %v2166 = vld [vmem:[%s2154 + $0x2c] sm:$0xf]
    %v2167 = vld [vmem:[%s2154 + $0x30] sm:$0xf]
    %v2168 = vld [vmem:[%s2154 + $0x34] sm:$0xf]
    %v2169 = vld [vmem:[%s2154 + $0x38] sm:$0xf]
    %v2170 = vld [vmem:[%s2154 + $0x3c] sm:$0xf]
    %v2171 = vld [vmem:[%s2154 + $0x40] sm:$0xf]
    %v2172 = vld [vmem:[%s2154 + $0x44] sm:$0xf]
    %v2173 = vld [vmem:[%s2154 + $0x48] sm:$0xf]
    %v2174 = vld [vmem:[%s2154 + $0x4c] sm:$0xf]
    %v2175 = vld [vmem:[%s2154 + $0x50] sm:$0xf]
    %v2176 = vld [vmem:[%s2154 + $0x54] sm:$0xf]
    %v2177 = vld [vmem:[%s2154 + $0x58] sm:$0xf]
    %v2178 = vld [vmem:[%s2154 + $0x5c] sm:$0xf]
    %v2179 = vld [vmem:[%s2154 + $0x60] sm:$0xf]
    %v2180 = vld [vmem:[%s2154 + $0x64] sm:$0xf]
    %v2181 = vld [vmem:[%s2154 + $0x68] sm:$0xf]
    %v2182 = vld [vmem:[%s2154 + $0x6c] sm:$0xf]
    %v2183 = vld [vmem:[%s2154 + $0x70] sm:$0xf]
    %v2184 = vld [vmem:[%s2154 + $0x74] sm:$0xf]
    %v2185 = vld [vmem:[%s2154 + $0x78] sm:$0xf]
    %v2186 = vld [vmem:[%s2154 + $0x7c] sm:$0xf]
    %v2187 = vld [vmem:[%s2154 + $0x80] sm:$0xf]
    %v2188 = vld [vmem:[%s2154 + $0x84] sm:$0xf]
    %v2189 = vld [vmem:[%s2154 + $0x88] sm:$0xf]
    %v2190 = vld [vmem:[%s2154 + $0x8c] sm:$0xf]
    %v2191 = vld [vmem:[%s2154 + $0x90] sm:$0xf]
    %v2192 = vld [vmem:[%s2154 + $0x94] sm:$0xf]
    %v2193 = vld [vmem:[%s2154 + $0x98] sm:$0xf]
    %v2194 = vld [vmem:[%s2154 + $0x9c] sm:$0xf]
    %v2195 = vld [vmem:[%s2154 + $0xa0] sm:$0xf]
    %v2196 = vld [vmem:[%s2154 + $0xa4] sm:$0xf]
    %v2197 = vld [vmem:[%s2154 + $0xa8] sm:$0xf]
    %v2198 = vld [vmem:[%s2154 + $0xac] sm:$0xf]
    %v2199 = vld [vmem:[%s2154 + $0xb0] sm:$0xf]
    %v2200 = vld [vmem:[%s2154 + $0xb4] sm:$0xf]
    %v2201 = vld [vmem:[%s2154 + $0xb8] sm:$0xf]
    %v2202 = vld [vmem:[%s2154 + $0xbc] sm:$0xf]
    %v2203 = vld [vmem:[%s2154 + $0xc0] sm:$0xf]
    %v2204 = vld [vmem:[%s2154 + $0xc4] sm:$0xf]
    %v2205 = vld [vmem:[%s2154 + $0xc8] sm:$0xf]
    %v2206 = vld [vmem:[%s2154 + $0xcc] sm:$0xf]
    %v2207 = vld [vmem:[%s2154 + $0xd0] sm:$0xf]
    %v2208 = vld [vmem:[%s2154 + $0xd4] sm:$0xf]
    %v2209 = vld [vmem:[%s2154 + $0xd8] sm:$0xf]
    %v2210 = vld [vmem:[%s2154 + $0xdc] sm:$0xf]
    %v2211 = vld [vmem:[%s2154 + $0xe0] sm:$0xf]
    %v2212 = vld [vmem:[%s2154 + $0xe4] sm:$0xf]
    %v2213 = vld [vmem:[%s2154 + $0xe8] sm:$0xf]
    %v2214 = vld [vmem:[%s2154 + $0xec] sm:$0xf]
    %v2215 = vld [vmem:[%s2154 + $0xf0] sm:$0xf]
    %v2216 = vld [vmem:[%s2154 + $0xf4] sm:$0xf]
    %v2217 = vld [vmem:[%s2154 + $0xf8] sm:$0xf]
    %v2218 = vld [vmem:[%s2154 + $0xfc] sm:$0xf]
    %v2219 = vld [vmem:[#allocation7 + $0x1] sm:$0x1]
    %v2220 = vlaneseq
    %v2221 = vshrl.u32 %v2220, 7
    %v2222 = vsub.s32 0, %v2221
    %v2223 = vrot.slane %v2219, %v2222
    %v2288 = vunpack.c.l.b16 %v2155
    %v2289 = vunpack.c.l.b16 %v2156
    %v2290 = vunpack.c.l.b16 %v2157
    %v2291 = vunpack.c.l.b16 %v2158
    %v2292 = vunpack.c.l.b16 %v2159
    %v2293 = vunpack.c.l.b16 %v2160
    %v2294 = vunpack.c.l.b16 %v2161
    %v2295 = vunpack.c.l.b16 %v2162
    %v2296 = vunpack.c.l.b16 %v2163
    %v2297 = vunpack.c.l.b16 %v2164
    %v2298 = vunpack.c.l.b16 %v2165
    %v2299 = vunpack.c.l.b16 %v2166
    %v2300 = vunpack.c.l.b16 %v2167
    %v2301 = vunpack.c.l.b16 %v2168
    %v2302 = vunpack.c.l.b16 %v2169
    %v2303 = vunpack.c.l.b16 %v2170
    %v2304 = vunpack.c.l.b16 %v2171
    %v2305 = vunpack.c.l.b16 %v2172
    %v2306 = vunpack.c.l.b16 %v2173
    %v2307 = vunpack.c.l.b16 %v2174
    %v2308 = vunpack.c.l.b16 %v2175
    %v2309 = vunpack.c.l.b16 %v2176
    %v2310 = vunpack.c.l.b16 %v2177
    %v2311 = vunpack.c.l.b16 %v2178
    %v2312 = vunpack.c.l.b16 %v2179
    %v2313 = vunpack.c.l.b16 %v2180
    %v2314 = vunpack.c.l.b16 %v2181
    %v2315 = vunpack.c.l.b16 %v2182
    %v2316 = vunpack.c.l.b16 %v2183
    %v2317 = vunpack.c.l.b16 %v2184
    %v2318 = vunpack.c.l.b16 %v2185
    %v2319 = vunpack.c.l.b16 %v2186
    %v2320 = vunpack.c.l.b16 %v2187
    %v2321 = vunpack.c.l.b16 %v2188
    %v2322 = vunpack.c.l.b16 %v2189
    %v2323 = vunpack.c.l.b16 %v2190
    %v2324 = vunpack.c.l.b16 %v2191
    %v2325 = vunpack.c.l.b16 %v2192
    %v2326 = vunpack.c.l.b16 %v2193
    %v2327 = vunpack.c.l.b16 %v2194
    %v2328 = vunpack.c.l.b16 %v2195
    %v2329 = vunpack.c.l.b16 %v2196
    %v2330 = vunpack.c.l.b16 %v2197
    %v2331 = vunpack.c.l.b16 %v2198
    %v2332 = vunpack.c.l.b16 %v2199
    %v2333 = vunpack.c.l.b16 %v2200
    %v2334 = vunpack.c.l.b16 %v2201
    %v2335 = vunpack.c.l.b16 %v2202
    %v2336 = vunpack.c.l.b16 %v2203
    %v2337 = vunpack.c.l.b16 %v2204
    %v2338 = vunpack.c.l.b16 %v2205
    %v2339 = vunpack.c.l.b16 %v2206
    %v2340 = vunpack.c.l.b16 %v2207
    %v2341 = vunpack.c.l.b16 %v2208
    %v2342 = vunpack.c.l.b16 %v2209
    %v2343 = vunpack.c.l.b16 %v2210
    %v2344 = vunpack.c.l.b16 %v2211
    %v2345 = vunpack.c.l.b16 %v2212
    %v2346 = vunpack.c.l.b16 %v2213
    %v2347 = vunpack.c.l.b16 %v2214
    %v2348 = vunpack.c.l.b16 %v2215
    %v2349 = vunpack.c.l.b16 %v2216
    %v2350 = vunpack.c.l.b16 %v2217
    %v2351 = vunpack.c.l.b16 %v2218
    %v2352 = vpack.c.b16 %v2289, %v2288
    %v2353 = vpack.c.b16 %v2291, %v2290
    %v2354 = vpack.c.b16 %v2293, %v2292
    %v2355 = vpack.c.b16 %v2295, %v2294
    %v2356 = vpack.c.b16 %v2297, %v2296
    %v2357 = vpack.c.b16 %v2299, %v2298
    %v2358 = vpack.c.b16 %v2301, %v2300
    %v2359 = vpack.c.b16 %v2303, %v2302
    %v2360 = vpack.c.b16 %v2305, %v2304
    %v2361 = vpack.c.b16 %v2307, %v2306
    %v2362 = vpack.c.b16 %v2309, %v2308
    %v2363 = vpack.c.b16 %v2311, %v2310
    %v2364 = vpack.c.b16 %v2313, %v2312
    %v2365 = vpack.c.b16 %v2315, %v2314
    %v2366 = vpack.c.b16 %v2317, %v2316
    %v2367 = vpack.c.b16 %v2319, %v2318
    %v2368 = vpack.c.b16 %v2321, %v2320
    %v2369 = vpack.c.b16 %v2323, %v2322
    %v2370 = vpack.c.b16 %v2325, %v2324
    %v2371 = vpack.c.b16 %v2327, %v2326
    %v2372 = vpack.c.b16 %v2329, %v2328
    %v2373 = vpack.c.b16 %v2331, %v2330
    %v2374 = vpack.c.b16 %v2333, %v2332
    %v2375 = vpack.c.b16 %v2335, %v2334
    %v2376 = vpack.c.b16 %v2337, %v2336
    %v2377 = vpack.c.b16 %v2339, %v2338
    %v2378 = vpack.c.b16 %v2341, %v2340
    %v2379 = vpack.c.b16 %v2343, %v2342
    %v2380 = vpack.c.b16 %v2345, %v2344
    %v2381 = vpack.c.b16 %v2347, %v2346
    %v2382 = vpack.c.b16 %v2349, %v2348
    %v2383 = vpack.c.b16 %v2351, %v2350
    %2416 = vmatprep.subr.bf16.mxu0 0
    %2417 = vmatpush1.bf16.msra.mxu0 %v2359
    %2418 = vmatprep.subr.bf16.mxu0 0
    %2419 = vmatpush1.bf16.msra.mxu0 %v2358
    %2420 = vmatprep.subr.bf16.mxu0 0
    %2421 = vmatpush1.bf16.msra.mxu0 %v2357
    %2422 = vmatprep.subr.bf16.mxu0 0
    %2423 = vmatpush1.bf16.msra.mxu0 %v2356
    %2424 = vmatprep.subr.bf16.mxu0 0
    %2425 = vmatpush1.bf16.msra.mxu0 %v2355
    %2426 = vmatprep.subr.bf16.mxu0 0
    %2427 = vmatpush1.bf16.msra.mxu0 %v2354
    %2428 = vmatprep.subr.bf16.mxu0 0
    %2429 = vmatpush1.bf16.msra.mxu0 %v2353
    %2430 = vmatprep.subr.bf16.mxu0 0
    %2431 = vmatpush1.bf16.msra.mxu0 %v2352
    %2432 = vmatprep.subr.bf16.mxu0 0
    %2433 = vmatpush2.bf16.msra.mxu0 %v2367
    %2434 = vmatprep.subr.bf16.mxu0 0
    %2435 = vmatpush2.bf16.msra.mxu0 %v2366
    %2436 = vmatprep.subr.bf16.mxu0 0
    %2437 = vmatpush2.bf16.msra.mxu0 %v2365
    %2438 = vmatprep.subr.bf16.mxu0 0
    %2439 = vmatpush2.bf16.msra.mxu0 %v2364
    %2440 = vmatprep.subr.bf16.mxu0 0
    %2441 = vmatpush2.bf16.msra.mxu0 %v2363
    %2442 = vmatprep.subr.bf16.mxu0 0
    %2443 = vmatpush2.bf16.msra.mxu0 %v2362
    %2444 = vmatprep.subr.bf16.mxu0 0
    %2445 = vmatpush2.bf16.msra.mxu0 %v2361
    %2446 = vmatprep.subr.bf16.mxu0 0
    %2447 = vmatpush2.bf16.msra.mxu0 %v2360
    %2448 = vmatprep.mubr.bf16.mxu0 %v2151
    %2449 = vmatmul.mubr.bf16.gmra.mxu0 %v2150
    %v2450 = vpop.f32.mrf.mxu0
    %v2451 = vadd.f32 %v2223, %v2450
    %v2452 = vpop.f32.mrf.mxu0
    %v2453 = vpop.f32.mrf.mxu0
    %v2454 = vadd.f32 %v2223, %v2453
    %v2455 = vpop.f32.mrf.mxu0
    %2456 = vdwg.mxu0
    %2457 = vmatprep.subr.bf16.mxu0 0
    %2458 = vmatpush1.bf16.msra.mxu0 %v2375
    %2459 = vmatprep.subr.bf16.mxu0 0
    %2460 = vmatpush1.bf16.msra.mxu0 %v2374
    %2461 = vmatprep.subr.bf16.mxu0 0
    %2462 = vmatpush1.bf16.msra.mxu0 %v2373
    %2463 = vmatprep.subr.bf16.mxu0 0
    %2464 = vmatpush1.bf16.msra.mxu0 %v2372
    %2465 = vmatprep.subr.bf16.mxu0 0
    %2466 = vmatpush1.bf16.msra.mxu0 %v2371
    %2467 = vmatprep.subr.bf16.mxu0 0
    %2468 = vmatpush1.bf16.msra.mxu0 %v2370
    %2469 = vmatprep.subr.bf16.mxu0 0
    %2470 = vmatpush1.bf16.msra.mxu0 %v2369
    %2471 = vmatprep.subr.bf16.mxu0 0
    %2472 = vmatpush1.bf16.msra.mxu0 %v2368
    %2473 = vmatprep.subr.bf16.mxu0 0
    %2474 = vmatpush2.bf16.msra.mxu0 %v2383
    %2475 = vmatprep.subr.bf16.mxu0 0
    %2476 = vmatpush2.bf16.msra.mxu0 %v2382
    %2477 = vmatprep.subr.bf16.mxu0 0
    %2478 = vmatpush2.bf16.msra.mxu0 %v2381
    %2479 = vmatprep.subr.bf16.mxu0 0
    %2480 = vmatpush2.bf16.msra.mxu0 %v2380
    %2481 = vmatprep.subr.bf16.mxu0 0
    %2482 = vmatpush2.bf16.msra.mxu0 %v2379
    %2483 = vmatprep.subr.bf16.mxu0 0
    %2484 = vmatpush2.bf16.msra.mxu0 %v2378
    %2485 = vmatprep.subr.bf16.mxu0 0
    %2486 = vmatpush2.bf16.msra.mxu0 %v2377
    %2487 = vmatprep.subr.bf16.mxu0 0
    %2488 = vmatpush2.bf16.msra.mxu0 %v2376
    %2489 = vmatprep.mubr.bf16.mxu0 %v2153
    %2490 = vmatmul.mubr.bf16.gmra.mxu0 %v2152
    %v2491 = vpop.f32.mrf.mxu0
    %v2492 = vadd.f32 %v2451, %v2491
    %v2493 = vpop.f32.mrf.mxu0
    %v2494 = vpop.f32.mrf.mxu0
    %v2495 = vadd.f32 %v2454, %v2494
    %v2496 = vpop.f32.mrf.mxu0
    %2497 = vdwg.mxu0
    %vm2498 = vcmp.gt.f32.partialorder %v2492, 0.0
    %vm2499 = vcmp.gt.f32.partialorder %v2495, 0.0
    %v2500 = vld [vmem:[#allocation8 + $0x1] sm:$0x1]
    %v2501 = vlaneseq
    %v2502 = vshrl.u32 %v2501, 7
    %v2503 = vsub.s32 0, %v2502
    %v2504 = vrot.slane %v2500, %v2503
    %v2505 = vmul.f32 %v2504, %v2492
    %v2506 = vmul.f32 %v2504, %v2495
    %v2507 = vsel %vm2498, %v2492, %v2505
    %v2508 = vsel %vm2499, %v2495, %v2506
    %v2509 = vrot.slane %v2507, 7
    %v2510 = vrot.slane %v2508, 7
    %v2511 = vsel %vm564, %v2509, %v2510
    %v2512 = vsel %vm564, %v2510, %v2509
    %v2513 = vsel %vm569, 0.0, %v2512
    %v2514 = vsel %vm570, 0.0, %v2511
    %v2515 = vrot.slane %v2507, 1
    %v2516 = vrot.slane %v2508, 1
    %v2517 = vsel %vm575, %v2515, %v2516
    %v2518 = vsel %vm575, %v2516, %v2515
    %v2519 = vsel %vm580, 0.0, %v2517
    %v2520 = vsel %vm581, 0.0, %v2518
    %v2521 = vpack.c.bf16 %v2514, %v2513
    %v2522 = vpack.c.bf16 %v2508, %v2507
    %v2523 = vpack.c.bf16 %v2520, %v2519
    %s2524 = scalar_lea.vmem [#allocation10], 768
    %v2525 = vld [vmem:[%s2524] sm:$0xf]
    %v2526 = vld [vmem:[%s2524 + $0x4] sm:$0xf]
    %v2527 = vld [vmem:[%s2524 + $0x8] sm:$0xf]
    %v2528 = vld [vmem:[%s2524 + $0xc] sm:$0xf]
    %v2529 = vld [vmem:[%s2524 + $0x10] sm:$0xf]
    %v2530 = vld [vmem:[%s2524 + $0x14] sm:$0xf]
    %v2531 = vld [vmem:[%s2524 + $0x18] sm:$0xf]
    %v2532 = vld [vmem:[%s2524 + $0x1c] sm:$0xf]
    %v2533 = vld [vmem:[%s2524 + $0x20] sm:$0xf]
    %v2534 = vld [vmem:[%s2524 + $0x24] sm:$0xf]
    %v2535 = vld [vmem:[%s2524 + $0x28] sm:$0xf]
    %v2536 = vld [vmem:[%s2524 + $0x2c] sm:$0xf]
    %v2537 = vld [vmem:[%s2524 + $0x30] sm:$0xf]
    %v2538 = vld [vmem:[%s2524 + $0x34] sm:$0xf]
    %v2539 = vld [vmem:[%s2524 + $0x38] sm:$0xf]
    %v2540 = vld [vmem:[%s2524 + $0x3c] sm:$0xf]
    %v2541 = vld [vmem:[%s2524 + $0x40] sm:$0xf]
    %v2542 = vld [vmem:[%s2524 + $0x44] sm:$0xf]
    %v2543 = vld [vmem:[%s2524 + $0x48] sm:$0xf]
    %v2544 = vld [vmem:[%s2524 + $0x4c] sm:$0xf]
    %v2545 = vld [vmem:[%s2524 + $0x50] sm:$0xf]
    %v2546 = vld [vmem:[%s2524 + $0x54] sm:$0xf]
    %v2547 = vld [vmem:[%s2524 + $0x58] sm:$0xf]
    %v2548 = vld [vmem:[%s2524 + $0x5c] sm:$0xf]
    %v2549 = vld [vmem:[%s2524 + $0x60] sm:$0xf]
    %v2550 = vld [vmem:[%s2524 + $0x64] sm:$0xf]
    %v2551 = vld [vmem:[%s2524 + $0x68] sm:$0xf]
    %v2552 = vld [vmem:[%s2524 + $0x6c] sm:$0xf]
    %v2553 = vld [vmem:[%s2524 + $0x70] sm:$0xf]
    %v2554 = vld [vmem:[%s2524 + $0x74] sm:$0xf]
    %v2555 = vld [vmem:[%s2524 + $0x78] sm:$0xf]
    %v2556 = vld [vmem:[%s2524 + $0x7c] sm:$0xf]
    %v2557 = vld [vmem:[%s2524 + $0x80] sm:$0xf]
    %v2558 = vld [vmem:[%s2524 + $0x84] sm:$0xf]
    %v2559 = vld [vmem:[%s2524 + $0x88] sm:$0xf]
    %v2560 = vld [vmem:[%s2524 + $0x8c] sm:$0xf]
    %v2561 = vld [vmem:[%s2524 + $0x90] sm:$0xf]
    %v2562 = vld [vmem:[%s2524 + $0x94] sm:$0xf]
    %v2563 = vld [vmem:[%s2524 + $0x98] sm:$0xf]
    %v2564 = vld [vmem:[%s2524 + $0x9c] sm:$0xf]
    %v2565 = vld [vmem:[%s2524 + $0xa0] sm:$0xf]
    %v2566 = vld [vmem:[%s2524 + $0xa4] sm:$0xf]
    %v2567 = vld [vmem:[%s2524 + $0xa8] sm:$0xf]
    %v2568 = vld [vmem:[%s2524 + $0xac] sm:$0xf]
    %v2569 = vld [vmem:[%s2524 + $0xb0] sm:$0xf]
    %v2570 = vld [vmem:[%s2524 + $0xb4] sm:$0xf]
    %v2571 = vld [vmem:[%s2524 + $0xb8] sm:$0xf]
    %v2572 = vld [vmem:[%s2524 + $0xbc] sm:$0xf]
    %v2573 = vld [vmem:[#allocation11 + $0x4] sm:$0x1]
    %v2574 = vlaneseq
    %v2575 = vshrl.u32 %v2574, 7
    %v2576 = vsub.s32 0, %v2575
    %v2577 = vrot.slane %v2573, %v2576
    %v2626 = vunpack.c.l.b16 %v2525
    %v2627 = vunpack.c.l.b16 %v2526
    %v2628 = vunpack.c.l.b16 %v2527
    %v2629 = vunpack.c.l.b16 %v2528
    %v2630 = vunpack.c.l.b16 %v2529
    %v2631 = vunpack.c.l.b16 %v2530
    %v2632 = vunpack.c.l.b16 %v2531
    %v2633 = vunpack.c.l.b16 %v2532
    %v2634 = vunpack.c.l.b16 %v2533
    %v2635 = vunpack.c.l.b16 %v2534
    %v2636 = vunpack.c.l.b16 %v2535
    %v2637 = vunpack.c.l.b16 %v2536
    %v2638 = vunpack.c.l.b16 %v2537
    %v2639 = vunpack.c.l.b16 %v2538
    %v2640 = vunpack.c.l.b16 %v2539
    %v2641 = vunpack.c.l.b16 %v2540
    %v2642 = vunpack.c.l.b16 %v2541
    %v2643 = vunpack.c.l.b16 %v2542
    %v2644 = vunpack.c.l.b16 %v2543
    %v2645 = vunpack.c.l.b16 %v2544
    %v2646 = vunpack.c.l.b16 %v2545
    %v2647 = vunpack.c.l.b16 %v2546
    %v2648 = vunpack.c.l.b16 %v2547
    %v2649 = vunpack.c.l.b16 %v2548
    %v2650 = vunpack.c.l.b16 %v2549
    %v2651 = vunpack.c.l.b16 %v2550
    %v2652 = vunpack.c.l.b16 %v2551
    %v2653 = vunpack.c.l.b16 %v2552
    %v2654 = vunpack.c.l.b16 %v2553
    %v2655 = vunpack.c.l.b16 %v2554
    %v2656 = vunpack.c.l.b16 %v2555
    %v2657 = vunpack.c.l.b16 %v2556
    %v2658 = vunpack.c.l.b16 %v2557
    %v2659 = vunpack.c.l.b16 %v2558
    %v2660 = vunpack.c.l.b16 %v2559
    %v2661 = vunpack.c.l.b16 %v2560
    %v2662 = vunpack.c.l.b16 %v2561
    %v2663 = vunpack.c.l.b16 %v2562
    %v2664 = vunpack.c.l.b16 %v2563
    %v2665 = vunpack.c.l.b16 %v2564
    %v2666 = vunpack.c.l.b16 %v2565
    %v2667 = vunpack.c.l.b16 %v2566
    %v2668 = vunpack.c.l.b16 %v2567
    %v2669 = vunpack.c.l.b16 %v2568
    %v2670 = vunpack.c.l.b16 %v2569
    %v2671 = vunpack.c.l.b16 %v2570
    %v2672 = vunpack.c.l.b16 %v2571
    %v2673 = vunpack.c.l.b16 %v2572
    %v2674 = vpack.c.b16 %v2627, %v2626
    %v2675 = vpack.c.b16 %v2629, %v2628
    %v2676 = vpack.c.b16 %v2631, %v2630
    %v2677 = vpack.c.b16 %v2633, %v2632
    %v2678 = vpack.c.b16 %v2635, %v2634
    %v2679 = vpack.c.b16 %v2637, %v2636
    %v2680 = vpack.c.b16 %v2639, %v2638
    %v2681 = vpack.c.b16 %v2641, %v2640
    %v2682 = vpack.c.b16 %v2643, %v2642
    %v2683 = vpack.c.b16 %v2645, %v2644
    %v2684 = vpack.c.b16 %v2647, %v2646
    %v2685 = vpack.c.b16 %v2649, %v2648
    %v2686 = vpack.c.b16 %v2651, %v2650
    %v2687 = vpack.c.b16 %v2653, %v2652
    %v2688 = vpack.c.b16 %v2655, %v2654
    %v2689 = vpack.c.b16 %v2657, %v2656
    %v2690 = vpack.c.b16 %v2659, %v2658
    %v2691 = vpack.c.b16 %v2661, %v2660
    %v2692 = vpack.c.b16 %v2663, %v2662
    %v2693 = vpack.c.b16 %v2665, %v2664
    %v2694 = vpack.c.b16 %v2667, %v2666
    %v2695 = vpack.c.b16 %v2669, %v2668
    %v2696 = vpack.c.b16 %v2671, %v2670
    %v2697 = vpack.c.b16 %v2673, %v2672
    %2722 = vmatprep.subr.bf16.mxu0 0
    %2723 = vmatpush1.bf16.msra.mxu0 %v2681
    %2724 = vmatprep.subr.bf16.mxu0 0
    %2725 = vmatpush1.bf16.msra.mxu0 %v2680
    %2726 = vmatprep.subr.bf16.mxu0 0
    %2727 = vmatpush1.bf16.msra.mxu0 %v2679
    %2728 = vmatprep.subr.bf16.mxu0 0
    %2729 = vmatpush1.bf16.msra.mxu0 %v2678
    %2730 = vmatprep.subr.bf16.mxu0 0
    %2731 = vmatpush1.bf16.msra.mxu0 %v2677
    %2732 = vmatprep.subr.bf16.mxu0 0
    %2733 = vmatpush1.bf16.msra.mxu0 %v2676
    %2734 = vmatprep.subr.bf16.mxu0 0
    %2735 = vmatpush1.bf16.msra.mxu0 %v2675
    %2736 = vmatprep.subr.bf16.mxu0 0
    %2737 = vmatpush1.bf16.msra.mxu0 %v2674
    %2738 = vmatprep.subr.bf16.mxu0 0
    %2739 = vmatpush2.bf16.msra.mxu0 %v2689
    %2740 = vmatprep.subr.bf16.mxu0 0
    %2741 = vmatpush2.bf16.msra.mxu0 %v2688
    %2742 = vmatprep.subr.bf16.mxu0 0
    %2743 = vmatpush2.bf16.msra.mxu0 %v2687
    %2744 = vmatprep.subr.bf16.mxu0 0
    %2745 = vmatpush2.bf16.msra.mxu0 %v2686
    %2746 = vmatprep.subr.bf16.mxu0 0
    %2747 = vmatpush2.bf16.msra.mxu0 %v2685
    %2748 = vmatprep.subr.bf16.mxu0 0
    %2749 = vmatpush2.bf16.msra.mxu0 %v2684
    %2750 = vmatprep.subr.bf16.mxu0 0
    %2751 = vmatpush2.bf16.msra.mxu0 %v2683
    %2752 = vmatprep.subr.bf16.mxu0 0
    %2753 = vmatpush2.bf16.msra.mxu0 %v2682
    %2754 = vmatprep.mubr.bf16.mxu0 %v2522
    %2755 = vmatmul.mubr.bf16.gmra.mxu0 %v2521
    %v2756 = vpop.f32.mrf.mxu0
    %v2757 = vadd.f32 %v2577, %v2756
    %v2758 = vpop.f32.mrf.mxu0
    %v2759 = vpop.f32.mrf.mxu0
    %v2760 = vadd.f32 %v2577, %v2759
    %v2761 = vpop.f32.mrf.mxu0
    %2762 = vdwg.mxu0
    %2763 = vmatprep.subr.bf16.mxu0 0
    %2764 = vmatpush1.bf16.msra.mxu0 %v2697
    %2765 = vmatprep.subr.bf16.mxu0 0
    %2766 = vmatpush1.bf16.msra.mxu0 %v2696
    %2767 = vmatprep.subr.bf16.mxu0 0
    %2768 = vmatpush1.bf16.msra.mxu0 %v2695
    %2769 = vmatprep.subr.bf16.mxu0 0
    %2770 = vmatpush1.bf16.msra.mxu0 %v2694
    %2771 = vmatprep.subr.bf16.mxu0 0
    %2772 = vmatpush1.bf16.msra.mxu0 %v2693
    %2773 = vmatprep.subr.bf16.mxu0 0
    %2774 = vmatpush1.bf16.msra.mxu0 %v2692
    %2775 = vmatprep.subr.bf16.mxu0 0
    %2776 = vmatpush1.bf16.msra.mxu0 %v2691
    %2777 = vmatprep.subr.bf16.mxu0 0
    %2778 = vmatpush1.bf16.msra.mxu0 %v2690
    %2779 = vmatprep.subr.bf16.mxu0 0
    %2780 = vmatpush2.bf16.msra.mxu0 0
    %2781 = vmatprep.subr.bf16.mxu0 0
    %2782 = vmatpush2.bf16.msra.mxu0 0
    %2783 = vmatprep.subr.bf16.mxu0 0
    %2784 = vmatpush2.bf16.msra.mxu0 0
    %2785 = vmatprep.subr.bf16.mxu0 0
    %2786 = vmatpush2.bf16.msra.mxu0 0
    %2787 = vmatprep.subr.bf16.mxu0 0
    %2788 = vmatpush2.bf16.msra.mxu0 0
    %2789 = vmatprep.subr.bf16.mxu0 0
    %2790 = vmatpush2.bf16.msra.mxu0 0
    %2791 = vmatprep.subr.bf16.mxu0 0
    %2792 = vmatpush2.bf16.msra.mxu0 0
    %2793 = vmatprep.subr.bf16.mxu0 0
    %2794 = vmatpush2.bf16.msra.mxu0 0
    %2795 = vmatprep.mubr.bf16.mxu0 0
    %2796 = vmatmul.mubr.bf16.gmra.mxu0 %v2523
    %v2797 = vpop.f32.mrf.mxu0
    %v2798 = vadd.f32 %v2757, %v2797
    %v2799 = vpop.f32.mrf.mxu0
    %v2800 = vpop.f32.mrf.mxu0
    %v2801 = vadd.f32 %v2760, %v2800
    %v2802 = vpop.f32.mrf.mxu0
    %2803 = vdwg.mxu0
    %vm2804 = vcmp.gt.f32.partialorder %v2798, 0.0
    %vm2805 = vcmp.gt.f32.partialorder %v2801, 0.0
    %v2806 = vld [vmem:[#allocation13 + $0x4] sm:$0x1]
    %v2807 = vlaneseq
    %v2808 = vshrl.u32 %v2807, 7
    %v2809 = vsub.s32 0, %v2808
    %v2810 = vrot.slane %v2806, %v2809
    %v2811 = vmul.f32 %v2810, %v2798
    %v2812 = vmul.f32 %v2810, %v2801
    %v2813 = vsel %vm2804, %v2798, %v2811
    %v2814 = vsel %vm2805, %v2801, %v2812
    %v2815 = vrot.slane %v2813, 7
    %v2816 = vrot.slane %v2814, 7
    %v2817 = vsel %vm564, %v2815, %v2816
    %v2818 = vsel %vm564, %v2816, %v2815
    %v2819 = vsel %vm569, 0.0, %v2818
    %v2820 = vsel %vm570, 0.0, %v2817
    %v2821 = vrot.slane %v2813, 1
    %v2822 = vrot.slane %v2814, 1
    %v2823 = vsel %vm575, %v2821, %v2822
    %v2824 = vsel %vm575, %v2822, %v2821
    %v2825 = vsel %vm580, 0.0, %v2823
    %v2826 = vsel %vm581, 0.0, %v2824
    %v2827 = vpack.c.bf16 %v2820, %v2819
    %v2828 = vpack.c.bf16 %v2814, %v2813
    %v2829 = vpack.c.bf16 %v2826, %v2825
    %s2830 = scalar_lea.vmem [#allocation10], 960
    %v2831 = vld [vmem:[%s2830] sm:$0xf]
    %v2832 = vld [vmem:[%s2830 + $0x4] sm:$0xf]
    %v2833 = vld [vmem:[%s2830 + $0x8] sm:$0xf]
    %v2834 = vld [vmem:[%s2830 + $0xc] sm:$0xf]
    %v2835 = vld [vmem:[%s2830 + $0x10] sm:$0xf]
    %v2836 = vld [vmem:[%s2830 + $0x14] sm:$0xf]
    %v2837 = vld [vmem:[%s2830 + $0x18] sm:$0xf]
    %v2838 = vld [vmem:[%s2830 + $0x1c] sm:$0xf]
    %v2839 = vld [vmem:[%s2830 + $0x20] sm:$0xf]
    %v2840 = vld [vmem:[%s2830 + $0x24] sm:$0xf]
    %v2841 = vld [vmem:[%s2830 + $0x28] sm:$0xf]
    %v2842 = vld [vmem:[%s2830 + $0x2c] sm:$0xf]
    %v2843 = vld [vmem:[%s2830 + $0x30] sm:$0xf]
    %v2844 = vld [vmem:[%s2830 + $0x34] sm:$0xf]
    %v2845 = vld [vmem:[%s2830 + $0x38] sm:$0xf]
    %v2846 = vld [vmem:[%s2830 + $0x3c] sm:$0xf]
    %v2847 = vld [vmem:[%s2830 + $0x40] sm:$0xf]
    %v2848 = vld [vmem:[%s2830 + $0x44] sm:$0xf]
    %v2849 = vld [vmem:[%s2830 + $0x48] sm:$0xf]
    %v2850 = vld [vmem:[%s2830 + $0x4c] sm:$0xf]
    %v2851 = vld [vmem:[%s2830 + $0x50] sm:$0xf]
    %v2852 = vld [vmem:[%s2830 + $0x54] sm:$0xf]
    %v2853 = vld [vmem:[%s2830 + $0x58] sm:$0xf]
    %v2854 = vld [vmem:[%s2830 + $0x5c] sm:$0xf]
    %v2855 = vld [vmem:[%s2830 + $0x60] sm:$0xf]
    %v2856 = vld [vmem:[%s2830 + $0x64] sm:$0xf]
    %v2857 = vld [vmem:[%s2830 + $0x68] sm:$0xf]
    %v2858 = vld [vmem:[%s2830 + $0x6c] sm:$0xf]
    %v2859 = vld [vmem:[%s2830 + $0x70] sm:$0xf]
    %v2860 = vld [vmem:[%s2830 + $0x74] sm:$0xf]
    %v2861 = vld [vmem:[%s2830 + $0x78] sm:$0xf]
    %v2862 = vld [vmem:[%s2830 + $0x7c] sm:$0xf]
    %v2863 = vld [vmem:[%s2830 + $0x80] sm:$0xf]
    %v2864 = vld [vmem:[%s2830 + $0x84] sm:$0xf]
    %v2865 = vld [vmem:[%s2830 + $0x88] sm:$0xf]
    %v2866 = vld [vmem:[%s2830 + $0x8c] sm:$0xf]
    %v2867 = vld [vmem:[%s2830 + $0x90] sm:$0xf]
    %v2868 = vld [vmem:[%s2830 + $0x94] sm:$0xf]
    %v2869 = vld [vmem:[%s2830 + $0x98] sm:$0xf]
    %v2870 = vld [vmem:[%s2830 + $0x9c] sm:$0xf]
    %v2871 = vld [vmem:[%s2830 + $0xa0] sm:$0xf]
    %v2872 = vld [vmem:[%s2830 + $0xa4] sm:$0xf]
    %v2873 = vld [vmem:[%s2830 + $0xa8] sm:$0xf]
    %v2874 = vld [vmem:[%s2830 + $0xac] sm:$0xf]
    %v2875 = vld [vmem:[%s2830 + $0xb0] sm:$0xf]
    %v2876 = vld [vmem:[%s2830 + $0xb4] sm:$0xf]
    %v2877 = vld [vmem:[%s2830 + $0xb8] sm:$0xf]
    %v2878 = vld [vmem:[%s2830 + $0xbc] sm:$0xf]
    %v2879 = vld [vmem:[#allocation11 + $0x5] sm:$0x1]
    %v2880 = vlaneseq
    %v2881 = vshrl.u32 %v2880, 7
    %v2882 = vsub.s32 0, %v2881
    %v2883 = vrot.slane %v2879, %v2882
    %v2932 = vunpack.c.l.b16 %v2831
    %v2933 = vunpack.c.l.b16 %v2832
    %v2934 = vunpack.c.l.b16 %v2833
    %v2935 = vunpack.c.l.b16 %v2834
    %v2936 = vunpack.c.l.b16 %v2835
    %v2937 = vunpack.c.l.b16 %v2836
    %v2938 = vunpack.c.l.b16 %v2837
    %v2939 = vunpack.c.l.b16 %v2838
    %v2940 = vunpack.c.l.b16 %v2839
    %v2941 = vunpack.c.l.b16 %v2840
    %v2942 = vunpack.c.l.b16 %v2841
    %v2943 = vunpack.c.l.b16 %v2842
    %v2944 = vunpack.c.l.b16 %v2843
    %v2945 = vunpack.c.l.b16 %v2844
    %v2946 = vunpack.c.l.b16 %v2845
    %v2947 = vunpack.c.l.b16 %v2846
    %v2948 = vunpack.c.l.b16 %v2847
    %v2949 = vunpack.c.l.b16 %v2848
    %v2950 = vunpack.c.l.b16 %v2849
    %v2951 = vunpack.c.l.b16 %v2850
    %v2952 = vunpack.c.l.b16 %v2851
    %v2953 = vunpack.c.l.b16 %v2852
    %v2954 = vunpack.c.l.b16 %v2853
    %v2955 = vunpack.c.l.b16 %v2854
    %v2956 = vunpack.c.l.b16 %v2855
    %v2957 = vunpack.c.l.b16 %v2856
    %v2958 = vunpack.c.l.b16 %v2857
    %v2959 = vunpack.c.l.b16 %v2858
    %v2960 = vunpack.c.l.b16 %v2859
    %v2961 = vunpack.c.l.b16 %v2860
    %v2962 = vunpack.c.l.b16 %v2861
    %v2963 = vunpack.c.l.b16 %v2862
    %v2964 = vunpack.c.l.b16 %v2863
    %v2965 = vunpack.c.l.b16 %v2864
    %v2966 = vunpack.c.l.b16 %v2865
    %v2967 = vunpack.c.l.b16 %v2866
    %v2968 = vunpack.c.l.b16 %v2867
    %v2969 = vunpack.c.l.b16 %v2868
    %v2970 = vunpack.c.l.b16 %v2869
    %v2971 = vunpack.c.l.b16 %v2870
    %v2972 = vunpack.c.l.b16 %v2871
    %v2973 = vunpack.c.l.b16 %v2872
    %v2974 = vunpack.c.l.b16 %v2873
    %v2975 = vunpack.c.l.b16 %v2874
    %v2976 = vunpack.c.l.b16 %v2875
    %v2977 = vunpack.c.l.b16 %v2876
    %v2978 = vunpack.c.l.b16 %v2877
    %v2979 = vunpack.c.l.b16 %v2878
    %v2980 = vpack.c.b16 %v2933, %v2932
    %v2981 = vpack.c.b16 %v2935, %v2934
    %v2982 = vpack.c.b16 %v2937, %v2936
    %v2983 = vpack.c.b16 %v2939, %v2938
    %v2984 = vpack.c.b16 %v2941, %v2940
    %v2985 = vpack.c.b16 %v2943, %v2942
    %v2986 = vpack.c.b16 %v2945, %v2944
    %v2987 = vpack.c.b16 %v2947, %v2946
    %v2988 = vpack.c.b16 %v2949, %v2948
    %v2989 = vpack.c.b16 %v2951, %v2950
    %v2990 = vpack.c.b16 %v2953, %v2952
    %v2991 = vpack.c.b16 %v2955, %v2954
    %v2992 = vpack.c.b16 %v2957, %v2956
    %v2993 = vpack.c.b16 %v2959, %v2958
    %v2994 = vpack.c.b16 %v2961, %v2960
    %v2995 = vpack.c.b16 %v2963, %v2962
    %v2996 = vpack.c.b16 %v2965, %v2964
    %v2997 = vpack.c.b16 %v2967, %v2966
    %v2998 = vpack.c.b16 %v2969, %v2968
    %v2999 = vpack.c.b16 %v2971, %v2970
    %v3000 = vpack.c.b16 %v2973, %v2972
    %v3001 = vpack.c.b16 %v2975, %v2974
    %v3002 = vpack.c.b16 %v2977, %v2976
    %v3003 = vpack.c.b16 %v2979, %v2978
    %3028 = vmatprep.subr.bf16.mxu0 0
    %3029 = vmatpush1.bf16.msra.mxu0 %v2987
    %3030 = vmatprep.subr.bf16.mxu0 0
    %3031 = vmatpush1.bf16.msra.mxu0 %v2986
    %3032 = vmatprep.subr.bf16.mxu0 0
    %3033 = vmatpush1.bf16.msra.mxu0 %v2985
    %3034 = vmatprep.subr.bf16.mxu0 0
    %3035 = vmatpush1.bf16.msra.mxu0 %v2984
    %3036 = vmatprep.subr.bf16.mxu0 0
    %3037 = vmatpush1.bf16.msra.mxu0 %v2983
    %3038 = vmatprep.subr.bf16.mxu0 0
    %3039 = vmatpush1.bf16.msra.mxu0 %v2982
    %3040 = vmatprep.subr.bf16.mxu0 0
    %3041 = vmatpush1.bf16.msra.mxu0 %v2981
    %3042 = vmatprep.subr.bf16.mxu0 0
    %3043 = vmatpush1.bf16.msra.mxu0 %v2980
    %3044 = vmatprep.subr.bf16.mxu0 0
    %3045 = vmatpush2.bf16.msra.mxu0 %v2995
    %3046 = vmatprep.subr.bf16.mxu0 0
    %3047 = vmatpush2.bf16.msra.mxu0 %v2994
    %3048 = vmatprep.subr.bf16.mxu0 0
    %3049 = vmatpush2.bf16.msra.mxu0 %v2993
    %3050 = vmatprep.subr.bf16.mxu0 0
    %3051 = vmatpush2.bf16.msra.mxu0 %v2992
    %3052 = vmatprep.subr.bf16.mxu0 0
    %3053 = vmatpush2.bf16.msra.mxu0 %v2991
    %3054 = vmatprep.subr.bf16.mxu0 0
    %3055 = vmatpush2.bf16.msra.mxu0 %v2990
    %3056 = vmatprep.subr.bf16.mxu0 0
    %3057 = vmatpush2.bf16.msra.mxu0 %v2989
    %3058 = vmatprep.subr.bf16.mxu0 0
    %3059 = vmatpush2.bf16.msra.mxu0 %v2988
    %3060 = vmatprep.mubr.bf16.mxu0 %v2828
    %3061 = vmatmul.mubr.bf16.gmra.mxu0 %v2827
    %v3062 = vpop.f32.mrf.mxu0
    %v3063 = vadd.f32 %v2883, %v3062
    %v3064 = vpop.f32.mrf.mxu0
    %v3065 = vpop.f32.mrf.mxu0
    %v3066 = vadd.f32 %v2883, %v3065
    %v3067 = vpop.f32.mrf.mxu0
    %3068 = vdwg.mxu0
    %3069 = vmatprep.subr.bf16.mxu0 0
    %3070 = vmatpush1.bf16.msra.mxu0 %v3003
    %3071 = vmatprep.subr.bf16.mxu0 0
    %3072 = vmatpush1.bf16.msra.mxu0 %v3002
    %3073 = vmatprep.subr.bf16.mxu0 0
    %3074 = vmatpush1.bf16.msra.mxu0 %v3001
    %3075 = vmatprep.subr.bf16.mxu0 0
    %3076 = vmatpush1.bf16.msra.mxu0 %v3000
    %3077 = vmatprep.subr.bf16.mxu0 0
    %3078 = vmatpush1.bf16.msra.mxu0 %v2999
    %3079 = vmatprep.subr.bf16.mxu0 0
    %3080 = vmatpush1.bf16.msra.mxu0 %v2998
    %3081 = vmatprep.subr.bf16.mxu0 0
    %3082 = vmatpush1.bf16.msra.mxu0 %v2997
    %3083 = vmatprep.subr.bf16.mxu0 0
    %3084 = vmatpush1.bf16.msra.mxu0 %v2996
    %3085 = vmatprep.subr.bf16.mxu0 0
    %3086 = vmatpush2.bf16.msra.mxu0 0
    %3087 = vmatprep.subr.bf16.mxu0 0
    %3088 = vmatpush2.bf16.msra.mxu0 0
    %3089 = vmatprep.subr.bf16.mxu0 0
    %3090 = vmatpush2.bf16.msra.mxu0 0
    %3091 = vmatprep.subr.bf16.mxu0 0
    %3092 = vmatpush2.bf16.msra.mxu0 0
    %3093 = vmatprep.subr.bf16.mxu0 0
    %3094 = vmatpush2.bf16.msra.mxu0 0
    %3095 = vmatprep.subr.bf16.mxu0 0
    %3096 = vmatpush2.bf16.msra.mxu0 0
    %3097 = vmatprep.subr.bf16.mxu0 0
    %3098 = vmatpush2.bf16.msra.mxu0 0
    %3099 = vmatprep.subr.bf16.mxu0 0
    %3100 = vmatpush2.bf16.msra.mxu0 0
    %3101 = vmatprep.mubr.bf16.mxu0 0
    %3102 = vmatmul.mubr.bf16.gmra.mxu0 %v2829
    %v3103 = vpop.f32.mrf.mxu0
    %v3104 = vadd.f32 %v3063, %v3103
    %v3105 = vpop.f32.mrf.mxu0
    %v3106 = vpop.f32.mrf.mxu0
    %v3107 = vadd.f32 %v3066, %v3106
    %v3108 = vpop.f32.mrf.mxu0
    %3109 = vdwg.mxu0
    %vm3110 = vcmp.gt.f32.partialorder %v3104, 0.0
    %vm3111 = vcmp.gt.f32.partialorder %v3107, 0.0
    %v3112 = vld [vmem:[#allocation13 + $0x5] sm:$0x1]
    %v3113 = vlaneseq
    %v3114 = vshrl.u32 %v3113, 7
    %v3115 = vsub.s32 0, %v3114
    %v3116 = vrot.slane %v3112, %v3115
    %v3117 = vmul.f32 %v3116, %v3104
    %v3118 = vmul.f32 %v3116, %v3107
    %v3119 = vsel %vm3110, %v3104, %v3117
    %v3120 = vsel %vm3111, %v3107, %v3118
    %v3121 = vrot.slane %v3119, 7
    %v3122 = vrot.slane %v3120, 7
    %v3123 = vsel %vm564, %v3121, %v3122
    %v3124 = vsel %vm564, %v3122, %v3121
    %v3125 = vsel %vm569, 0.0, %v3124
    %v3126 = vsel %vm570, 0.0, %v3123
    %v3127 = vrot.slane %v3119, 1
    %v3128 = vrot.slane %v3120, 1
    %v3129 = vsel %vm575, %v3127, %v3128
    %v3130 = vsel %vm575, %v3128, %v3127
    %v3131 = vsel %vm580, 0.0, %v3129
    %v3132 = vsel %vm581, 0.0, %v3130
    %v3133 = vpack.c.bf16 %v3126, %v3125
    %v3134 = vpack.c.bf16 %v3120, %v3119
    %v3135 = vpack.c.bf16 %v3132, %v3131
    %s3136 = scalar_lea.vmem [#allocation10], 1152
    %v3137 = vld [vmem:[%s3136] sm:$0xf]
    %v3138 = vld [vmem:[%s3136 + $0x4] sm:$0xf]
    %v3139 = vld [vmem:[%s3136 + $0x8] sm:$0xf]
    %v3140 = vld [vmem:[%s3136 + $0xc] sm:$0xf]
    %v3141 = vld [vmem:[%s3136 + $0x10] sm:$0xf]
    %v3142 = vld [vmem:[%s3136 + $0x14] sm:$0xf]
    %v3143 = vld [vmem:[%s3136 + $0x18] sm:$0xf]
    %v3144 = vld [vmem:[%s3136 + $0x1c] sm:$0xf]
    %v3145 = vld [vmem:[%s3136 + $0x20] sm:$0xf]
    %v3146 = vld [vmem:[%s3136 + $0x24] sm:$0xf]
    %v3147 = vld [vmem:[%s3136 + $0x28] sm:$0xf]
    %v3148 = vld [vmem:[%s3136 + $0x2c] sm:$0xf]
    %v3149 = vld [vmem:[%s3136 + $0x30] sm:$0xf]
    %v3150 = vld [vmem:[%s3136 + $0x34] sm:$0xf]
    %v3151 = vld [vmem:[%s3136 + $0x38] sm:$0xf]
    %v3152 = vld [vmem:[%s3136 + $0x3c] sm:$0xf]
    %v3153 = vld [vmem:[%s3136 + $0x40] sm:$0xf]
    %v3154 = vld [vmem:[%s3136 + $0x44] sm:$0xf]
    %v3155 = vld [vmem:[%s3136 + $0x48] sm:$0xf]
    %v3156 = vld [vmem:[%s3136 + $0x4c] sm:$0xf]
    %v3157 = vld [vmem:[%s3136 + $0x50] sm:$0xf]
    %v3158 = vld [vmem:[%s3136 + $0x54] sm:$0xf]
    %v3159 = vld [vmem:[%s3136 + $0x58] sm:$0xf]
    %v3160 = vld [vmem:[%s3136 + $0x5c] sm:$0xf]
    %v3161 = vld [vmem:[%s3136 + $0x60] sm:$0xf]
    %v3162 = vld [vmem:[%s3136 + $0x64] sm:$0xf]
    %v3163 = vld [vmem:[%s3136 + $0x68] sm:$0xf]
    %v3164 = vld [vmem:[%s3136 + $0x6c] sm:$0xf]
    %v3165 = vld [vmem:[%s3136 + $0x70] sm:$0xf]
    %v3166 = vld [vmem:[%s3136 + $0x74] sm:$0xf]
    %v3167 = vld [vmem:[%s3136 + $0x78] sm:$0xf]
    %v3168 = vld [vmem:[%s3136 + $0x7c] sm:$0xf]
    %v3169 = vld [vmem:[%s3136 + $0x80] sm:$0xf]
    %v3170 = vld [vmem:[%s3136 + $0x84] sm:$0xf]
    %v3171 = vld [vmem:[%s3136 + $0x88] sm:$0xf]
    %v3172 = vld [vmem:[%s3136 + $0x8c] sm:$0xf]
    %v3173 = vld [vmem:[%s3136 + $0x90] sm:$0xf]
    %v3174 = vld [vmem:[%s3136 + $0x94] sm:$0xf]
    %v3175 = vld [vmem:[%s3136 + $0x98] sm:$0xf]
    %v3176 = vld [vmem:[%s3136 + $0x9c] sm:$0xf]
    %v3177 = vld [vmem:[%s3136 + $0xa0] sm:$0xf]
    %v3178 = vld [vmem:[%s3136 + $0xa4] sm:$0xf]
    %v3179 = vld [vmem:[%s3136 + $0xa8] sm:$0xf]
    %v3180 = vld [vmem:[%s3136 + $0xac] sm:$0xf]
    %v3181 = vld [vmem:[%s3136 + $0xb0] sm:$0xf]
    %v3182 = vld [vmem:[%s3136 + $0xb4] sm:$0xf]
    %v3183 = vld [vmem:[%s3136 + $0xb8] sm:$0xf]
    %v3184 = vld [vmem:[%s3136 + $0xbc] sm:$0xf]
    %v3185 = vld [vmem:[#allocation11 + $0x6] sm:$0x1]
    %v3186 = vlaneseq
    %v3187 = vshrl.u32 %v3186, 7
    %v3188 = vsub.s32 0, %v3187
    %v3189 = vrot.slane %v3185, %v3188
    %v3238 = vunpack.c.l.b16 %v3137
    %v3239 = vunpack.c.l.b16 %v3138
    %v3240 = vunpack.c.l.b16 %v3139
    %v3241 = vunpack.c.l.b16 %v3140
    %v3242 = vunpack.c.l.b16 %v3141
    %v3243 = vunpack.c.l.b16 %v3142
    %v3244 = vunpack.c.l.b16 %v3143
    %v3245 = vunpack.c.l.b16 %v3144
    %v3246 = vunpack.c.l.b16 %v3145
    %v3247 = vunpack.c.l.b16 %v3146
    %v3248 = vunpack.c.l.b16 %v3147
    %v3249 = vunpack.c.l.b16 %v3148
    %v3250 = vunpack.c.l.b16 %v3149
    %v3251 = vunpack.c.l.b16 %v3150
    %v3252 = vunpack.c.l.b16 %v3151
    %v3253 = vunpack.c.l.b16 %v3152
    %v3254 = vunpack.c.l.b16 %v3153
    %v3255 = vunpack.c.l.b16 %v3154
    %v3256 = vunpack.c.l.b16 %v3155
    %v3257 = vunpack.c.l.b16 %v3156
    %v3258 = vunpack.c.l.b16 %v3157
    %v3259 = vunpack.c.l.b16 %v3158
    %v3260 = vunpack.c.l.b16 %v3159
    %v3261 = vunpack.c.l.b16 %v3160
    %v3262 = vunpack.c.l.b16 %v3161
    %v3263 = vunpack.c.l.b16 %v3162
    %v3264 = vunpack.c.l.b16 %v3163
    %v3265 = vunpack.c.l.b16 %v3164
    %v3266 = vunpack.c.l.b16 %v3165
    %v3267 = vunpack.c.l.b16 %v3166
    %v3268 = vunpack.c.l.b16 %v3167
    %v3269 = vunpack.c.l.b16 %v3168
    %v3270 = vunpack.c.l.b16 %v3169
    %v3271 = vunpack.c.l.b16 %v3170
    %v3272 = vunpack.c.l.b16 %v3171
    %v3273 = vunpack.c.l.b16 %v3172
    %v3274 = vunpack.c.l.b16 %v3173
    %v3275 = vunpack.c.l.b16 %v3174
    %v3276 = vunpack.c.l.b16 %v3175
    %v3277 = vunpack.c.l.b16 %v3176
    %v3278 = vunpack.c.l.b16 %v3177
    %v3279 = vunpack.c.l.b16 %v3178
    %v3280 = vunpack.c.l.b16 %v3179
    %v3281 = vunpack.c.l.b16 %v3180
    %v3282 = vunpack.c.l.b16 %v3181
    %v3283 = vunpack.c.l.b16 %v3182
    %v3284 = vunpack.c.l.b16 %v3183
    %v3285 = vunpack.c.l.b16 %v3184
    %v3286 = vpack.c.b16 %v3239, %v3238
    %v3287 = vpack.c.b16 %v3241, %v3240
    %v3288 = vpack.c.b16 %v3243, %v3242
    %v3289 = vpack.c.b16 %v3245, %v3244
    %v3290 = vpack.c.b16 %v3247, %v3246
    %v3291 = vpack.c.b16 %v3249, %v3248
    %v3292 = vpack.c.b16 %v3251, %v3250
    %v3293 = vpack.c.b16 %v3253, %v3252
    %v3294 = vpack.c.b16 %v3255, %v3254
    %v3295 = vpack.c.b16 %v3257, %v3256
    %v3296 = vpack.c.b16 %v3259, %v3258
    %v3297 = vpack.c.b16 %v3261, %v3260
    %v3298 = vpack.c.b16 %v3263, %v3262
    %v3299 = vpack.c.b16 %v3265, %v3264
    %v3300 = vpack.c.b16 %v3267, %v3266
    %v3301 = vpack.c.b16 %v3269, %v3268
    %v3302 = vpack.c.b16 %v3271, %v3270
    %v3303 = vpack.c.b16 %v3273, %v3272
    %v3304 = vpack.c.b16 %v3275, %v3274
    %v3305 = vpack.c.b16 %v3277, %v3276
    %v3306 = vpack.c.b16 %v3279, %v3278
    %v3307 = vpack.c.b16 %v3281, %v3280
    %v3308 = vpack.c.b16 %v3283, %v3282
    %v3309 = vpack.c.b16 %v3285, %v3284
    %3334 = vmatprep.subr.bf16.mxu0 0
    %3335 = vmatpush1.bf16.msra.mxu0 %v3293
    %3336 = vmatprep.subr.bf16.mxu0 0
    %3337 = vmatpush1.bf16.msra.mxu0 %v3292
    %3338 = vmatprep.subr.bf16.mxu0 0
    %3339 = vmatpush1.bf16.msra.mxu0 %v3291
    %3340 = vmatprep.subr.bf16.mxu0 0
    %3341 = vmatpush1.bf16.msra.mxu0 %v3290
    %3342 = vmatprep.subr.bf16.mxu0 0
    %3343 = vmatpush1.bf16.msra.mxu0 %v3289
    %3344 = vmatprep.subr.bf16.mxu0 0
    %3345 = vmatpush1.bf16.msra.mxu0 %v3288
    %3346 = vmatprep.subr.bf16.mxu0 0
    %3347 = vmatpush1.bf16.msra.mxu0 %v3287
    %3348 = vmatprep.subr.bf16.mxu0 0
    %3349 = vmatpush1.bf16.msra.mxu0 %v3286
    %3350 = vmatprep.subr.bf16.mxu0 0
    %3351 = vmatpush2.bf16.msra.mxu0 %v3301
    %3352 = vmatprep.subr.bf16.mxu0 0
    %3353 = vmatpush2.bf16.msra.mxu0 %v3300
    %3354 = vmatprep.subr.bf16.mxu0 0
    %3355 = vmatpush2.bf16.msra.mxu0 %v3299
    %3356 = vmatprep.subr.bf16.mxu0 0
    %3357 = vmatpush2.bf16.msra.mxu0 %v3298
    %3358 = vmatprep.subr.bf16.mxu0 0
    %3359 = vmatpush2.bf16.msra.mxu0 %v3297
    %3360 = vmatprep.subr.bf16.mxu0 0
    %3361 = vmatpush2.bf16.msra.mxu0 %v3296
    %3362 = vmatprep.subr.bf16.mxu0 0
    %3363 = vmatpush2.bf16.msra.mxu0 %v3295
    %3364 = vmatprep.subr.bf16.mxu0 0
    %3365 = vmatpush2.bf16.msra.mxu0 %v3294
    %3366 = vmatprep.mubr.bf16.mxu0 %v3134
    %3367 = vmatmul.mubr.bf16.gmra.mxu0 %v3133
    %v3368 = vpop.f32.mrf.mxu0
    %v3369 = vadd.f32 %v3189, %v3368
    %v3370 = vpop.f32.mrf.mxu0
    %v3371 = vpop.f32.mrf.mxu0
    %v3372 = vadd.f32 %v3189, %v3371
    %v3373 = vpop.f32.mrf.mxu0
    %3374 = vdwg.mxu0
    %3375 = vmatprep.subr.bf16.mxu0 0
    %3376 = vmatpush1.bf16.msra.mxu0 %v3309
    %3377 = vmatprep.subr.bf16.mxu0 0
    %3378 = vmatpush1.bf16.msra.mxu0 %v3308
    %3379 = vmatprep.subr.bf16.mxu0 0
    %3380 = vmatpush1.bf16.msra.mxu0 %v3307
    %3381 = vmatprep.subr.bf16.mxu0 0
    %3382 = vmatpush1.bf16.msra.mxu0 %v3306
    %3383 = vmatprep.subr.bf16.mxu0 0
    %3384 = vmatpush1.bf16.msra.mxu0 %v3305
    %3385 = vmatprep.subr.bf16.mxu0 0
    %3386 = vmatpush1.bf16.msra.mxu0 %v3304
    %3387 = vmatprep.subr.bf16.mxu0 0
    %3388 = vmatpush1.bf16.msra.mxu0 %v3303
    %3389 = vmatprep.subr.bf16.mxu0 0
    %3390 = vmatpush1.bf16.msra.mxu0 %v3302
    %3391 = vmatprep.subr.bf16.mxu0 0
    %3392 = vmatpush2.bf16.msra.mxu0 0
    %3393 = vmatprep.subr.bf16.mxu0 0
    %3394 = vmatpush2.bf16.msra.mxu0 0
    %3395 = vmatprep.subr.bf16.mxu0 0
    %3396 = vmatpush2.bf16.msra.mxu0 0
    %3397 = vmatprep.subr.bf16.mxu0 0
    %3398 = vmatpush2.bf16.msra.mxu0 0
    %3399 = vmatprep.subr.bf16.mxu0 0
    %3400 = vmatpush2.bf16.msra.mxu0 0
    %3401 = vmatprep.subr.bf16.mxu0 0
    %3402 = vmatpush2.bf16.msra.mxu0 0
    %3403 = vmatprep.subr.bf16.mxu0 0
    %3404 = vmatpush2.bf16.msra.mxu0 0
    %3405 = vmatprep.subr.bf16.mxu0 0
    %3406 = vmatpush2.bf16.msra.mxu0 0
    %3407 = vmatprep.mubr.bf16.mxu0 0
    %3408 = vmatmul.mubr.bf16.gmra.mxu0 %v3135
    %v3409 = vpop.f32.mrf.mxu0
    %v3410 = vadd.f32 %v3369, %v3409
    %v3411 = vpop.f32.mrf.mxu0
    %v3412 = vpop.f32.mrf.mxu0
    %v3413 = vadd.f32 %v3372, %v3412
    %v3414 = vpop.f32.mrf.mxu0
    %3415 = vdwg.mxu0
    %vm3416 = vcmp.gt.f32.partialorder %v3410, 0.0
    %vm3417 = vcmp.gt.f32.partialorder %v3413, 0.0
    %v3418 = vld [vmem:[#allocation13 + $0x6] sm:$0x1]
    %v3419 = vlaneseq
    %v3420 = vshrl.u32 %v3419, 7
    %v3421 = vsub.s32 0, %v3420
    %v3422 = vrot.slane %v3418, %v3421
    %v3423 = vmul.f32 %v3422, %v3410
    %v3424 = vmul.f32 %v3422, %v3413
    %v3425 = vsel %vm3416, %v3410, %v3423
    %v3426 = vsel %vm3417, %v3413, %v3424
    %v3427 = vrot.slane %v3425, 7
    %v3428 = vrot.slane %v3426, 7
    %v3429 = vsel %vm564, %v3427, %v3428
    %v3430 = vsel %vm564, %v3428, %v3427
    %v3431 = vsel %vm569, 0.0, %v3430
    %v3432 = vsel %vm570, 0.0, %v3429
    %v3433 = vrot.slane %v3425, 1
    %v3434 = vrot.slane %v3426, 1
    %v3435 = vsel %vm575, %v3433, %v3434
    %v3436 = vsel %vm575, %v3434, %v3433
    %v3437 = vsel %vm580, 0.0, %v3435
    %v3438 = vsel %vm581, 0.0, %v3436
    %v3439 = vpack.c.bf16 %v3432, %v3431
    %v3440 = vpack.c.bf16 %v3426, %v3425
    %v3441 = vpack.c.bf16 %v3438, %v3437
    %s3442 = scalar_lea.vmem [#allocation10], 1344
    %v3443 = vld [vmem:[%s3442] sm:$0xf]
    %v3444 = vld [vmem:[%s3442 + $0x4] sm:$0xf]
    %v3445 = vld [vmem:[%s3442 + $0x8] sm:$0xf]
    %v3446 = vld [vmem:[%s3442 + $0xc] sm:$0xf]
    %v3447 = vld [vmem:[%s3442 + $0x10] sm:$0xf]
    %v3448 = vld [vmem:[%s3442 + $0x14] sm:$0xf]
    %v3449 = vld [vmem:[%s3442 + $0x18] sm:$0xf]
    %v3450 = vld [vmem:[%s3442 + $0x1c] sm:$0xf]
    %v3451 = vld [vmem:[%s3442 + $0x20] sm:$0xf]
    %v3452 = vld [vmem:[%s3442 + $0x24] sm:$0xf]
    %v3453 = vld [vmem:[%s3442 + $0x28] sm:$0xf]
    %v3454 = vld [vmem:[%s3442 + $0x2c] sm:$0xf]
    %v3455 = vld [vmem:[%s3442 + $0x30] sm:$0xf]
    %v3456 = vld [vmem:[%s3442 + $0x34] sm:$0xf]
    %v3457 = vld [vmem:[%s3442 + $0x38] sm:$0xf]
    %v3458 = vld [vmem:[%s3442 + $0x3c] sm:$0xf]
    %v3459 = vld [vmem:[%s3442 + $0x40] sm:$0xf]
    %v3460 = vld [vmem:[%s3442 + $0x44] sm:$0xf]
    %v3461 = vld [vmem:[%s3442 + $0x48] sm:$0xf]
    %v3462 = vld [vmem:[%s3442 + $0x4c] sm:$0xf]
    %v3463 = vld [vmem:[%s3442 + $0x50] sm:$0xf]
    %v3464 = vld [vmem:[%s3442 + $0x54] sm:$0xf]
    %v3465 = vld [vmem:[%s3442 + $0x58] sm:$0xf]
    %v3466 = vld [vmem:[%s3442 + $0x5c] sm:$0xf]
    %v3467 = vld [vmem:[%s3442 + $0x60] sm:$0xf]
    %v3468 = vld [vmem:[%s3442 + $0x64] sm:$0xf]
    %v3469 = vld [vmem:[%s3442 + $0x68] sm:$0xf]
    %v3470 = vld [vmem:[%s3442 + $0x6c] sm:$0xf]
    %v3471 = vld [vmem:[%s3442 + $0x70] sm:$0xf]
    %v3472 = vld [vmem:[%s3442 + $0x74] sm:$0xf]
    %v3473 = vld [vmem:[%s3442 + $0x78] sm:$0xf]
    %v3474 = vld [vmem:[%s3442 + $0x7c] sm:$0xf]
    %v3475 = vld [vmem:[%s3442 + $0x80] sm:$0xf]
    %v3476 = vld [vmem:[%s3442 + $0x84] sm:$0xf]
    %v3477 = vld [vmem:[%s3442 + $0x88] sm:$0xf]
    %v3478 = vld [vmem:[%s3442 + $0x8c] sm:$0xf]
    %v3479 = vld [vmem:[%s3442 + $0x90] sm:$0xf]
    %v3480 = vld [vmem:[%s3442 + $0x94] sm:$0xf]
    %v3481 = vld [vmem:[%s3442 + $0x98] sm:$0xf]
    %v3482 = vld [vmem:[%s3442 + $0x9c] sm:$0xf]
    %v3483 = vld [vmem:[%s3442 + $0xa0] sm:$0xf]
    %v3484 = vld [vmem:[%s3442 + $0xa4] sm:$0xf]
    %v3485 = vld [vmem:[%s3442 + $0xa8] sm:$0xf]
    %v3486 = vld [vmem:[%s3442 + $0xac] sm:$0xf]
    %v3487 = vld [vmem:[%s3442 + $0xb0] sm:$0xf]
    %v3488 = vld [vmem:[%s3442 + $0xb4] sm:$0xf]
    %v3489 = vld [vmem:[%s3442 + $0xb8] sm:$0xf]
    %v3490 = vld [vmem:[%s3442 + $0xbc] sm:$0xf]
    %v3491 = vld [vmem:[#allocation11 + $0x7] sm:$0x1]
    %v3492 = vlaneseq
    %v3493 = vshrl.u32 %v3492, 7
    %v3494 = vsub.s32 0, %v3493
    %v3495 = vrot.slane %v3491, %v3494
    %v3544 = vunpack.c.l.b16 %v3443
    %v3545 = vunpack.c.l.b16 %v3444
    %v3546 = vunpack.c.l.b16 %v3445
    %v3547 = vunpack.c.l.b16 %v3446
    %v3548 = vunpack.c.l.b16 %v3447
    %v3549 = vunpack.c.l.b16 %v3448
    %v3550 = vunpack.c.l.b16 %v3449
    %v3551 = vunpack.c.l.b16 %v3450
    %v3552 = vunpack.c.l.b16 %v3451
    %v3553 = vunpack.c.l.b16 %v3452
    %v3554 = vunpack.c.l.b16 %v3453
    %v3555 = vunpack.c.l.b16 %v3454
    %v3556 = vunpack.c.l.b16 %v3455
    %v3557 = vunpack.c.l.b16 %v3456
    %v3558 = vunpack.c.l.b16 %v3457
    %v3559 = vunpack.c.l.b16 %v3458
    %v3560 = vunpack.c.l.b16 %v3459
    %v3561 = vunpack.c.l.b16 %v3460
    %v3562 = vunpack.c.l.b16 %v3461
    %v3563 = vunpack.c.l.b16 %v3462
    %v3564 = vunpack.c.l.b16 %v3463
    %v3565 = vunpack.c.l.b16 %v3464
    %v3566 = vunpack.c.l.b16 %v3465
    %v3567 = vunpack.c.l.b16 %v3466
    %v3568 = vunpack.c.l.b16 %v3467
    %v3569 = vunpack.c.l.b16 %v3468
    %v3570 = vunpack.c.l.b16 %v3469
    %v3571 = vunpack.c.l.b16 %v3470
    %v3572 = vunpack.c.l.b16 %v3471
    %v3573 = vunpack.c.l.b16 %v3472
    %v3574 = vunpack.c.l.b16 %v3473
    %v3575 = vunpack.c.l.b16 %v3474
    %v3576 = vunpack.c.l.b16 %v3475
    %v3577 = vunpack.c.l.b16 %v3476
    %v3578 = vunpack.c.l.b16 %v3477
    %v3579 = vunpack.c.l.b16 %v3478
    %v3580 = vunpack.c.l.b16 %v3479
    %v3581 = vunpack.c.l.b16 %v3480
    %v3582 = vunpack.c.l.b16 %v3481
    %v3583 = vunpack.c.l.b16 %v3482
    %v3584 = vunpack.c.l.b16 %v3483
    %v3585 = vunpack.c.l.b16 %v3484
    %v3586 = vunpack.c.l.b16 %v3485
    %v3587 = vunpack.c.l.b16 %v3486
    %v3588 = vunpack.c.l.b16 %v3487
    %v3589 = vunpack.c.l.b16 %v3488
    %v3590 = vunpack.c.l.b16 %v3489
    %v3591 = vunpack.c.l.b16 %v3490
    %v3592 = vpack.c.b16 %v3545, %v3544
    %v3593 = vpack.c.b16 %v3547, %v3546
    %v3594 = vpack.c.b16 %v3549, %v3548
    %v3595 = vpack.c.b16 %v3551, %v3550
    %v3596 = vpack.c.b16 %v3553, %v3552
    %v3597 = vpack.c.b16 %v3555, %v3554
    %v3598 = vpack.c.b16 %v3557, %v3556
    %v3599 = vpack.c.b16 %v3559, %v3558
    %v3600 = vpack.c.b16 %v3561, %v3560
    %v3601 = vpack.c.b16 %v3563, %v3562
    %v3602 = vpack.c.b16 %v3565, %v3564
    %v3603 = vpack.c.b16 %v3567, %v3566
    %v3604 = vpack.c.b16 %v3569, %v3568
    %v3605 = vpack.c.b16 %v3571, %v3570
    %v3606 = vpack.c.b16 %v3573, %v3572
    %v3607 = vpack.c.b16 %v3575, %v3574
    %v3608 = vpack.c.b16 %v3577, %v3576
    %v3609 = vpack.c.b16 %v3579, %v3578
    %v3610 = vpack.c.b16 %v3581, %v3580
    %v3611 = vpack.c.b16 %v3583, %v3582
    %v3612 = vpack.c.b16 %v3585, %v3584
    %v3613 = vpack.c.b16 %v3587, %v3586
    %v3614 = vpack.c.b16 %v3589, %v3588
    %v3615 = vpack.c.b16 %v3591, %v3590
    %3640 = vmatprep.subr.bf16.mxu0 0
    %3641 = vmatpush1.bf16.msra.mxu0 %v3599
    %3642 = vmatprep.subr.bf16.mxu0 0
    %3643 = vmatpush1.bf16.msra.mxu0 %v3598
    %3644 = vmatprep.subr.bf16.mxu0 0
    %3645 = vmatpush1.bf16.msra.mxu0 %v3597
    %3646 = vmatprep.subr.bf16.mxu0 0
    %3647 = vmatpush1.bf16.msra.mxu0 %v3596
    %3648 = vmatprep.subr.bf16.mxu0 0
    %3649 = vmatpush1.bf16.msra.mxu0 %v3595
    %3650 = vmatprep.subr.bf16.mxu0 0
    %3651 = vmatpush1.bf16.msra.mxu0 %v3594
    %3652 = vmatprep.subr.bf16.mxu0 0
    %3653 = vmatpush1.bf16.msra.mxu0 %v3593
    %3654 = vmatprep.subr.bf16.mxu0 0
    %3655 = vmatpush1.bf16.msra.mxu0 %v3592
    %3656 = vmatprep.subr.bf16.mxu0 0
    %3657 = vmatpush2.bf16.msra.mxu0 %v3607
    %3658 = vmatprep.subr.bf16.mxu0 0
    %3659 = vmatpush2.bf16.msra.mxu0 %v3606
    %3660 = vmatprep.subr.bf16.mxu0 0
    %3661 = vmatpush2.bf16.msra.mxu0 %v3605
    %3662 = vmatprep.subr.bf16.mxu0 0
    %3663 = vmatpush2.bf16.msra.mxu0 %v3604
    %3664 = vmatprep.subr.bf16.mxu0 0
    %3665 = vmatpush2.bf16.msra.mxu0 %v3603
    %3666 = vmatprep.subr.bf16.mxu0 0
    %3667 = vmatpush2.bf16.msra.mxu0 %v3602
    %3668 = vmatprep.subr.bf16.mxu0 0
    %3669 = vmatpush2.bf16.msra.mxu0 %v3601
    %3670 = vmatprep.subr.bf16.mxu0 0
    %3671 = vmatpush2.bf16.msra.mxu0 %v3600
    %3672 = vmatprep.mubr.bf16.mxu0 %v3440
    %3673 = vmatmul.mubr.bf16.gmra.mxu0 %v3439
    %v3674 = vpop.f32.mrf.mxu0
    %v3675 = vadd.f32 %v3495, %v3674
    %v3676 = vpop.f32.mrf.mxu0
    %v3677 = vpop.f32.mrf.mxu0
    %v3678 = vadd.f32 %v3495, %v3677
    %v3679 = vpop.f32.mrf.mxu0
    %3680 = vdwg.mxu0
    %3681 = vmatprep.subr.bf16.mxu0 0
    %3682 = vmatpush1.bf16.msra.mxu0 %v3615
    %3683 = vmatprep.subr.bf16.mxu0 0
    %3684 = vmatpush1.bf16.msra.mxu0 %v3614
    %3685 = vmatprep.subr.bf16.mxu0 0
    %3686 = vmatpush1.bf16.msra.mxu0 %v3613
    %3687 = vmatprep.subr.bf16.mxu0 0
    %3688 = vmatpush1.bf16.msra.mxu0 %v3612
    %3689 = vmatprep.subr.bf16.mxu0 0
    %3690 = vmatpush1.bf16.msra.mxu0 %v3611
    %3691 = vmatprep.subr.bf16.mxu0 0
    %3692 = vmatpush1.bf16.msra.mxu0 %v3610
    %3693 = vmatprep.subr.bf16.mxu0 0
    %3694 = vmatpush1.bf16.msra.mxu0 %v3609
    %3695 = vmatprep.subr.bf16.mxu0 0
    %3696 = vmatpush1.bf16.msra.mxu0 %v3608
    %3697 = vmatprep.subr.bf16.mxu0 0
    %3698 = vmatpush2.bf16.msra.mxu0 0
    %3699 = vmatprep.subr.bf16.mxu0 0
    %3700 = vmatpush2.bf16.msra.mxu0 0
    %3701 = vmatprep.subr.bf16.mxu0 0
    %3702 = vmatpush2.bf16.msra.mxu0 0
    %3703 = vmatprep.subr.bf16.mxu0 0
    %3704 = vmatpush2.bf16.msra.mxu0 0
    %3705 = vmatprep.subr.bf16.mxu0 0
    %3706 = vmatpush2.bf16.msra.mxu0 0
    %3707 = vmatprep.subr.bf16.mxu0 0
    %3708 = vmatpush2.bf16.msra.mxu0 0
    %3709 = vmatprep.subr.bf16.mxu0 0
    %3710 = vmatpush2.bf16.msra.mxu0 0
    %3711 = vmatprep.subr.bf16.mxu0 0
    %3712 = vmatpush2.bf16.msra.mxu0 0
    %3713 = vmatprep.mubr.bf16.mxu0 0
    %3714 = vmatmul.mubr.bf16.gmra.mxu0 %v3441
    %v3715 = vpop.f32.mrf.mxu0
    %v3716 = vadd.f32 %v3675, %v3715
    %v3717 = vpop.f32.mrf.mxu0
    %v3718 = vpop.f32.mrf.mxu0
    %v3719 = vadd.f32 %v3678, %v3718
    %v3720 = vpop.f32.mrf.mxu0
    %3721 = vdwg.mxu0
    %vm3722 = vcmp.gt.f32.partialorder %v3716, 0.0
    %vm3723 = vcmp.gt.f32.partialorder %v3719, 0.0
    %v3724 = vld [vmem:[#allocation13 + $0x7] sm:$0x1]
    %v3725 = vlaneseq
    %v3726 = vshrl.u32 %v3725, 7
    %v3727 = vsub.s32 0, %v3726
    %v3728 = vrot.slane %v3724, %v3727
    %v3729 = vmul.f32 %v3728, %v3716
    %v3730 = vmul.f32 %v3728, %v3719
    %v3731 = vsel %vm3722, %v3716, %v3729
    %v3732 = vsel %vm3723, %v3719, %v3730
    %v3733 = vpack.c.bf16 %v3732, %v3731
    %s3734 = scalar_lea.vmem [#allocation14], 256
    %v3735 = vld [vmem:[%s3734] sm:$0xff]
    %v3736 = vld [vmem:[%s3734 + $0x8] sm:$0xff]
    %v3737 = vld [vmem:[%s3734 + $0x10] sm:$0xff]
    %v3738 = vld [vmem:[%s3734 + $0x18] sm:$0xff]
    %v3739 = vld [vmem:[%s3734 + $0x20] sm:$0xff]
    %v3740 = vld [vmem:[%s3734 + $0x28] sm:$0xff]
    %v3741 = vld [vmem:[%s3734 + $0x30] sm:$0xff]
    %v3742 = vld [vmem:[%s3734 + $0x38] sm:$0xff]
    %v3743 = vld [vmem:[%s3734 + $0x40] sm:$0xff]
    %v3744 = vld [vmem:[%s3734 + $0x48] sm:$0xff]
    %v3745 = vld [vmem:[%s3734 + $0x50] sm:$0xff]
    %v3746 = vld [vmem:[%s3734 + $0x58] sm:$0xff]
    %v3747 = vld [vmem:[%s3734 + $0x60] sm:$0xff]
    %v3748 = vld [vmem:[%s3734 + $0x68] sm:$0xff]
    %v3749 = vld [vmem:[%s3734 + $0x70] sm:$0xff]
    %v3750 = vld [vmem:[%s3734 + $0x78] sm:$0xff]
    %v3751 = vld [vmem:[%s3734 + $0x80] sm:$0xff]
    %v3752 = vld [vmem:[%s3734 + $0x88] sm:$0xff]
    %v3753 = vld [vmem:[%s3734 + $0x90] sm:$0xff]
    %v3754 = vld [vmem:[%s3734 + $0x98] sm:$0xff]
    %v3755 = vld [vmem:[%s3734 + $0xa0] sm:$0xff]
    %v3756 = vld [vmem:[%s3734 + $0xa8] sm:$0xff]
    %v3757 = vld [vmem:[%s3734 + $0xb0] sm:$0xff]
    %v3758 = vld [vmem:[%s3734 + $0xb8] sm:$0xff]
    %v3759 = vld [vmem:[%s3734 + $0xc0] sm:$0xff]
    %v3760 = vld [vmem:[%s3734 + $0xc8] sm:$0xff]
    %v3761 = vld [vmem:[%s3734 + $0xd0] sm:$0xff]
    %v3762 = vld [vmem:[%s3734 + $0xd8] sm:$0xff]
    %v3763 = vld [vmem:[%s3734 + $0xe0] sm:$0xff]
    %v3764 = vld [vmem:[%s3734 + $0xe8] sm:$0xff]
    %v3765 = vld [vmem:[%s3734 + $0xf0] sm:$0xff]
    %v3766 = vld [vmem:[%s3734 + $0xf8] sm:$0xff]
    %s3767 = scalar_lea.vmem [#allocation16], 1
    %v3768 = vld [vmem:[%s3767] ss:$4 sm:$0xf]
    %v3770 = vlaneseq
    %v3771 = vshrl.u32 %v3770, 7
    %v3772 = vsub.s32 0, %v3771
    %v3773 = vrot.slane %v3768, %v3772
    %v3774 = vlaneseq
    %v3775 = vshrl.u32 %v3774, 7
    %v3776 = vsub.s32 1, %v3775
    %v3777 = vrot.slane %v3768, %v3776
    %v3778 = vlaneseq
    %v3779 = vshrl.u32 %v3778, 7
    %v3780 = vsub.s32 2, %v3779
    %v3781 = vrot.slane %v3768, %v3780
    %v3782 = vlaneseq
    %v3783 = vshrl.u32 %v3782, 7
    %v3784 = vsub.s32 3, %v3783
    %v3785 = vrot.slane %v3768, %v3784
    %v3822 = vunpack.c.l.b16 %v3735
    %v3823 = vunpack.c.h.b16 %v3735
    %v3824 = vunpack.c.l.b16 %v3736
    %v3825 = vunpack.c.h.b16 %v3736
    %v3826 = vunpack.c.l.b16 %v3737
    %v3827 = vunpack.c.h.b16 %v3737
    %v3828 = vunpack.c.l.b16 %v3738
    %v3829 = vunpack.c.h.b16 %v3738
    %v3830 = vunpack.c.l.b16 %v3739
    %v3831 = vunpack.c.h.b16 %v3739
    %v3832 = vunpack.c.l.b16 %v3740
    %v3833 = vunpack.c.h.b16 %v3740
    %v3834 = vunpack.c.l.b16 %v3741
    %v3835 = vunpack.c.h.b16 %v3741
    %v3836 = vunpack.c.l.b16 %v3742
    %v3837 = vunpack.c.h.b16 %v3742
    %v3838 = vunpack.c.l.b16 %v3743
    %v3839 = vunpack.c.h.b16 %v3743
    %v3840 = vunpack.c.l.b16 %v3744
    %v3841 = vunpack.c.h.b16 %v3744
    %v3842 = vunpack.c.l.b16 %v3745
    %v3843 = vunpack.c.h.b16 %v3745
    %v3844 = vunpack.c.l.b16 %v3746
    %v3845 = vunpack.c.h.b16 %v3746
    %v3846 = vunpack.c.l.b16 %v3747
    %v3847 = vunpack.c.h.b16 %v3747
    %v3848 = vunpack.c.l.b16 %v3748
    %v3849 = vunpack.c.h.b16 %v3748
    %v3850 = vunpack.c.l.b16 %v3749
    %v3851 = vunpack.c.h.b16 %v3749
    %v3852 = vunpack.c.l.b16 %v3750
    %v3853 = vunpack.c.h.b16 %v3750
    %v3854 = vunpack.c.l.b16 %v3751
    %v3855 = vunpack.c.h.b16 %v3751
    %v3856 = vunpack.c.l.b16 %v3752
    %v3857 = vunpack.c.h.b16 %v3752
    %v3858 = vunpack.c.l.b16 %v3753
    %v3859 = vunpack.c.h.b16 %v3753
    %v3860 = vunpack.c.l.b16 %v3754
    %v3861 = vunpack.c.h.b16 %v3754
    %v3862 = vunpack.c.l.b16 %v3755
    %v3863 = vunpack.c.h.b16 %v3755
    %v3864 = vunpack.c.l.b16 %v3756
    %v3865 = vunpack.c.h.b16 %v3756
    %v3866 = vunpack.c.l.b16 %v3757
    %v3867 = vunpack.c.h.b16 %v3757
    %v3868 = vunpack.c.l.b16 %v3758
    %v3869 = vunpack.c.h.b16 %v3758
    %v3870 = vunpack.c.l.b16 %v3759
    %v3871 = vunpack.c.h.b16 %v3759
    %v3872 = vunpack.c.l.b16 %v3760
    %v3873 = vunpack.c.h.b16 %v3760
    %v3874 = vunpack.c.l.b16 %v3761
    %v3875 = vunpack.c.h.b16 %v3761
    %v3876 = vunpack.c.l.b16 %v3762
    %v3877 = vunpack.c.h.b16 %v3762
    %v3878 = vunpack.c.l.b16 %v3763
    %v3879 = vunpack.c.h.b16 %v3763
    %v3880 = vunpack.c.l.b16 %v3764
    %v3881 = vunpack.c.h.b16 %v3764
    %v3882 = vunpack.c.l.b16 %v3765
    %v3883 = vunpack.c.h.b16 %v3765
    %v3884 = vunpack.c.l.b16 %v3766
    %v3885 = vunpack.c.h.b16 %v3766
    %v3886 = vpack.c.b16 %v3826, %v3822
    %v3887 = vpack.c.b16 %v3827, %v3823
    %v3888 = vpack.c.b16 %v3828, %v3824
    %v3889 = vpack.c.b16 %v3829, %v3825
    %v3890 = vpack.c.b16 %v3834, %v3830
    %v3891 = vpack.c.b16 %v3835, %v3831
    %v3892 = vpack.c.b16 %v3836, %v3832
    %v3893 = vpack.c.b16 %v3837, %v3833
    %v3894 = vpack.c.b16 %v3842, %v3838
    %v3895 = vpack.c.b16 %v3843, %v3839
    %v3896 = vpack.c.b16 %v3844, %v3840
    %v3897 = vpack.c.b16 %v3845, %v3841
    %v3898 = vpack.c.b16 %v3850, %v3846
    %v3899 = vpack.c.b16 %v3851, %v3847
    %v3900 = vpack.c.b16 %v3852, %v3848
    %v3901 = vpack.c.b16 %v3853, %v3849
    %v3902 = vpack.c.b16 %v3858, %v3854
    %v3903 = vpack.c.b16 %v3859, %v3855
    %v3904 = vpack.c.b16 %v3860, %v3856
    %v3905 = vpack.c.b16 %v3861, %v3857
    %v3906 = vpack.c.b16 %v3866, %v3862
    %v3907 = vpack.c.b16 %v3867, %v3863
    %v3908 = vpack.c.b16 %v3868, %v3864
    %v3909 = vpack.c.b16 %v3869, %v3865
    %v3910 = vpack.c.b16 %v3874, %v3870
    %v3911 = vpack.c.b16 %v3875, %v3871
    %v3912 = vpack.c.b16 %v3876, %v3872
    %v3913 = vpack.c.b16 %v3877, %v3873
    %v3914 = vpack.c.b16 %v3882, %v3878
    %v3915 = vpack.c.b16 %v3883, %v3879
    %v3916 = vpack.c.b16 %v3884, %v3880
    %v3917 = vpack.c.b16 %v3885, %v3881
    %3950 = vmatprep.subr.bf16.mxu0 %v3915
    %3951 = vmatpush1.bf16.msra.mxu0 %v3914
    %3952 = vmatprep.subr.bf16.mxu0 %v3911
    %3953 = vmatpush1.bf16.msra.mxu0 %v3910
    %3954 = vmatprep.subr.bf16.mxu0 %v3907
    %3955 = vmatpush1.bf16.msra.mxu0 %v3906
    %3956 = vmatprep.subr.bf16.mxu0 %v3903
    %3957 = vmatpush1.bf16.msra.mxu0 %v3902
    %3958 = vmatprep.subr.bf16.mxu0 %v3899
    %3959 = vmatpush1.bf16.msra.mxu0 %v3898
    %3960 = vmatprep.subr.bf16.mxu0 %v3895
    %3961 = vmatpush1.bf16.msra.mxu0 %v3894
    %3962 = vmatprep.subr.bf16.mxu0 %v3891
    %3963 = vmatpush1.bf16.msra.mxu0 %v3890
    %3964 = vmatprep.subr.bf16.mxu0 %v3887
    %3965 = vmatpush1.bf16.msra.mxu0 %v3886
    %3966 = vmatprep.subr.bf16.mxu0 0
    %3967 = vmatpush2.bf16.msra.mxu0 0
    %3968 = vmatprep.subr.bf16.mxu0 0
    %3969 = vmatpush2.bf16.msra.mxu0 0
    %3970 = vmatprep.subr.bf16.mxu0 0
    %3971 = vmatpush2.bf16.msra.mxu0 0
    %3972 = vmatprep.subr.bf16.mxu0 0
    %3973 = vmatpush2.bf16.msra.mxu0 0
    %3974 = vmatprep.subr.bf16.mxu0 0
    %3975 = vmatpush2.bf16.msra.mxu0 0
    %3976 = vmatprep.subr.bf16.mxu0 0
    %3977 = vmatpush2.bf16.msra.mxu0 0
    %3978 = vmatprep.subr.bf16.mxu0 0
    %3979 = vmatpush2.bf16.msra.mxu0 0
    %3980 = vmatprep.subr.bf16.mxu0 0
    %3981 = vmatpush2.bf16.msra.mxu0 0
    %3982 = vmatprep.mubr.bf16.mxu0 0
    %3983 = vmatmul.mubr.bf16.gmra.mxu0 %v3733
    %v3984 = vpop.f32.mrf.mxu0
    %v3985 = vadd.f32 %v3773, %v3984
    %v3986 = vpop.f32.mrf.mxu0
    %v3987 = vadd.f32 %v3777, %v3986
    %v3988 = vpop.f32.mrf.mxu0
    %v3989 = vadd.f32 %v3773, %v3988
    %v3990 = vpop.f32.mrf.mxu0
    %v3991 = vadd.f32 %v3777, %v3990
    %3992 = vdwg.mxu0
    %3993 = vmatprep.subr.bf16.mxu0 %v3917
    %3994 = vmatpush1.bf16.msra.mxu0 %v3916
    %3995 = vmatprep.subr.bf16.mxu0 %v3913
    %3996 = vmatpush1.bf16.msra.mxu0 %v3912
    %3997 = vmatprep.subr.bf16.mxu0 %v3909
    %3998 = vmatpush1.bf16.msra.mxu0 %v3908
    %3999 = vmatprep.subr.bf16.mxu0 %v3905
    %4000 = vmatpush1.bf16.msra.mxu0 %v3904
    %4001 = vmatprep.subr.bf16.mxu0 %v3901
    %4002 = vmatpush1.bf16.msra.mxu0 %v3900
    %4003 = vmatprep.subr.bf16.mxu0 %v3897
    %4004 = vmatpush1.bf16.msra.mxu0 %v3896
    %4005 = vmatprep.subr.bf16.mxu0 %v3893
    %4006 = vmatpush1.bf16.msra.mxu0 %v3892
    %4007 = vmatprep.subr.bf16.mxu0 %v3889
    %4008 = vmatpush1.bf16.msra.mxu0 %v3888
    %4009 = vmatprep.subr.bf16.mxu0 0
    %4010 = vmatpush2.bf16.msra.mxu0 0
    %4011 = vmatprep.subr.bf16.mxu0 0
    %4012 = vmatpush2.bf16.msra.mxu0 0
    %4013 = vmatprep.subr.bf16.mxu0 0
    %4014 = vmatpush2.bf16.msra.mxu0 0
    %4015 = vmatprep.subr.bf16.mxu0 0
    %4016 = vmatpush2.bf16.msra.mxu0 0
    %4017 = vmatprep.subr.bf16.mxu0 0
    %4018 = vmatpush2.bf16.msra.mxu0 0
    %4019 = vmatprep.subr.bf16.mxu0 0
    %4020 = vmatpush2.bf16.msra.mxu0 0
    %4021 = vmatprep.subr.bf16.mxu0 0
    %4022 = vmatpush2.bf16.msra.mxu0 0
    %4023 = vmatprep.subr.bf16.mxu0 0
    %4024 = vmatpush2.bf16.msra.mxu0 0
    %4025 = vmatprep.mubr.bf16.mxu0 0
    %4026 = vmatmul.mubr.bf16.gmra.mxu0 %v3733
    %v4027 = vpop.f32.mrf.mxu0
    %v4028 = vadd.f32 %v3781, %v4027
    %v4029 = vpop.f32.mrf.mxu0
    %v4030 = vadd.f32 %v3785, %v4029
    %v4031 = vpop.f32.mrf.mxu0
    %v4032 = vadd.f32 %v3781, %v4031
    %v4033 = vpop.f32.mrf.mxu0
    %v4034 = vadd.f32 %v3785, %v4033
    %4035 = vdwg.mxu0
    %vm4036 = vcmp.gt.f32.partialorder %v3985, 0.0
    %vm4037 = vcmp.gt.f32.partialorder %v3987, 0.0
    %vm4038 = vcmp.gt.f32.partialorder %v4028, 0.0
    %vm4039 = vcmp.gt.f32.partialorder %v4030, 0.0
    %vm4040 = vcmp.gt.f32.partialorder %v3989, 0.0
    %vm4041 = vcmp.gt.f32.partialorder %v3991, 0.0
    %vm4042 = vcmp.gt.f32.partialorder %v4032, 0.0
    %vm4043 = vcmp.gt.f32.partialorder %v4034, 0.0
    %s4044 = scalar_lea.vmem [#allocation17], 1
    %v4045 = vld [vmem:[%s4044] ss:$4 sm:$0xf]
    %v4047 = vlaneseq
    %v4048 = vshrl.u32 %v4047, 7
    %v4049 = vsub.s32 0, %v4048
    %v4050 = vrot.slane %v4045, %v4049
    %v4051 = vlaneseq
    %v4052 = vshrl.u32 %v4051, 7
    %v4053 = vsub.s32 1, %v4052
    %v4054 = vrot.slane %v4045, %v4053
    %v4055 = vlaneseq
    %v4056 = vshrl.u32 %v4055, 7
    %v4057 = vsub.s32 2, %v4056
    %v4058 = vrot.slane %v4045, %v4057
    %v4059 = vlaneseq
    %v4060 = vshrl.u32 %v4059, 7
    %v4061 = vsub.s32 3, %v4060
    %v4062 = vrot.slane %v4045, %v4061
    %v4067 = vmul.f32 %v4050, %v3985
    %v4068 = vmul.f32 %v4054, %v3987
    %v4069 = vmul.f32 %v4058, %v4028
    %v4070 = vmul.f32 %v4062, %v4030
    %v4071 = vmul.f32 %v4050, %v3989
    %v4072 = vmul.f32 %v4054, %v3991
    %v4073 = vmul.f32 %v4058, %v4032
    %v4074 = vmul.f32 %v4062, %v4034
    %v4075 = vsel %vm4036, %v3985, %v4067
    %v4076 = vsel %vm4037, %v3987, %v4068
    %v4077 = vsel %vm4038, %v4028, %v4069
    %v4078 = vsel %vm4039, %v4030, %v4070
    %v4079 = vsel %vm4040, %v3989, %v4071
    %v4080 = vsel %vm4041, %v3991, %v4072
    %v4081 = vsel %vm4042, %v4032, %v4073
    %v4082 = vsel %vm4043, %v4034, %v4074
    %v4083 = vadd.f32 %v2142, %v4075
    %v4084 = vadd.f32 %v2143, %v4076
    %v4085 = vadd.f32 %v2144, %v4077
    %v4086 = vadd.f32 %v2145, %v4078
    %v4087 = vadd.f32 %v2146, %v4079
    %v4088 = vadd.f32 %v2147, %v4080
    %v4089 = vadd.f32 %v2148, %v4081
    %v4090 = vadd.f32 %v2149, %v4082
    %v4091 = vpack.c.bf16 %v4087, %v4083
    %v4092 = vpack.c.bf16 %v4088, %v4084
    %v4093 = vpack.c.bf16 %v4089, %v4085
    %v4094 = vpack.c.bf16 %v4090, %v4086
    %s4095 = scalar_lea.vmem [#allocation5], 512
    %v4096 = vld [vmem:[%s4095] sm:$0xf]
    %v4097 = vld [vmem:[%s4095 + $0x4] sm:$0xf]
    %v4098 = vld [vmem:[%s4095 + $0x8] sm:$0xf]
    %v4099 = vld [vmem:[%s4095 + $0xc] sm:$0xf]
    %v4100 = vld [vmem:[%s4095 + $0x10] sm:$0xf]
    %v4101 = vld [vmem:[%s4095 + $0x14] sm:$0xf]
    %v4102 = vld [vmem:[%s4095 + $0x18] sm:$0xf]
    %v4103 = vld [vmem:[%s4095 + $0x1c] sm:$0xf]
    %v4104 = vld [vmem:[%s4095 + $0x20] sm:$0xf]
    %v4105 = vld [vmem:[%s4095 + $0x24] sm:$0xf]
    %v4106 = vld [vmem:[%s4095 + $0x28] sm:$0xf]
    %v4107 = vld [vmem:[%s4095 + $0x2c] sm:$0xf]
    %v4108 = vld [vmem:[%s4095 + $0x30] sm:$0xf]
    %v4109 = vld [vmem:[%s4095 + $0x34] sm:$0xf]
    %v4110 = vld [vmem:[%s4095 + $0x38] sm:$0xf]
    %v4111 = vld [vmem:[%s4095 + $0x3c] sm:$0xf]
    %v4112 = vld [vmem:[%s4095 + $0x40] sm:$0xf]
    %v4113 = vld [vmem:[%s4095 + $0x44] sm:$0xf]
    %v4114 = vld [vmem:[%s4095 + $0x48] sm:$0xf]
    %v4115 = vld [vmem:[%s4095 + $0x4c] sm:$0xf]
    %v4116 = vld [vmem:[%s4095 + $0x50] sm:$0xf]
    %v4117 = vld [vmem:[%s4095 + $0x54] sm:$0xf]
    %v4118 = vld [vmem:[%s4095 + $0x58] sm:$0xf]
    %v4119 = vld [vmem:[%s4095 + $0x5c] sm:$0xf]
    %v4120 = vld [vmem:[%s4095 + $0x60] sm:$0xf]
    %v4121 = vld [vmem:[%s4095 + $0x64] sm:$0xf]
    %v4122 = vld [vmem:[%s4095 + $0x68] sm:$0xf]
    %v4123 = vld [vmem:[%s4095 + $0x6c] sm:$0xf]
    %v4124 = vld [vmem:[%s4095 + $0x70] sm:$0xf]
    %v4125 = vld [vmem:[%s4095 + $0x74] sm:$0xf]
    %v4126 = vld [vmem:[%s4095 + $0x78] sm:$0xf]
    %v4127 = vld [vmem:[%s4095 + $0x7c] sm:$0xf]
    %v4128 = vld [vmem:[%s4095 + $0x80] sm:$0xf]
    %v4129 = vld [vmem:[%s4095 + $0x84] sm:$0xf]
    %v4130 = vld [vmem:[%s4095 + $0x88] sm:$0xf]
    %v4131 = vld [vmem:[%s4095 + $0x8c] sm:$0xf]
    %v4132 = vld [vmem:[%s4095 + $0x90] sm:$0xf]
    %v4133 = vld [vmem:[%s4095 + $0x94] sm:$0xf]
    %v4134 = vld [vmem:[%s4095 + $0x98] sm:$0xf]
    %v4135 = vld [vmem:[%s4095 + $0x9c] sm:$0xf]
    %v4136 = vld [vmem:[%s4095 + $0xa0] sm:$0xf]
    %v4137 = vld [vmem:[%s4095 + $0xa4] sm:$0xf]
    %v4138 = vld [vmem:[%s4095 + $0xa8] sm:$0xf]
    %v4139 = vld [vmem:[%s4095 + $0xac] sm:$0xf]
    %v4140 = vld [vmem:[%s4095 + $0xb0] sm:$0xf]
    %v4141 = vld [vmem:[%s4095 + $0xb4] sm:$0xf]
    %v4142 = vld [vmem:[%s4095 + $0xb8] sm:$0xf]
    %v4143 = vld [vmem:[%s4095 + $0xbc] sm:$0xf]
    %v4144 = vld [vmem:[%s4095 + $0xc0] sm:$0xf]
    %v4145 = vld [vmem:[%s4095 + $0xc4] sm:$0xf]
    %v4146 = vld [vmem:[%s4095 + $0xc8] sm:$0xf]
    %v4147 = vld [vmem:[%s4095 + $0xcc] sm:$0xf]
    %v4148 = vld [vmem:[%s4095 + $0xd0] sm:$0xf]
    %v4149 = vld [vmem:[%s4095 + $0xd4] sm:$0xf]
    %v4150 = vld [vmem:[%s4095 + $0xd8] sm:$0xf]
    %v4151 = vld [vmem:[%s4095 + $0xdc] sm:$0xf]
    %v4152 = vld [vmem:[%s4095 + $0xe0] sm:$0xf]
    %v4153 = vld [vmem:[%s4095 + $0xe4] sm:$0xf]
    %v4154 = vld [vmem:[%s4095 + $0xe8] sm:$0xf]
    %v4155 = vld [vmem:[%s4095 + $0xec] sm:$0xf]
    %v4156 = vld [vmem:[%s4095 + $0xf0] sm:$0xf]
    %v4157 = vld [vmem:[%s4095 + $0xf4] sm:$0xf]
    %v4158 = vld [vmem:[%s4095 + $0xf8] sm:$0xf]
    %v4159 = vld [vmem:[%s4095 + $0xfc] sm:$0xf]
    %v4160 = vld [vmem:[#allocation7 + $0x2] sm:$0x1]
    %v4161 = vlaneseq
    %v4162 = vshrl.u32 %v4161, 7
    %v4163 = vsub.s32 0, %v4162
    %v4164 = vrot.slane %v4160, %v4163
    %v4229 = vunpack.c.l.b16 %v4096
    %v4230 = vunpack.c.l.b16 %v4097
    %v4231 = vunpack.c.l.b16 %v4098
    %v4232 = vunpack.c.l.b16 %v4099
    %v4233 = vunpack.c.l.b16 %v4100
    %v4234 = vunpack.c.l.b16 %v4101
    %v4235 = vunpack.c.l.b16 %v4102
    %v4236 = vunpack.c.l.b16 %v4103
    %v4237 = vunpack.c.l.b16 %v4104
    %v4238 = vunpack.c.l.b16 %v4105
    %v4239 = vunpack.c.l.b16 %v4106
    %v4240 = vunpack.c.l.b16 %v4107
    %v4241 = vunpack.c.l.b16 %v4108
    %v4242 = vunpack.c.l.b16 %v4109
    %v4243 = vunpack.c.l.b16 %v4110
    %v4244 = vunpack.c.l.b16 %v4111
    %v4245 = vunpack.c.l.b16 %v4112
    %v4246 = vunpack.c.l.b16 %v4113
    %v4247 = vunpack.c.l.b16 %v4114
    %v4248 = vunpack.c.l.b16 %v4115
    %v4249 = vunpack.c.l.b16 %v4116
    %v4250 = vunpack.c.l.b16 %v4117
    %v4251 = vunpack.c.l.b16 %v4118
    %v4252 = vunpack.c.l.b16 %v4119
    %v4253 = vunpack.c.l.b16 %v4120
    %v4254 = vunpack.c.l.b16 %v4121
    %v4255 = vunpack.c.l.b16 %v4122
    %v4256 = vunpack.c.l.b16 %v4123
    %v4257 = vunpack.c.l.b16 %v4124
    %v4258 = vunpack.c.l.b16 %v4125
    %v4259 = vunpack.c.l.b16 %v4126
    %v4260 = vunpack.c.l.b16 %v4127
    %v4261 = vunpack.c.l.b16 %v4128
    %v4262 = vunpack.c.l.b16 %v4129
    %v4263 = vunpack.c.l.b16 %v4130
    %v4264 = vunpack.c.l.b16 %v4131
    %v4265 = vunpack.c.l.b16 %v4132
    %v4266 = vunpack.c.l.b16 %v4133
    %v4267 = vunpack.c.l.b16 %v4134
    %v4268 = vunpack.c.l.b16 %v4135
    %v4269 = vunpack.c.l.b16 %v4136
    %v4270 = vunpack.c.l.b16 %v4137
    %v4271 = vunpack.c.l.b16 %v4138
    %v4272 = vunpack.c.l.b16 %v4139
    %v4273 = vunpack.c.l.b16 %v4140
    %v4274 = vunpack.c.l.b16 %v4141
    %v4275 = vunpack.c.l.b16 %v4142
    %v4276 = vunpack.c.l.b16 %v4143
    %v4277 = vunpack.c.l.b16 %v4144
    %v4278 = vunpack.c.l.b16 %v4145
    %v4279 = vunpack.c.l.b16 %v4146
    %v4280 = vunpack.c.l.b16 %v4147
    %v4281 = vunpack.c.l.b16 %v4148
    %v4282 = vunpack.c.l.b16 %v4149
    %v4283 = vunpack.c.l.b16 %v4150
    %v4284 = vunpack.c.l.b16 %v4151
    %v4285 = vunpack.c.l.b16 %v4152
    %v4286 = vunpack.c.l.b16 %v4153
    %v4287 = vunpack.c.l.b16 %v4154
    %v4288 = vunpack.c.l.b16 %v4155
    %v4289 = vunpack.c.l.b16 %v4156
    %v4290 = vunpack.c.l.b16 %v4157
    %v4291 = vunpack.c.l.b16 %v4158
    %v4292 = vunpack.c.l.b16 %v4159
    %v4293 = vpack.c.b16 %v4230, %v4229
    %v4294 = vpack.c.b16 %v4232, %v4231
    %v4295 = vpack.c.b16 %v4234, %v4233
    %v4296 = vpack.c.b16 %v4236, %v4235
    %v4297 = vpack.c.b16 %v4238, %v4237
    %v4298 = vpack.c.b16 %v4240, %v4239
    %v4299 = vpack.c.b16 %v4242, %v4241
    %v4300 = vpack.c.b16 %v4244, %v4243
    %v4301 = vpack.c.b16 %v4246, %v4245
    %v4302 = vpack.c.b16 %v4248, %v4247
    %v4303 = vpack.c.b16 %v4250, %v4249
    %v4304 = vpack.c.b16 %v4252, %v4251
    %v4305 = vpack.c.b16 %v4254, %v4253
    %v4306 = vpack.c.b16 %v4256, %v4255
    %v4307 = vpack.c.b16 %v4258, %v4257
    %v4308 = vpack.c.b16 %v4260, %v4259
    %v4309 = vpack.c.b16 %v4262, %v4261
    %v4310 = vpack.c.b16 %v4264, %v4263
    %v4311 = vpack.c.b16 %v4266, %v4265
    %v4312 = vpack.c.b16 %v4268, %v4267
    %v4313 = vpack.c.b16 %v4270, %v4269
    %v4314 = vpack.c.b16 %v4272, %v4271
    %v4315 = vpack.c.b16 %v4274, %v4273
    %v4316 = vpack.c.b16 %v4276, %v4275
    %v4317 = vpack.c.b16 %v4278, %v4277
    %v4318 = vpack.c.b16 %v4280, %v4279
    %v4319 = vpack.c.b16 %v4282, %v4281
    %v4320 = vpack.c.b16 %v4284, %v4283
    %v4321 = vpack.c.b16 %v4286, %v4285
    %v4322 = vpack.c.b16 %v4288, %v4287
    %v4323 = vpack.c.b16 %v4290, %v4289
    %v4324 = vpack.c.b16 %v4292, %v4291
    %4357 = vmatprep.subr.bf16.mxu0 0
    %4358 = vmatpush1.bf16.msra.mxu0 %v4300
    %4359 = vmatprep.subr.bf16.mxu0 0
    %4360 = vmatpush1.bf16.msra.mxu0 %v4299
    %4361 = vmatprep.subr.bf16.mxu0 0
    %4362 = vmatpush1.bf16.msra.mxu0 %v4298
    %4363 = vmatprep.subr.bf16.mxu0 0
    %4364 = vmatpush1.bf16.msra.mxu0 %v4297
    %4365 = vmatprep.subr.bf16.mxu0 0
    %4366 = vmatpush1.bf16.msra.mxu0 %v4296
    %4367 = vmatprep.subr.bf16.mxu0 0
    %4368 = vmatpush1.bf16.msra.mxu0 %v4295
    %4369 = vmatprep.subr.bf16.mxu0 0
    %4370 = vmatpush1.bf16.msra.mxu0 %v4294
    %4371 = vmatprep.subr.bf16.mxu0 0
    %4372 = vmatpush1.bf16.msra.mxu0 %v4293
    %4373 = vmatprep.subr.bf16.mxu0 0
    %4374 = vmatpush2.bf16.msra.mxu0 %v4308
    %4375 = vmatprep.subr.bf16.mxu0 0
    %4376 = vmatpush2.bf16.msra.mxu0 %v4307
    %4377 = vmatprep.subr.bf16.mxu0 0
    %4378 = vmatpush2.bf16.msra.mxu0 %v4306
    %4379 = vmatprep.subr.bf16.mxu0 0
    %4380 = vmatpush2.bf16.msra.mxu0 %v4305
    %4381 = vmatprep.subr.bf16.mxu0 0
    %4382 = vmatpush2.bf16.msra.mxu0 %v4304
    %4383 = vmatprep.subr.bf16.mxu0 0
    %4384 = vmatpush2.bf16.msra.mxu0 %v4303
    %4385 = vmatprep.subr.bf16.mxu0 0
    %4386 = vmatpush2.bf16.msra.mxu0 %v4302
    %4387 = vmatprep.subr.bf16.mxu0 0
    %4388 = vmatpush2.bf16.msra.mxu0 %v4301
    %4389 = vmatprep.mubr.bf16.mxu0 %v4092
    %4390 = vmatmul.mubr.bf16.gmra.mxu0 %v4091
    %v4391 = vpop.f32.mrf.mxu0
    %v4392 = vadd.f32 %v4164, %v4391
    %v4393 = vpop.f32.mrf.mxu0
    %v4394 = vpop.f32.mrf.mxu0
    %v4395 = vadd.f32 %v4164, %v4394
    %v4396 = vpop.f32.mrf.mxu0
    %4397 = vdwg.mxu0
    %4398 = vmatprep.subr.bf16.mxu0 0
    %4399 = vmatpush1.bf16.msra.mxu0 %v4316
    %4400 = vmatprep.subr.bf16.mxu0 0
    %4401 = vmatpush1.bf16.msra.mxu0 %v4315
    %4402 = vmatprep.subr.bf16.mxu0 0
    %4403 = vmatpush1.bf16.msra.mxu0 %v4314
    %4404 = vmatprep.subr.bf16.mxu0 0
    %4405 = vmatpush1.bf16.msra.mxu0 %v4313
    %4406 = vmatprep.subr.bf16.mxu0 0
    %4407 = vmatpush1.bf16.msra.mxu0 %v4312
    %4408 = vmatprep.subr.bf16.mxu0 0
    %4409 = vmatpush1.bf16.msra.mxu0 %v4311
    %4410 = vmatprep.subr.bf16.mxu0 0
    %4411 = vmatpush1.bf16.msra.mxu0 %v4310
    %4412 = vmatprep.subr.bf16.mxu0 0
    %4413 = vmatpush1.bf16.msra.mxu0 %v4309
    %4414 = vmatprep.subr.bf16.mxu0 0
    %4415 = vmatpush2.bf16.msra.mxu0 %v4324
    %4416 = vmatprep.subr.bf16.mxu0 0
    %4417 = vmatpush2.bf16.msra.mxu0 %v4323
    %4418 = vmatprep.subr.bf16.mxu0 0
    %4419 = vmatpush2.bf16.msra.mxu0 %v4322
    %4420 = vmatprep.subr.bf16.mxu0 0
    %4421 = vmatpush2.bf16.msra.mxu0 %v4321
    %4422 = vmatprep.subr.bf16.mxu0 0
    %4423 = vmatpush2.bf16.msra.mxu0 %v4320
    %4424 = vmatprep.subr.bf16.mxu0 0
    %4425 = vmatpush2.bf16.msra.mxu0 %v4319
    %4426 = vmatprep.subr.bf16.mxu0 0
    %4427 = vmatpush2.bf16.msra.mxu0 %v4318
    %4428 = vmatprep.subr.bf16.mxu0 0
    %4429 = vmatpush2.bf16.msra.mxu0 %v4317
    %4430 = vmatprep.mubr.bf16.mxu0 %v4094
    %4431 = vmatmul.mubr.bf16.gmra.mxu0 %v4093
    %v4432 = vpop.f32.mrf.mxu0
    %v4433 = vadd.f32 %v4392, %v4432
    %v4434 = vpop.f32.mrf.mxu0
    %v4435 = vpop.f32.mrf.mxu0
    %v4436 = vadd.f32 %v4395, %v4435
    %v4437 = vpop.f32.mrf.mxu0
    %4438 = vdwg.mxu0
    %vm4439 = vcmp.gt.f32.partialorder %v4433, 0.0
    %vm4440 = vcmp.gt.f32.partialorder %v4436, 0.0
    %v4441 = vld [vmem:[#allocation8 + $0x2] sm:$0x1]
    %v4442 = vlaneseq
    %v4443 = vshrl.u32 %v4442, 7
    %v4444 = vsub.s32 0, %v4443
    %v4445 = vrot.slane %v4441, %v4444
    %v4446 = vmul.f32 %v4445, %v4433
    %v4447 = vmul.f32 %v4445, %v4436
    %v4448 = vsel %vm4439, %v4433, %v4446
    %v4449 = vsel %vm4440, %v4436, %v4447
    %v4450 = vrot.slane %v4448, 7
    %v4451 = vrot.slane %v4449, 7
    %v4452 = vsel %vm564, %v4450, %v4451
    %v4453 = vsel %vm564, %v4451, %v4450
    %v4454 = vsel %vm569, 0.0, %v4453
    %v4455 = vsel %vm570, 0.0, %v4452
    %v4456 = vrot.slane %v4448, 1
    %v4457 = vrot.slane %v4449, 1
    %v4458 = vsel %vm575, %v4456, %v4457
    %v4459 = vsel %vm575, %v4457, %v4456
    %v4460 = vsel %vm580, 0.0, %v4458
    %v4461 = vsel %vm581, 0.0, %v4459
    %v4462 = vpack.c.bf16 %v4455, %v4454
    %v4463 = vpack.c.bf16 %v4449, %v4448
    %v4464 = vpack.c.bf16 %v4461, %v4460
    %s4465 = scalar_lea.vmem [#allocation10], 1536
    %v4466 = vld [vmem:[%s4465] sm:$0xf]
    %v4467 = vld [vmem:[%s4465 + $0x4] sm:$0xf]
    %v4468 = vld [vmem:[%s4465 + $0x8] sm:$0xf]
    %v4469 = vld [vmem:[%s4465 + $0xc] sm:$0xf]
    %v4470 = vld [vmem:[%s4465 + $0x10] sm:$0xf]
    %v4471 = vld [vmem:[%s4465 + $0x14] sm:$0xf]
    %v4472 = vld [vmem:[%s4465 + $0x18] sm:$0xf]
    %v4473 = vld [vmem:[%s4465 + $0x1c] sm:$0xf]
    %v4474 = vld [vmem:[%s4465 + $0x20] sm:$0xf]
    %v4475 = vld [vmem:[%s4465 + $0x24] sm:$0xf]
    %v4476 = vld [vmem:[%s4465 + $0x28] sm:$0xf]
    %v4477 = vld [vmem:[%s4465 + $0x2c] sm:$0xf]
    %v4478 = vld [vmem:[%s4465 + $0x30] sm:$0xf]
    %v4479 = vld [vmem:[%s4465 + $0x34] sm:$0xf]
    %v4480 = vld [vmem:[%s4465 + $0x38] sm:$0xf]
    %v4481 = vld [vmem:[%s4465 + $0x3c] sm:$0xf]
    %v4482 = vld [vmem:[%s4465 + $0x40] sm:$0xf]
    %v4483 = vld [vmem:[%s4465 + $0x44] sm:$0xf]
    %v4484 = vld [vmem:[%s4465 + $0x48] sm:$0xf]
    %v4485 = vld [vmem:[%s4465 + $0x4c] sm:$0xf]
    %v4486 = vld [vmem:[%s4465 + $0x50] sm:$0xf]
    %v4487 = vld [vmem:[%s4465 + $0x54] sm:$0xf]
    %v4488 = vld [vmem:[%s4465 + $0x58] sm:$0xf]
    %v4489 = vld [vmem:[%s4465 + $0x5c] sm:$0xf]
    %v4490 = vld [vmem:[%s4465 + $0x60] sm:$0xf]
    %v4491 = vld [vmem:[%s4465 + $0x64] sm:$0xf]
    %v4492 = vld [vmem:[%s4465 + $0x68] sm:$0xf]
    %v4493 = vld [vmem:[%s4465 + $0x6c] sm:$0xf]
    %v4494 = vld [vmem:[%s4465 + $0x70] sm:$0xf]
    %v4495 = vld [vmem:[%s4465 + $0x74] sm:$0xf]
    %v4496 = vld [vmem:[%s4465 + $0x78] sm:$0xf]
    %v4497 = vld [vmem:[%s4465 + $0x7c] sm:$0xf]
    %v4498 = vld [vmem:[%s4465 + $0x80] sm:$0xf]
    %v4499 = vld [vmem:[%s4465 + $0x84] sm:$0xf]
    %v4500 = vld [vmem:[%s4465 + $0x88] sm:$0xf]
    %v4501 = vld [vmem:[%s4465 + $0x8c] sm:$0xf]
    %v4502 = vld [vmem:[%s4465 + $0x90] sm:$0xf]
    %v4503 = vld [vmem:[%s4465 + $0x94] sm:$0xf]
    %v4504 = vld [vmem:[%s4465 + $0x98] sm:$0xf]
    %v4505 = vld [vmem:[%s4465 + $0x9c] sm:$0xf]
    %v4506 = vld [vmem:[%s4465 + $0xa0] sm:$0xf]
    %v4507 = vld [vmem:[%s4465 + $0xa4] sm:$0xf]
    %v4508 = vld [vmem:[%s4465 + $0xa8] sm:$0xf]
    %v4509 = vld [vmem:[%s4465 + $0xac] sm:$0xf]
    %v4510 = vld [vmem:[%s4465 + $0xb0] sm:$0xf]
    %v4511 = vld [vmem:[%s4465 + $0xb4] sm:$0xf]
    %v4512 = vld [vmem:[%s4465 + $0xb8] sm:$0xf]
    %v4513 = vld [vmem:[%s4465 + $0xbc] sm:$0xf]
    %v4514 = vld [vmem:[#allocation11 + $0x8] sm:$0x1]
    %v4515 = vlaneseq
    %v4516 = vshrl.u32 %v4515, 7
    %v4517 = vsub.s32 0, %v4516
    %v4518 = vrot.slane %v4514, %v4517
    %v4567 = vunpack.c.l.b16 %v4466
    %v4568 = vunpack.c.l.b16 %v4467
    %v4569 = vunpack.c.l.b16 %v4468
    %v4570 = vunpack.c.l.b16 %v4469
    %v4571 = vunpack.c.l.b16 %v4470
    %v4572 = vunpack.c.l.b16 %v4471
    %v4573 = vunpack.c.l.b16 %v4472
    %v4574 = vunpack.c.l.b16 %v4473
    %v4575 = vunpack.c.l.b16 %v4474
    %v4576 = vunpack.c.l.b16 %v4475
    %v4577 = vunpack.c.l.b16 %v4476
    %v4578 = vunpack.c.l.b16 %v4477
    %v4579 = vunpack.c.l.b16 %v4478
    %v4580 = vunpack.c.l.b16 %v4479
    %v4581 = vunpack.c.l.b16 %v4480
    %v4582 = vunpack.c.l.b16 %v4481
    %v4583 = vunpack.c.l.b16 %v4482
    %v4584 = vunpack.c.l.b16 %v4483
    %v4585 = vunpack.c.l.b16 %v4484
    %v4586 = vunpack.c.l.b16 %v4485
    %v4587 = vunpack.c.l.b16 %v4486
    %v4588 = vunpack.c.l.b16 %v4487
    %v4589 = vunpack.c.l.b16 %v4488
    %v4590 = vunpack.c.l.b16 %v4489
    %v4591 = vunpack.c.l.b16 %v4490
    %v4592 = vunpack.c.l.b16 %v4491
    %v4593 = vunpack.c.l.b16 %v4492
    %v4594 = vunpack.c.l.b16 %v4493
    %v4595 = vunpack.c.l.b16 %v4494
    %v4596 = vunpack.c.l.b16 %v4495
    %v4597 = vunpack.c.l.b16 %v4496
    %v4598 = vunpack.c.l.b16 %v4497
    %v4599 = vunpack.c.l.b16 %v4498
    %v4600 = vunpack.c.l.b16 %v4499
    %v4601 = vunpack.c.l.b16 %v4500
    %v4602 = vunpack.c.l.b16 %v4501
    %v4603 = vunpack.c.l.b16 %v4502
    %v4604 = vunpack.c.l.b16 %v4503
    %v4605 = vunpack.c.l.b16 %v4504
    %v4606 = vunpack.c.l.b16 %v4505
    %v4607 = vunpack.c.l.b16 %v4506
    %v4608 = vunpack.c.l.b16 %v4507
    %v4609 = vunpack.c.l.b16 %v4508
    %v4610 = vunpack.c.l.b16 %v4509
    %v4611 = vunpack.c.l.b16 %v4510
    %v4612 = vunpack.c.l.b16 %v4511
    %v4613 = vunpack.c.l.b16 %v4512
    %v4614 = vunpack.c.l.b16 %v4513
    %v4615 = vpack.c.b16 %v4568, %v4567
    %v4616 = vpack.c.b16 %v4570, %v4569
    %v4617 = vpack.c.b16 %v4572, %v4571
    %v4618 = vpack.c.b16 %v4574, %v4573
    %v4619 = vpack.c.b16 %v4576, %v4575
    %v4620 = vpack.c.b16 %v4578, %v4577
    %v4621 = vpack.c.b16 %v4580, %v4579
    %v4622 = vpack.c.b16 %v4582, %v4581
    %v4623 = vpack.c.b16 %v4584, %v4583
    %v4624 = vpack.c.b16 %v4586, %v4585
    %v4625 = vpack.c.b16 %v4588, %v4587
    %v4626 = vpack.c.b16 %v4590, %v4589
    %v4627 = vpack.c.b16 %v4592, %v4591
    %v4628 = vpack.c.b16 %v4594, %v4593
    %v4629 = vpack.c.b16 %v4596, %v4595
    %v4630 = vpack.c.b16 %v4598, %v4597
    %v4631 = vpack.c.b16 %v4600, %v4599
    %v4632 = vpack.c.b16 %v4602, %v4601
    %v4633 = vpack.c.b16 %v4604, %v4603
    %v4634 = vpack.c.b16 %v4606, %v4605
    %v4635 = vpack.c.b16 %v4608, %v4607
    %v4636 = vpack.c.b16 %v4610, %v4609
    %v4637 = vpack.c.b16 %v4612, %v4611
    %v4638 = vpack.c.b16 %v4614, %v4613
    %4663 = vmatprep.subr.bf16.mxu0 0
    %4664 = vmatpush1.bf16.msra.mxu0 %v4622
    %4665 = vmatprep.subr.bf16.mxu0 0
    %4666 = vmatpush1.bf16.msra.mxu0 %v4621
    %4667 = vmatprep.subr.bf16.mxu0 0
    %4668 = vmatpush1.bf16.msra.mxu0 %v4620
    %4669 = vmatprep.subr.bf16.mxu0 0
    %4670 = vmatpush1.bf16.msra.mxu0 %v4619
    %4671 = vmatprep.subr.bf16.mxu0 0
    %4672 = vmatpush1.bf16.msra.mxu0 %v4618
    %4673 = vmatprep.subr.bf16.mxu0 0
    %4674 = vmatpush1.bf16.msra.mxu0 %v4617
    %4675 = vmatprep.subr.bf16.mxu0 0
    %4676 = vmatpush1.bf16.msra.mxu0 %v4616
    %4677 = vmatprep.subr.bf16.mxu0 0
    %4678 = vmatpush1.bf16.msra.mxu0 %v4615
    %4679 = vmatprep.subr.bf16.mxu0 0
    %4680 = vmatpush2.bf16.msra.mxu0 %v4630
    %4681 = vmatprep.subr.bf16.mxu0 0
    %4682 = vmatpush2.bf16.msra.mxu0 %v4629
    %4683 = vmatprep.subr.bf16.mxu0 0
    %4684 = vmatpush2.bf16.msra.mxu0 %v4628
    %4685 = vmatprep.subr.bf16.mxu0 0
    %4686 = vmatpush2.bf16.msra.mxu0 %v4627
    %4687 = vmatprep.subr.bf16.mxu0 0
    %4688 = vmatpush2.bf16.msra.mxu0 %v4626
    %4689 = vmatprep.subr.bf16.mxu0 0
    %4690 = vmatpush2.bf16.msra.mxu0 %v4625
    %4691 = vmatprep.subr.bf16.mxu0 0
    %4692 = vmatpush2.bf16.msra.mxu0 %v4624
    %4693 = vmatprep.subr.bf16.mxu0 0
    %4694 = vmatpush2.bf16.msra.mxu0 %v4623
    %4695 = vmatprep.mubr.bf16.mxu0 %v4463
    %4696 = vmatmul.mubr.bf16.gmra.mxu0 %v4462
    %v4697 = vpop.f32.mrf.mxu0
    %v4698 = vadd.f32 %v4518, %v4697
    %v4699 = vpop.f32.mrf.mxu0
    %v4700 = vpop.f32.mrf.mxu0
    %v4701 = vadd.f32 %v4518, %v4700
    %v4702 = vpop.f32.mrf.mxu0
    %4703 = vdwg.mxu0
    %4704 = vmatprep.subr.bf16.mxu0 0
    %4705 = vmatpush1.bf16.msra.mxu0 %v4638
    %4706 = vmatprep.subr.bf16.mxu0 0
    %4707 = vmatpush1.bf16.msra.mxu0 %v4637
    %4708 = vmatprep.subr.bf16.mxu0 0
    %4709 = vmatpush1.bf16.msra.mxu0 %v4636
    %4710 = vmatprep.subr.bf16.mxu0 0
    %4711 = vmatpush1.bf16.msra.mxu0 %v4635
    %4712 = vmatprep.subr.bf16.mxu0 0
    %4713 = vmatpush1.bf16.msra.mxu0 %v4634
    %4714 = vmatprep.subr.bf16.mxu0 0
    %4715 = vmatpush1.bf16.msra.mxu0 %v4633
    %4716 = vmatprep.subr.bf16.mxu0 0
    %4717 = vmatpush1.bf16.msra.mxu0 %v4632
    %4718 = vmatprep.subr.bf16.mxu0 0
    %4719 = vmatpush1.bf16.msra.mxu0 %v4631
    %4720 = vmatprep.subr.bf16.mxu0 0
    %4721 = vmatpush2.bf16.msra.mxu0 0
    %4722 = vmatprep.subr.bf16.mxu0 0
    %4723 = vmatpush2.bf16.msra.mxu0 0
    %4724 = vmatprep.subr.bf16.mxu0 0
    %4725 = vmatpush2.bf16.msra.mxu0 0
    %4726 = vmatprep.subr.bf16.mxu0 0
    %4727 = vmatpush2.bf16.msra.mxu0 0
    %4728 = vmatprep.subr.bf16.mxu0 0
    %4729 = vmatpush2.bf16.msra.mxu0 0
    %4730 = vmatprep.subr.bf16.mxu0 0
    %4731 = vmatpush2.bf16.msra.mxu0 0
    %4732 = vmatprep.subr.bf16.mxu0 0
    %4733 = vmatpush2.bf16.msra.mxu0 0
    %4734 = vmatprep.subr.bf16.mxu0 0
    %4735 = vmatpush2.bf16.msra.mxu0 0
    %4736 = vmatprep.mubr.bf16.mxu0 0
    %4737 = vmatmul.mubr.bf16.gmra.mxu0 %v4464
    %v4738 = vpop.f32.mrf.mxu0
    %v4739 = vadd.f32 %v4698, %v4738
    %v4740 = vpop.f32.mrf.mxu0
    %v4741 = vpop.f32.mrf.mxu0
    %v4742 = vadd.f32 %v4701, %v4741
    %v4743 = vpop.f32.mrf.mxu0
    %4744 = vdwg.mxu0
    %vm4745 = vcmp.gt.f32.partialorder %v4739, 0.0
    %vm4746 = vcmp.gt.f32.partialorder %v4742, 0.0
    %v4747 = vld [vmem:[#allocation13 + $0x8] sm:$0x1]
    %v4748 = vlaneseq
    %v4749 = vshrl.u32 %v4748, 7
    %v4750 = vsub.s32 0, %v4749
    %v4751 = vrot.slane %v4747, %v4750
    %v4752 = vmul.f32 %v4751, %v4739
    %v4753 = vmul.f32 %v4751, %v4742
    %v4754 = vsel %vm4745, %v4739, %v4752
    %v4755 = vsel %vm4746, %v4742, %v4753
    %v4756 = vrot.slane %v4754, 7
    %v4757 = vrot.slane %v4755, 7
    %v4758 = vsel %vm564, %v4756, %v4757
    %v4759 = vsel %vm564, %v4757, %v4756
    %v4760 = vsel %vm569, 0.0, %v4759
    %v4761 = vsel %vm570, 0.0, %v4758
    %v4762 = vrot.slane %v4754, 1
    %v4763 = vrot.slane %v4755, 1
    %v4764 = vsel %vm575, %v4762, %v4763
    %v4765 = vsel %vm575, %v4763, %v4762
    %v4766 = vsel %vm580, 0.0, %v4764
    %v4767 = vsel %vm581, 0.0, %v4765
    %v4768 = vpack.c.bf16 %v4761, %v4760
    %v4769 = vpack.c.bf16 %v4755, %v4754
    %v4770 = vpack.c.bf16 %v4767, %v4766
    %s4771 = scalar_lea.vmem [#allocation10], 1728
    %v4772 = vld [vmem:[%s4771] sm:$0xf]
    %v4773 = vld [vmem:[%s4771 + $0x4] sm:$0xf]
    %v4774 = vld [vmem:[%s4771 + $0x8] sm:$0xf]
    %v4775 = vld [vmem:[%s4771 + $0xc] sm:$0xf]
    %v4776 = vld [vmem:[%s4771 + $0x10] sm:$0xf]
    %v4777 = vld [vmem:[%s4771 + $0x14] sm:$0xf]
    %v4778 = vld [vmem:[%s4771 + $0x18] sm:$0xf]
    %v4779 = vld [vmem:[%s4771 + $0x1c] sm:$0xf]
    %v4780 = vld [vmem:[%s4771 + $0x20] sm:$0xf]
    %v4781 = vld [vmem:[%s4771 + $0x24] sm:$0xf]
    %v4782 = vld [vmem:[%s4771 + $0x28] sm:$0xf]
    %v4783 = vld [vmem:[%s4771 + $0x2c] sm:$0xf]
    %v4784 = vld [vmem:[%s4771 + $0x30] sm:$0xf]
    %v4785 = vld [vmem:[%s4771 + $0x34] sm:$0xf]
    %v4786 = vld [vmem:[%s4771 + $0x38] sm:$0xf]
    %v4787 = vld [vmem:[%s4771 + $0x3c] sm:$0xf]
    %v4788 = vld [vmem:[%s4771 + $0x40] sm:$0xf]
    %v4789 = vld [vmem:[%s4771 + $0x44] sm:$0xf]
    %v4790 = vld [vmem:[%s4771 + $0x48] sm:$0xf]
    %v4791 = vld [vmem:[%s4771 + $0x4c] sm:$0xf]
    %v4792 = vld [vmem:[%s4771 + $0x50] sm:$0xf]
    %v4793 = vld [vmem:[%s4771 + $0x54] sm:$0xf]
    %v4794 = vld [vmem:[%s4771 + $0x58] sm:$0xf]
    %v4795 = vld [vmem:[%s4771 + $0x5c] sm:$0xf]
    %v4796 = vld [vmem:[%s4771 + $0x60] sm:$0xf]
    %v4797 = vld [vmem:[%s4771 + $0x64] sm:$0xf]
    %v4798 = vld [vmem:[%s4771 + $0x68] sm:$0xf]
    %v4799 = vld [vmem:[%s4771 + $0x6c] sm:$0xf]
    %v4800 = vld [vmem:[%s4771 + $0x70] sm:$0xf]
    %v4801 = vld [vmem:[%s4771 + $0x74] sm:$0xf]
    %v4802 = vld [vmem:[%s4771 + $0x78] sm:$0xf]
    %v4803 = vld [vmem:[%s4771 + $0x7c] sm:$0xf]
    %v4804 = vld [vmem:[%s4771 + $0x80] sm:$0xf]
    %v4805 = vld [vmem:[%s4771 + $0x84] sm:$0xf]
    %v4806 = vld [vmem:[%s4771 + $0x88] sm:$0xf]
    %v4807 = vld [vmem:[%s4771 + $0x8c] sm:$0xf]
    %v4808 = vld [vmem:[%s4771 + $0x90] sm:$0xf]
    %v4809 = vld [vmem:[%s4771 + $0x94] sm:$0xf]
    %v4810 = vld [vmem:[%s4771 + $0x98] sm:$0xf]
    %v4811 = vld [vmem:[%s4771 + $0x9c] sm:$0xf]
    %v4812 = vld [vmem:[%s4771 + $0xa0] sm:$0xf]
    %v4813 = vld [vmem:[%s4771 + $0xa4] sm:$0xf]
    %v4814 = vld [vmem:[%s4771 + $0xa8] sm:$0xf]
    %v4815 = vld [vmem:[%s4771 + $0xac] sm:$0xf]
    %v4816 = vld [vmem:[%s4771 + $0xb0] sm:$0xf]
    %v4817 = vld [vmem:[%s4771 + $0xb4] sm:$0xf]
    %v4818 = vld [vmem:[%s4771 + $0xb8] sm:$0xf]
    %v4819 = vld [vmem:[%s4771 + $0xbc] sm:$0xf]
    %v4820 = vld [vmem:[#allocation11 + $0x9] sm:$0x1]
    %v4821 = vlaneseq
    %v4822 = vshrl.u32 %v4821, 7
    %v4823 = vsub.s32 0, %v4822
    %v4824 = vrot.slane %v4820, %v4823
    %v4873 = vunpack.c.l.b16 %v4772
    %v4874 = vunpack.c.l.b16 %v4773
    %v4875 = vunpack.c.l.b16 %v4774
    %v4876 = vunpack.c.l.b16 %v4775
    %v4877 = vunpack.c.l.b16 %v4776
    %v4878 = vunpack.c.l.b16 %v4777
    %v4879 = vunpack.c.l.b16 %v4778
    %v4880 = vunpack.c.l.b16 %v4779
    %v4881 = vunpack.c.l.b16 %v4780
    %v4882 = vunpack.c.l.b16 %v4781
    %v4883 = vunpack.c.l.b16 %v4782
    %v4884 = vunpack.c.l.b16 %v4783
    %v4885 = vunpack.c.l.b16 %v4784
    %v4886 = vunpack.c.l.b16 %v4785
    %v4887 = vunpack.c.l.b16 %v4786
    %v4888 = vunpack.c.l.b16 %v4787
    %v4889 = vunpack.c.l.b16 %v4788
    %v4890 = vunpack.c.l.b16 %v4789
    %v4891 = vunpack.c.l.b16 %v4790
    %v4892 = vunpack.c.l.b16 %v4791
    %v4893 = vunpack.c.l.b16 %v4792
    %v4894 = vunpack.c.l.b16 %v4793
    %v4895 = vunpack.c.l.b16 %v4794
    %v4896 = vunpack.c.l.b16 %v4795
    %v4897 = vunpack.c.l.b16 %v4796
    %v4898 = vunpack.c.l.b16 %v4797
    %v4899 = vunpack.c.l.b16 %v4798
    %v4900 = vunpack.c.l.b16 %v4799
    %v4901 = vunpack.c.l.b16 %v4800
    %v4902 = vunpack.c.l.b16 %v4801
    %v4903 = vunpack.c.l.b16 %v4802
    %v4904 = vunpack.c.l.b16 %v4803
    %v4905 = vunpack.c.l.b16 %v4804
    %v4906 = vunpack.c.l.b16 %v4805
    %v4907 = vunpack.c.l.b16 %v4806
    %v4908 = vunpack.c.l.b16 %v4807
    %v4909 = vunpack.c.l.b16 %v4808
    %v4910 = vunpack.c.l.b16 %v4809
    %v4911 = vunpack.c.l.b16 %v4810
    %v4912 = vunpack.c.l.b16 %v4811
    %v4913 = vunpack.c.l.b16 %v4812
    %v4914 = vunpack.c.l.b16 %v4813
    %v4915 = vunpack.c.l.b16 %v4814
    %v4916 = vunpack.c.l.b16 %v4815
    %v4917 = vunpack.c.l.b16 %v4816
    %v4918 = vunpack.c.l.b16 %v4817
    %v4919 = vunpack.c.l.b16 %v4818
    %v4920 = vunpack.c.l.b16 %v4819
    %v4921 = vpack.c.b16 %v4874, %v4873
    %v4922 = vpack.c.b16 %v4876, %v4875
    %v4923 = vpack.c.b16 %v4878, %v4877
    %v4924 = vpack.c.b16 %v4880, %v4879
    %v4925 = vpack.c.b16 %v4882, %v4881
    %v4926 = vpack.c.b16 %v4884, %v4883
    %v4927 = vpack.c.b16 %v4886, %v4885
    %v4928 = vpack.c.b16 %v4888, %v4887
    %v4929 = vpack.c.b16 %v4890, %v4889
    %v4930 = vpack.c.b16 %v4892, %v4891
    %v4931 = vpack.c.b16 %v4894, %v4893
    %v4932 = vpack.c.b16 %v4896, %v4895
    %v4933 = vpack.c.b16 %v4898, %v4897
    %v4934 = vpack.c.b16 %v4900, %v4899
    %v4935 = vpack.c.b16 %v4902, %v4901
    %v4936 = vpack.c.b16 %v4904, %v4903
    %v4937 = vpack.c.b16 %v4906, %v4905
    %v4938 = vpack.c.b16 %v4908, %v4907
    %v4939 = vpack.c.b16 %v4910, %v4909
    %v4940 = vpack.c.b16 %v4912, %v4911
    %v4941 = vpack.c.b16 %v4914, %v4913
    %v4942 = vpack.c.b16 %v4916, %v4915
    %v4943 = vpack.c.b16 %v4918, %v4917
    %v4944 = vpack.c.b16 %v4920, %v4919
    %4969 = vmatprep.subr.bf16.mxu0 0
    %4970 = vmatpush1.bf16.msra.mxu0 %v4928
    %4971 = vmatprep.subr.bf16.mxu0 0
    %4972 = vmatpush1.bf16.msra.mxu0 %v4927
    %4973 = vmatprep.subr.bf16.mxu0 0
    %4974 = vmatpush1.bf16.msra.mxu0 %v4926
    %4975 = vmatprep.subr.bf16.mxu0 0
    %4976 = vmatpush1.bf16.msra.mxu0 %v4925
    %4977 = vmatprep.subr.bf16.mxu0 0
    %4978 = vmatpush1.bf16.msra.mxu0 %v4924
    %4979 = vmatprep.subr.bf16.mxu0 0
    %4980 = vmatpush1.bf16.msra.mxu0 %v4923
    %4981 = vmatprep.subr.bf16.mxu0 0
    %4982 = vmatpush1.bf16.msra.mxu0 %v4922
    %4983 = vmatprep.subr.bf16.mxu0 0
    %4984 = vmatpush1.bf16.msra.mxu0 %v4921
    %4985 = vmatprep.subr.bf16.mxu0 0
    %4986 = vmatpush2.bf16.msra.mxu0 %v4936
    %4987 = vmatprep.subr.bf16.mxu0 0
    %4988 = vmatpush2.bf16.msra.mxu0 %v4935
    %4989 = vmatprep.subr.bf16.mxu0 0
    %4990 = vmatpush2.bf16.msra.mxu0 %v4934
    %4991 = vmatprep.subr.bf16.mxu0 0
    %4992 = vmatpush2.bf16.msra.mxu0 %v4933
    %4993 = vmatprep.subr.bf16.mxu0 0
    %4994 = vmatpush2.bf16.msra.mxu0 %v4932
    %4995 = vmatprep.subr.bf16.mxu0 0
    %4996 = vmatpush2.bf16.msra.mxu0 %v4931
    %4997 = vmatprep.subr.bf16.mxu0 0
    %4998 = vmatpush2.bf16.msra.mxu0 %v4930
    %4999 = vmatprep.subr.bf16.mxu0 0
    %5000 = vmatpush2.bf16.msra.mxu0 %v4929
    %5001 = vmatprep.mubr.bf16.mxu0 %v4769
    %5002 = vmatmul.mubr.bf16.gmra.mxu0 %v4768
    %v5003 = vpop.f32.mrf.mxu0
    %v5004 = vadd.f32 %v4824, %v5003
    %v5005 = vpop.f32.mrf.mxu0
    %v5006 = vpop.f32.mrf.mxu0
    %v5007 = vadd.f32 %v4824, %v5006
    %v5008 = vpop.f32.mrf.mxu0
    %5009 = vdwg.mxu0
    %5010 = vmatprep.subr.bf16.mxu0 0
    %5011 = vmatpush1.bf16.msra.mxu0 %v4944
    %5012 = vmatprep.subr.bf16.mxu0 0
    %5013 = vmatpush1.bf16.msra.mxu0 %v4943
    %5014 = vmatprep.subr.bf16.mxu0 0
    %5015 = vmatpush1.bf16.msra.mxu0 %v4942
    %5016 = vmatprep.subr.bf16.mxu0 0
    %5017 = vmatpush1.bf16.msra.mxu0 %v4941
    %5018 = vmatprep.subr.bf16.mxu0 0
    %5019 = vmatpush1.bf16.msra.mxu0 %v4940
    %5020 = vmatprep.subr.bf16.mxu0 0
    %5021 = vmatpush1.bf16.msra.mxu0 %v4939
    %5022 = vmatprep.subr.bf16.mxu0 0
    %5023 = vmatpush1.bf16.msra.mxu0 %v4938
    %5024 = vmatprep.subr.bf16.mxu0 0
    %5025 = vmatpush1.bf16.msra.mxu0 %v4937
    %5026 = vmatprep.subr.bf16.mxu0 0
    %5027 = vmatpush2.bf16.msra.mxu0 0
    %5028 = vmatprep.subr.bf16.mxu0 0
    %5029 = vmatpush2.bf16.msra.mxu0 0
    %5030 = vmatprep.subr.bf16.mxu0 0
    %5031 = vmatpush2.bf16.msra.mxu0 0
    %5032 = vmatprep.subr.bf16.mxu0 0
    %5033 = vmatpush2.bf16.msra.mxu0 0
    %5034 = vmatprep.subr.bf16.mxu0 0
    %5035 = vmatpush2.bf16.msra.mxu0 0
    %5036 = vmatprep.subr.bf16.mxu0 0
    %5037 = vmatpush2.bf16.msra.mxu0 0
    %5038 = vmatprep.subr.bf16.mxu0 0
    %5039 = vmatpush2.bf16.msra.mxu0 0
    %5040 = vmatprep.subr.bf16.mxu0 0
    %5041 = vmatpush2.bf16.msra.mxu0 0
    %5042 = vmatprep.mubr.bf16.mxu0 0
    %5043 = vmatmul.mubr.bf16.gmra.mxu0 %v4770
    %v5044 = vpop.f32.mrf.mxu0
    %v5045 = vadd.f32 %v5004, %v5044
    %v5046 = vpop.f32.mrf.mxu0
    %v5047 = vpop.f32.mrf.mxu0
    %v5048 = vadd.f32 %v5007, %v5047
    %v5049 = vpop.f32.mrf.mxu0
    %5050 = vdwg.mxu0
    %vm5051 = vcmp.gt.f32.partialorder %v5045, 0.0
    %vm5052 = vcmp.gt.f32.partialorder %v5048, 0.0
    %v5053 = vld [vmem:[#allocation13 + $0x9] sm:$0x1]
    %v5054 = vlaneseq
    %v5055 = vshrl.u32 %v5054, 7
    %v5056 = vsub.s32 0, %v5055
    %v5057 = vrot.slane %v5053, %v5056
    %v5058 = vmul.f32 %v5057, %v5045
    %v5059 = vmul.f32 %v5057, %v5048
    %v5060 = vsel %vm5051, %v5045, %v5058
    %v5061 = vsel %vm5052, %v5048, %v5059
    %v5062 = vrot.slane %v5060, 7
    %v5063 = vrot.slane %v5061, 7
    %v5064 = vsel %vm564, %v5062, %v5063
    %v5065 = vsel %vm564, %v5063, %v5062
    %v5066 = vsel %vm569, 0.0, %v5065
    %v5067 = vsel %vm570, 0.0, %v5064
    %v5068 = vrot.slane %v5060, 1
    %v5069 = vrot.slane %v5061, 1
    %v5070 = vsel %vm575, %v5068, %v5069
    %v5071 = vsel %vm575, %v5069, %v5068
    %v5072 = vsel %vm580, 0.0, %v5070
    %v5073 = vsel %vm581, 0.0, %v5071
    %v5074 = vpack.c.bf16 %v5067, %v5066
    %v5075 = vpack.c.bf16 %v5061, %v5060
    %v5076 = vpack.c.bf16 %v5073, %v5072
    %s5077 = scalar_lea.vmem [#allocation10], 1920
    %v5078 = vld [vmem:[%s5077] sm:$0xf]
    %v5079 = vld [vmem:[%s5077 + $0x4] sm:$0xf]
    %v5080 = vld [vmem:[%s5077 + $0x8] sm:$0xf]
    %v5081 = vld [vmem:[%s5077 + $0xc] sm:$0xf]
    %v5082 = vld [vmem:[%s5077 + $0x10] sm:$0xf]
    %v5083 = vld [vmem:[%s5077 + $0x14] sm:$0xf]
    %v5084 = vld [vmem:[%s5077 + $0x18] sm:$0xf]
    %v5085 = vld [vmem:[%s5077 + $0x1c] sm:$0xf]
    %v5086 = vld [vmem:[%s5077 + $0x20] sm:$0xf]
    %v5087 = vld [vmem:[%s5077 + $0x24] sm:$0xf]
    %v5088 = vld [vmem:[%s5077 + $0x28] sm:$0xf]
    %v5089 = vld [vmem:[%s5077 + $0x2c] sm:$0xf]
    %v5090 = vld [vmem:[%s5077 + $0x30] sm:$0xf]
    %v5091 = vld [vmem:[%s5077 + $0x34] sm:$0xf]
    %v5092 = vld [vmem:[%s5077 + $0x38] sm:$0xf]
    %v5093 = vld [vmem:[%s5077 + $0x3c] sm:$0xf]
    %v5094 = vld [vmem:[%s5077 + $0x40] sm:$0xf]
    %v5095 = vld [vmem:[%s5077 + $0x44] sm:$0xf]
    %v5096 = vld [vmem:[%s5077 + $0x48] sm:$0xf]
    %v5097 = vld [vmem:[%s5077 + $0x4c] sm:$0xf]
    %v5098 = vld [vmem:[%s5077 + $0x50] sm:$0xf]
    %v5099 = vld [vmem:[%s5077 + $0x54] sm:$0xf]
    %v5100 = vld [vmem:[%s5077 + $0x58] sm:$0xf]
    %v5101 = vld [vmem:[%s5077 + $0x5c] sm:$0xf]
    %v5102 = vld [vmem:[%s5077 + $0x60] sm:$0xf]
    %v5103 = vld [vmem:[%s5077 + $0x64] sm:$0xf]
    %v5104 = vld [vmem:[%s5077 + $0x68] sm:$0xf]
    %v5105 = vld [vmem:[%s5077 + $0x6c] sm:$0xf]
    %v5106 = vld [vmem:[%s5077 + $0x70] sm:$0xf]
    %v5107 = vld [vmem:[%s5077 + $0x74] sm:$0xf]
    %v5108 = vld [vmem:[%s5077 + $0x78] sm:$0xf]
    %v5109 = vld [vmem:[%s5077 + $0x7c] sm:$0xf]
    %v5110 = vld [vmem:[%s5077 + $0x80] sm:$0xf]
    %v5111 = vld [vmem:[%s5077 + $0x84] sm:$0xf]
    %v5112 = vld [vmem:[%s5077 + $0x88] sm:$0xf]
    %v5113 = vld [vmem:[%s5077 + $0x8c] sm:$0xf]
    %v5114 = vld [vmem:[%s5077 + $0x90] sm:$0xf]
    %v5115 = vld [vmem:[%s5077 + $0x94] sm:$0xf]
    %v5116 = vld [vmem:[%s5077 + $0x98] sm:$0xf]
    %v5117 = vld [vmem:[%s5077 + $0x9c] sm:$0xf]
    %v5118 = vld [vmem:[%s5077 + $0xa0] sm:$0xf]
    %v5119 = vld [vmem:[%s5077 + $0xa4] sm:$0xf]
    %v5120 = vld [vmem:[%s5077 + $0xa8] sm:$0xf]
    %v5121 = vld [vmem:[%s5077 + $0xac] sm:$0xf]
    %v5122 = vld [vmem:[%s5077 + $0xb0] sm:$0xf]
    %v5123 = vld [vmem:[%s5077 + $0xb4] sm:$0xf]
    %v5124 = vld [vmem:[%s5077 + $0xb8] sm:$0xf]
    %v5125 = vld [vmem:[%s5077 + $0xbc] sm:$0xf]
    %v5126 = vld [vmem:[#allocation11 + $0xa] sm:$0x1]
    %v5127 = vlaneseq
    %v5128 = vshrl.u32 %v5127, 7
    %v5129 = vsub.s32 0, %v5128
    %v5130 = vrot.slane %v5126, %v5129
    %v5179 = vunpack.c.l.b16 %v5078
    %v5180 = vunpack.c.l.b16 %v5079
    %v5181 = vunpack.c.l.b16 %v5080
    %v5182 = vunpack.c.l.b16 %v5081
    %v5183 = vunpack.c.l.b16 %v5082
    %v5184 = vunpack.c.l.b16 %v5083
    %v5185 = vunpack.c.l.b16 %v5084
    %v5186 = vunpack.c.l.b16 %v5085
    %v5187 = vunpack.c.l.b16 %v5086
    %v5188 = vunpack.c.l.b16 %v5087
    %v5189 = vunpack.c.l.b16 %v5088
    %v5190 = vunpack.c.l.b16 %v5089
    %v5191 = vunpack.c.l.b16 %v5090
    %v5192 = vunpack.c.l.b16 %v5091
    %v5193 = vunpack.c.l.b16 %v5092
    %v5194 = vunpack.c.l.b16 %v5093
    %v5195 = vunpack.c.l.b16 %v5094
    %v5196 = vunpack.c.l.b16 %v5095
    %v5197 = vunpack.c.l.b16 %v5096
    %v5198 = vunpack.c.l.b16 %v5097
    %v5199 = vunpack.c.l.b16 %v5098
    %v5200 = vunpack.c.l.b16 %v5099
    %v5201 = vunpack.c.l.b16 %v5100
    %v5202 = vunpack.c.l.b16 %v5101
    %v5203 = vunpack.c.l.b16 %v5102
    %v5204 = vunpack.c.l.b16 %v5103
    %v5205 = vunpack.c.l.b16 %v5104
    %v5206 = vunpack.c.l.b16 %v5105
    %v5207 = vunpack.c.l.b16 %v5106
    %v5208 = vunpack.c.l.b16 %v5107
    %v5209 = vunpack.c.l.b16 %v5108
    %v5210 = vunpack.c.l.b16 %v5109
    %v5211 = vunpack.c.l.b16 %v5110
    %v5212 = vunpack.c.l.b16 %v5111
    %v5213 = vunpack.c.l.b16 %v5112
    %v5214 = vunpack.c.l.b16 %v5113
    %v5215 = vunpack.c.l.b16 %v5114
    %v5216 = vunpack.c.l.b16 %v5115
    %v5217 = vunpack.c.l.b16 %v5116
    %v5218 = vunpack.c.l.b16 %v5117
    %v5219 = vunpack.c.l.b16 %v5118
    %v5220 = vunpack.c.l.b16 %v5119
    %v5221 = vunpack.c.l.b16 %v5120
    %v5222 = vunpack.c.l.b16 %v5121
    %v5223 = vunpack.c.l.b16 %v5122
    %v5224 = vunpack.c.l.b16 %v5123
    %v5225 = vunpack.c.l.b16 %v5124
    %v5226 = vunpack.c.l.b16 %v5125
    %v5227 = vpack.c.b16 %v5180, %v5179
    %v5228 = vpack.c.b16 %v5182, %v5181
    %v5229 = vpack.c.b16 %v5184, %v5183
    %v5230 = vpack.c.b16 %v5186, %v5185
    %v5231 = vpack.c.b16 %v5188, %v5187
    %v5232 = vpack.c.b16 %v5190, %v5189
    %v5233 = vpack.c.b16 %v5192, %v5191
    %v5234 = vpack.c.b16 %v5194, %v5193
    %v5235 = vpack.c.b16 %v5196, %v5195
    %v5236 = vpack.c.b16 %v5198, %v5197
    %v5237 = vpack.c.b16 %v5200, %v5199
    %v5238 = vpack.c.b16 %v5202, %v5201
    %v5239 = vpack.c.b16 %v5204, %v5203
    %v5240 = vpack.c.b16 %v5206, %v5205
    %v5241 = vpack.c.b16 %v5208, %v5207
    %v5242 = vpack.c.b16 %v5210, %v5209
    %v5243 = vpack.c.b16 %v5212, %v5211
    %v5244 = vpack.c.b16 %v5214, %v5213
    %v5245 = vpack.c.b16 %v5216, %v5215
    %v5246 = vpack.c.b16 %v5218, %v5217
    %v5247 = vpack.c.b16 %v5220, %v5219
    %v5248 = vpack.c.b16 %v5222, %v5221
    %v5249 = vpack.c.b16 %v5224, %v5223
    %v5250 = vpack.c.b16 %v5226, %v5225
    %5275 = vmatprep.subr.bf16.mxu0 0
    %5276 = vmatpush1.bf16.msra.mxu0 %v5234
    %5277 = vmatprep.subr.bf16.mxu0 0
    %5278 = vmatpush1.bf16.msra.mxu0 %v5233
    %5279 = vmatprep.subr.bf16.mxu0 0
    %5280 = vmatpush1.bf16.msra.mxu0 %v5232
    %5281 = vmatprep.subr.bf16.mxu0 0
    %5282 = vmatpush1.bf16.msra.mxu0 %v5231
    %5283 = vmatprep.subr.bf16.mxu0 0
    %5284 = vmatpush1.bf16.msra.mxu0 %v5230
    %5285 = vmatprep.subr.bf16.mxu0 0
    %5286 = vmatpush1.bf16.msra.mxu0 %v5229
    %5287 = vmatprep.subr.bf16.mxu0 0
    %5288 = vmatpush1.bf16.msra.mxu0 %v5228
    %5289 = vmatprep.subr.bf16.mxu0 0
    %5290 = vmatpush1.bf16.msra.mxu0 %v5227
    %5291 = vmatprep.subr.bf16.mxu0 0
    %5292 = vmatpush2.bf16.msra.mxu0 %v5242
    %5293 = vmatprep.subr.bf16.mxu0 0
    %5294 = vmatpush2.bf16.msra.mxu0 %v5241
    %5295 = vmatprep.subr.bf16.mxu0 0
    %5296 = vmatpush2.bf16.msra.mxu0 %v5240
    %5297 = vmatprep.subr.bf16.mxu0 0
    %5298 = vmatpush2.bf16.msra.mxu0 %v5239
    %5299 = vmatprep.subr.bf16.mxu0 0
    %5300 = vmatpush2.bf16.msra.mxu0 %v5238
    %5301 = vmatprep.subr.bf16.mxu0 0
    %5302 = vmatpush2.bf16.msra.mxu0 %v5237
    %5303 = vmatprep.subr.bf16.mxu0 0
    %5304 = vmatpush2.bf16.msra.mxu0 %v5236
    %5305 = vmatprep.subr.bf16.mxu0 0
    %5306 = vmatpush2.bf16.msra.mxu0 %v5235
    %5307 = vmatprep.mubr.bf16.mxu0 %v5075
    %5308 = vmatmul.mubr.bf16.gmra.mxu0 %v5074
    %v5309 = vpop.f32.mrf.mxu0
    %v5310 = vadd.f32 %v5130, %v5309
    %v5311 = vpop.f32.mrf.mxu0
    %v5312 = vpop.f32.mrf.mxu0
    %v5313 = vadd.f32 %v5130, %v5312
    %v5314 = vpop.f32.mrf.mxu0
    %5315 = vdwg.mxu0
    %5316 = vmatprep.subr.bf16.mxu0 0
    %5317 = vmatpush1.bf16.msra.mxu0 %v5250
    %5318 = vmatprep.subr.bf16.mxu0 0
    %5319 = vmatpush1.bf16.msra.mxu0 %v5249
    %5320 = vmatprep.subr.bf16.mxu0 0
    %5321 = vmatpush1.bf16.msra.mxu0 %v5248
    %5322 = vmatprep.subr.bf16.mxu0 0
    %5323 = vmatpush1.bf16.msra.mxu0 %v5247
    %5324 = vmatprep.subr.bf16.mxu0 0
    %5325 = vmatpush1.bf16.msra.mxu0 %v5246
    %5326 = vmatprep.subr.bf16.mxu0 0
    %5327 = vmatpush1.bf16.msra.mxu0 %v5245
    %5328 = vmatprep.subr.bf16.mxu0 0
    %5329 = vmatpush1.bf16.msra.mxu0 %v5244
    %5330 = vmatprep.subr.bf16.mxu0 0
    %5331 = vmatpush1.bf16.msra.mxu0 %v5243
    %5332 = vmatprep.subr.bf16.mxu0 0
    %5333 = vmatpush2.bf16.msra.mxu0 0
    %5334 = vmatprep.subr.bf16.mxu0 0
    %5335 = vmatpush2.bf16.msra.mxu0 0
    %5336 = vmatprep.subr.bf16.mxu0 0
    %5337 = vmatpush2.bf16.msra.mxu0 0
    %5338 = vmatprep.subr.bf16.mxu0 0
    %5339 = vmatpush2.bf16.msra.mxu0 0
    %5340 = vmatprep.subr.bf16.mxu0 0
    %5341 = vmatpush2.bf16.msra.mxu0 0
    %5342 = vmatprep.subr.bf16.mxu0 0
    %5343 = vmatpush2.bf16.msra.mxu0 0
    %5344 = vmatprep.subr.bf16.mxu0 0
    %5345 = vmatpush2.bf16.msra.mxu0 0
    %5346 = vmatprep.subr.bf16.mxu0 0
    %5347 = vmatpush2.bf16.msra.mxu0 0
    %5348 = vmatprep.mubr.bf16.mxu0 0
    %5349 = vmatmul.mubr.bf16.gmra.mxu0 %v5076
    %v5350 = vpop.f32.mrf.mxu0
    %v5351 = vadd.f32 %v5310, %v5350
    %v5352 = vpop.f32.mrf.mxu0
    %v5353 = vpop.f32.mrf.mxu0
    %v5354 = vadd.f32 %v5313, %v5353
    %v5355 = vpop.f32.mrf.mxu0
    %5356 = vdwg.mxu0
    %vm5357 = vcmp.gt.f32.partialorder %v5351, 0.0
    %vm5358 = vcmp.gt.f32.partialorder %v5354, 0.0
    %v5359 = vld [vmem:[#allocation13 + $0xa] sm:$0x1]
    %v5360 = vlaneseq
    %v5361 = vshrl.u32 %v5360, 7
    %v5362 = vsub.s32 0, %v5361
    %v5363 = vrot.slane %v5359, %v5362
    %v5364 = vmul.f32 %v5363, %v5351
    %v5365 = vmul.f32 %v5363, %v5354
    %v5366 = vsel %vm5357, %v5351, %v5364
    %v5367 = vsel %vm5358, %v5354, %v5365
    %v5368 = vrot.slane %v5366, 7
    %v5369 = vrot.slane %v5367, 7
    %v5370 = vsel %vm564, %v5368, %v5369
    %v5371 = vsel %vm564, %v5369, %v5368
    %v5372 = vsel %vm569, 0.0, %v5371
    %v5373 = vsel %vm570, 0.0, %v5370
    %v5374 = vrot.slane %v5366, 1
    %v5375 = vrot.slane %v5367, 1
    %v5376 = vsel %vm575, %v5374, %v5375
    %v5377 = vsel %vm575, %v5375, %v5374
    %v5378 = vsel %vm580, 0.0, %v5376
    %v5379 = vsel %vm581, 0.0, %v5377
    %v5380 = vpack.c.bf16 %v5373, %v5372
    %v5381 = vpack.c.bf16 %v5367, %v5366
    %v5382 = vpack.c.bf16 %v5379, %v5378
    %s5383 = scalar_lea.vmem [#allocation10], 2112
    %v5384 = vld [vmem:[%s5383] sm:$0xf]
    %v5385 = vld [vmem:[%s5383 + $0x4] sm:$0xf]
    %v5386 = vld [vmem:[%s5383 + $0x8] sm:$0xf]
    %v5387 = vld [vmem:[%s5383 + $0xc] sm:$0xf]
    %v5388 = vld [vmem:[%s5383 + $0x10] sm:$0xf]
    %v5389 = vld [vmem:[%s5383 + $0x14] sm:$0xf]
    %v5390 = vld [vmem:[%s5383 + $0x18] sm:$0xf]
    %v5391 = vld [vmem:[%s5383 + $0x1c] sm:$0xf]
    %v5392 = vld [vmem:[%s5383 + $0x20] sm:$0xf]
    %v5393 = vld [vmem:[%s5383 + $0x24] sm:$0xf]
    %v5394 = vld [vmem:[%s5383 + $0x28] sm:$0xf]
    %v5395 = vld [vmem:[%s5383 + $0x2c] sm:$0xf]
    %v5396 = vld [vmem:[%s5383 + $0x30] sm:$0xf]
    %v5397 = vld [vmem:[%s5383 + $0x34] sm:$0xf]
    %v5398 = vld [vmem:[%s5383 + $0x38] sm:$0xf]
    %v5399 = vld [vmem:[%s5383 + $0x3c] sm:$0xf]
    %v5400 = vld [vmem:[%s5383 + $0x40] sm:$0xf]
    %v5401 = vld [vmem:[%s5383 + $0x44] sm:$0xf]
    %v5402 = vld [vmem:[%s5383 + $0x48] sm:$0xf]
    %v5403 = vld [vmem:[%s5383 + $0x4c] sm:$0xf]
    %v5404 = vld [vmem:[%s5383 + $0x50] sm:$0xf]
    %v5405 = vld [vmem:[%s5383 + $0x54] sm:$0xf]
    %v5406 = vld [vmem:[%s5383 + $0x58] sm:$0xf]
    %v5407 = vld [vmem:[%s5383 + $0x5c] sm:$0xf]
    %v5408 = vld [vmem:[%s5383 + $0x60] sm:$0xf]
    %v5409 = vld [vmem:[%s5383 + $0x64] sm:$0xf]
    %v5410 = vld [vmem:[%s5383 + $0x68] sm:$0xf]
    %v5411 = vld [vmem:[%s5383 + $0x6c] sm:$0xf]
    %v5412 = vld [vmem:[%s5383 + $0x70] sm:$0xf]
    %v5413 = vld [vmem:[%s5383 + $0x74] sm:$0xf]
    %v5414 = vld [vmem:[%s5383 + $0x78] sm:$0xf]
    %v5415 = vld [vmem:[%s5383 + $0x7c] sm:$0xf]
    %v5416 = vld [vmem:[%s5383 + $0x80] sm:$0xf]
    %v5417 = vld [vmem:[%s5383 + $0x84] sm:$0xf]
    %v5418 = vld [vmem:[%s5383 + $0x88] sm:$0xf]
    %v5419 = vld [vmem:[%s5383 + $0x8c] sm:$0xf]
    %v5420 = vld [vmem:[%s5383 + $0x90] sm:$0xf]
    %v5421 = vld [vmem:[%s5383 + $0x94] sm:$0xf]
    %v5422 = vld [vmem:[%s5383 + $0x98] sm:$0xf]
    %v5423 = vld [vmem:[%s5383 + $0x9c] sm:$0xf]
    %v5424 = vld [vmem:[%s5383 + $0xa0] sm:$0xf]
    %v5425 = vld [vmem:[%s5383 + $0xa4] sm:$0xf]
    %v5426 = vld [vmem:[%s5383 + $0xa8] sm:$0xf]
    %v5427 = vld [vmem:[%s5383 + $0xac] sm:$0xf]
    %v5428 = vld [vmem:[%s5383 + $0xb0] sm:$0xf]
    %v5429 = vld [vmem:[%s5383 + $0xb4] sm:$0xf]
    %v5430 = vld [vmem:[%s5383 + $0xb8] sm:$0xf]
    %v5431 = vld [vmem:[%s5383 + $0xbc] sm:$0xf]
    %v5432 = vld [vmem:[#allocation11 + $0xb] sm:$0x1]
    %v5433 = vlaneseq
    %v5434 = vshrl.u32 %v5433, 7
    %v5435 = vsub.s32 0, %v5434
    %v5436 = vrot.slane %v5432, %v5435
    %v5485 = vunpack.c.l.b16 %v5384
    %v5486 = vunpack.c.l.b16 %v5385
    %v5487 = vunpack.c.l.b16 %v5386
    %v5488 = vunpack.c.l.b16 %v5387
    %v5489 = vunpack.c.l.b16 %v5388
    %v5490 = vunpack.c.l.b16 %v5389
    %v5491 = vunpack.c.l.b16 %v5390
    %v5492 = vunpack.c.l.b16 %v5391
    %v5493 = vunpack.c.l.b16 %v5392
    %v5494 = vunpack.c.l.b16 %v5393
    %v5495 = vunpack.c.l.b16 %v5394
    %v5496 = vunpack.c.l.b16 %v5395
    %v5497 = vunpack.c.l.b16 %v5396
    %v5498 = vunpack.c.l.b16 %v5397
    %v5499 = vunpack.c.l.b16 %v5398
    %v5500 = vunpack.c.l.b16 %v5399
    %v5501 = vunpack.c.l.b16 %v5400
    %v5502 = vunpack.c.l.b16 %v5401
    %v5503 = vunpack.c.l.b16 %v5402
    %v5504 = vunpack.c.l.b16 %v5403
    %v5505 = vunpack.c.l.b16 %v5404
    %v5506 = vunpack.c.l.b16 %v5405
    %v5507 = vunpack.c.l.b16 %v5406
    %v5508 = vunpack.c.l.b16 %v5407
    %v5509 = vunpack.c.l.b16 %v5408
    %v5510 = vunpack.c.l.b16 %v5409
    %v5511 = vunpack.c.l.b16 %v5410
    %v5512 = vunpack.c.l.b16 %v5411
    %v5513 = vunpack.c.l.b16 %v5412
    %v5514 = vunpack.c.l.b16 %v5413
    %v5515 = vunpack.c.l.b16 %v5414
    %v5516 = vunpack.c.l.b16 %v5415
    %v5517 = vunpack.c.l.b16 %v5416
    %v5518 = vunpack.c.l.b16 %v5417
    %v5519 = vunpack.c.l.b16 %v5418
    %v5520 = vunpack.c.l.b16 %v5419
    %v5521 = vunpack.c.l.b16 %v5420
    %v5522 = vunpack.c.l.b16 %v5421
    %v5523 = vunpack.c.l.b16 %v5422
    %v5524 = vunpack.c.l.b16 %v5423
    %v5525 = vunpack.c.l.b16 %v5424
    %v5526 = vunpack.c.l.b16 %v5425
    %v5527 = vunpack.c.l.b16 %v5426
    %v5528 = vunpack.c.l.b16 %v5427
    %v5529 = vunpack.c.l.b16 %v5428
    %v5530 = vunpack.c.l.b16 %v5429
    %v5531 = vunpack.c.l.b16 %v5430
    %v5532 = vunpack.c.l.b16 %v5431
    %v5533 = vpack.c.b16 %v5486, %v5485
    %v5534 = vpack.c.b16 %v5488, %v5487
    %v5535 = vpack.c.b16 %v5490, %v5489
    %v5536 = vpack.c.b16 %v5492, %v5491
    %v5537 = vpack.c.b16 %v5494, %v5493
    %v5538 = vpack.c.b16 %v5496, %v5495
    %v5539 = vpack.c.b16 %v5498, %v5497
    %v5540 = vpack.c.b16 %v5500, %v5499
    %v5541 = vpack.c.b16 %v5502, %v5501
    %v5542 = vpack.c.b16 %v5504, %v5503
    %v5543 = vpack.c.b16 %v5506, %v5505
    %v5544 = vpack.c.b16 %v5508, %v5507
    %v5545 = vpack.c.b16 %v5510, %v5509
    %v5546 = vpack.c.b16 %v5512, %v5511
    %v5547 = vpack.c.b16 %v5514, %v5513
    %v5548 = vpack.c.b16 %v5516, %v5515
    %v5549 = vpack.c.b16 %v5518, %v5517
    %v5550 = vpack.c.b16 %v5520, %v5519
    %v5551 = vpack.c.b16 %v5522, %v5521
    %v5552 = vpack.c.b16 %v5524, %v5523
    %v5553 = vpack.c.b16 %v5526, %v5525
    %v5554 = vpack.c.b16 %v5528, %v5527
    %v5555 = vpack.c.b16 %v5530, %v5529
    %v5556 = vpack.c.b16 %v5532, %v5531
    %5581 = vmatprep.subr.bf16.mxu0 0
    %5582 = vmatpush1.bf16.msra.mxu0 %v5540
    %5583 = vmatprep.subr.bf16.mxu0 0
    %5584 = vmatpush1.bf16.msra.mxu0 %v5539
    %5585 = vmatprep.subr.bf16.mxu0 0
    %5586 = vmatpush1.bf16.msra.mxu0 %v5538
    %5587 = vmatprep.subr.bf16.mxu0 0
    %5588 = vmatpush1.bf16.msra.mxu0 %v5537
    %5589 = vmatprep.subr.bf16.mxu0 0
    %5590 = vmatpush1.bf16.msra.mxu0 %v5536
    %5591 = vmatprep.subr.bf16.mxu0 0
    %5592 = vmatpush1.bf16.msra.mxu0 %v5535
    %5593 = vmatprep.subr.bf16.mxu0 0
    %5594 = vmatpush1.bf16.msra.mxu0 %v5534
    %5595 = vmatprep.subr.bf16.mxu0 0
    %5596 = vmatpush1.bf16.msra.mxu0 %v5533
    %5597 = vmatprep.subr.bf16.mxu0 0
    %5598 = vmatpush2.bf16.msra.mxu0 %v5548
    %5599 = vmatprep.subr.bf16.mxu0 0
    %5600 = vmatpush2.bf16.msra.mxu0 %v5547
    %5601 = vmatprep.subr.bf16.mxu0 0
    %5602 = vmatpush2.bf16.msra.mxu0 %v5546
    %5603 = vmatprep.subr.bf16.mxu0 0
    %5604 = vmatpush2.bf16.msra.mxu0 %v5545
    %5605 = vmatprep.subr.bf16.mxu0 0
    %5606 = vmatpush2.bf16.msra.mxu0 %v5544
    %5607 = vmatprep.subr.bf16.mxu0 0
    %5608 = vmatpush2.bf16.msra.mxu0 %v5543
    %5609 = vmatprep.subr.bf16.mxu0 0
    %5610 = vmatpush2.bf16.msra.mxu0 %v5542
    %5611 = vmatprep.subr.bf16.mxu0 0
    %5612 = vmatpush2.bf16.msra.mxu0 %v5541
    %5613 = vmatprep.mubr.bf16.mxu0 %v5381
    %5614 = vmatmul.mubr.bf16.gmra.mxu0 %v5380
    %v5615 = vpop.f32.mrf.mxu0
    %v5616 = vadd.f32 %v5436, %v5615
    %v5617 = vpop.f32.mrf.mxu0
    %v5618 = vpop.f32.mrf.mxu0
    %v5619 = vadd.f32 %v5436, %v5618
    %v5620 = vpop.f32.mrf.mxu0
    %5621 = vdwg.mxu0
    %5622 = vmatprep.subr.bf16.mxu0 0
    %5623 = vmatpush1.bf16.msra.mxu0 %v5556
    %5624 = vmatprep.subr.bf16.mxu0 0
    %5625 = vmatpush1.bf16.msra.mxu0 %v5555
    %5626 = vmatprep.subr.bf16.mxu0 0
    %5627 = vmatpush1.bf16.msra.mxu0 %v5554
    %5628 = vmatprep.subr.bf16.mxu0 0
    %5629 = vmatpush1.bf16.msra.mxu0 %v5553
    %5630 = vmatprep.subr.bf16.mxu0 0
    %5631 = vmatpush1.bf16.msra.mxu0 %v5552
    %5632 = vmatprep.subr.bf16.mxu0 0
    %5633 = vmatpush1.bf16.msra.mxu0 %v5551
    %5634 = vmatprep.subr.bf16.mxu0 0
    %5635 = vmatpush1.bf16.msra.mxu0 %v5550
    %5636 = vmatprep.subr.bf16.mxu0 0
    %5637 = vmatpush1.bf16.msra.mxu0 %v5549
    %5638 = vmatprep.subr.bf16.mxu0 0
    %5639 = vmatpush2.bf16.msra.mxu0 0
    %5640 = vmatprep.subr.bf16.mxu0 0
    %5641 = vmatpush2.bf16.msra.mxu0 0
    %5642 = vmatprep.subr.bf16.mxu0 0
    %5643 = vmatpush2.bf16.msra.mxu0 0
    %5644 = vmatprep.subr.bf16.mxu0 0
    %5645 = vmatpush2.bf16.msra.mxu0 0
    %5646 = vmatprep.subr.bf16.mxu0 0
    %5647 = vmatpush2.bf16.msra.mxu0 0
    %5648 = vmatprep.subr.bf16.mxu0 0
    %5649 = vmatpush2.bf16.msra.mxu0 0
    %5650 = vmatprep.subr.bf16.mxu0 0
    %5651 = vmatpush2.bf16.msra.mxu0 0
    %5652 = vmatprep.subr.bf16.mxu0 0
    %5653 = vmatpush2.bf16.msra.mxu0 0
    %5654 = vmatprep.mubr.bf16.mxu0 0
    %5655 = vmatmul.mubr.bf16.gmra.mxu0 %v5382
    %v5656 = vpop.f32.mrf.mxu0
    %v5657 = vadd.f32 %v5616, %v5656
    %v5658 = vpop.f32.mrf.mxu0
    %v5659 = vpop.f32.mrf.mxu0
    %v5660 = vadd.f32 %v5619, %v5659
    %v5661 = vpop.f32.mrf.mxu0
    %5662 = vdwg.mxu0
    %vm5663 = vcmp.gt.f32.partialorder %v5657, 0.0
    %vm5664 = vcmp.gt.f32.partialorder %v5660, 0.0
    %v5665 = vld [vmem:[#allocation13 + $0xb] sm:$0x1]
    %v5666 = vlaneseq
    %v5667 = vshrl.u32 %v5666, 7
    %v5668 = vsub.s32 0, %v5667
    %v5669 = vrot.slane %v5665, %v5668
    %v5670 = vmul.f32 %v5669, %v5657
    %v5671 = vmul.f32 %v5669, %v5660
    %v5672 = vsel %vm5663, %v5657, %v5670
    %v5673 = vsel %vm5664, %v5660, %v5671
    %v5674 = vpack.c.bf16 %v5673, %v5672
    %s5675 = scalar_lea.vmem [#allocation14], 512
    %v5676 = vld [vmem:[%s5675] sm:$0xff]
    %v5677 = vld [vmem:[%s5675 + $0x8] sm:$0xff]
    %v5678 = vld [vmem:[%s5675 + $0x10] sm:$0xff]
    %v5679 = vld [vmem:[%s5675 + $0x18] sm:$0xff]
    %v5680 = vld [vmem:[%s5675 + $0x20] sm:$0xff]
    %v5681 = vld [vmem:[%s5675 + $0x28] sm:$0xff]
    %v5682 = vld [vmem:[%s5675 + $0x30] sm:$0xff]
    %v5683 = vld [vmem:[%s5675 + $0x38] sm:$0xff]
    %v5684 = vld [vmem:[%s5675 + $0x40] sm:$0xff]
    %v5685 = vld [vmem:[%s5675 + $0x48] sm:$0xff]
    %v5686 = vld [vmem:[%s5675 + $0x50] sm:$0xff]
    %v5687 = vld [vmem:[%s5675 + $0x58] sm:$0xff]
    %v5688 = vld [vmem:[%s5675 + $0x60] sm:$0xff]
    %v5689 = vld [vmem:[%s5675 + $0x68] sm:$0xff]
    %v5690 = vld [vmem:[%s5675 + $0x70] sm:$0xff]
    %v5691 = vld [vmem:[%s5675 + $0x78] sm:$0xff]
    %v5692 = vld [vmem:[%s5675 + $0x80] sm:$0xff]
    %v5693 = vld [vmem:[%s5675 + $0x88] sm:$0xff]
    %v5694 = vld [vmem:[%s5675 + $0x90] sm:$0xff]
    %v5695 = vld [vmem:[%s5675 + $0x98] sm:$0xff]
    %v5696 = vld [vmem:[%s5675 + $0xa0] sm:$0xff]
    %v5697 = vld [vmem:[%s5675 + $0xa8] sm:$0xff]
    %v5698 = vld [vmem:[%s5675 + $0xb0] sm:$0xff]
    %v5699 = vld [vmem:[%s5675 + $0xb8] sm:$0xff]
    %v5700 = vld [vmem:[%s5675 + $0xc0] sm:$0xff]
    %v5701 = vld [vmem:[%s5675 + $0xc8] sm:$0xff]
    %v5702 = vld [vmem:[%s5675 + $0xd0] sm:$0xff]
    %v5703 = vld [vmem:[%s5675 + $0xd8] sm:$0xff]
    %v5704 = vld [vmem:[%s5675 + $0xe0] sm:$0xff]
    %v5705 = vld [vmem:[%s5675 + $0xe8] sm:$0xff]
    %v5706 = vld [vmem:[%s5675 + $0xf0] sm:$0xff]
    %v5707 = vld [vmem:[%s5675 + $0xf8] sm:$0xff]
    %s5708 = scalar_lea.vmem [#allocation16], 2
    %v5709 = vld [vmem:[%s5708] ss:$4 sm:$0xf]
    %v5711 = vlaneseq
    %v5712 = vshrl.u32 %v5711, 7
    %v5713 = vsub.s32 0, %v5712
    %v5714 = vrot.slane %v5709, %v5713
    %v5715 = vlaneseq
    %v5716 = vshrl.u32 %v5715, 7
    %v5717 = vsub.s32 1, %v5716
    %v5718 = vrot.slane %v5709, %v5717
    %v5719 = vlaneseq
    %v5720 = vshrl.u32 %v5719, 7
    %v5721 = vsub.s32 2, %v5720
    %v5722 = vrot.slane %v5709, %v5721
    %v5723 = vlaneseq
    %v5724 = vshrl.u32 %v5723, 7
    %v5725 = vsub.s32 3, %v5724
    %v5726 = vrot.slane %v5709, %v5725
    %v5763 = vunpack.c.l.b16 %v5676
    %v5764 = vunpack.c.h.b16 %v5676
    %v5765 = vunpack.c.l.b16 %v5677
    %v5766 = vunpack.c.h.b16 %v5677
    %v5767 = vunpack.c.l.b16 %v5678
    %v5768 = vunpack.c.h.b16 %v5678
    %v5769 = vunpack.c.l.b16 %v5679
    %v5770 = vunpack.c.h.b16 %v5679
    %v5771 = vunpack.c.l.b16 %v5680
    %v5772 = vunpack.c.h.b16 %v5680
    %v5773 = vunpack.c.l.b16 %v5681
    %v5774 = vunpack.c.h.b16 %v5681
    %v5775 = vunpack.c.l.b16 %v5682
    %v5776 = vunpack.c.h.b16 %v5682
    %v5777 = vunpack.c.l.b16 %v5683
    %v5778 = vunpack.c.h.b16 %v5683
    %v5779 = vunpack.c.l.b16 %v5684
    %v5780 = vunpack.c.h.b16 %v5684
    %v5781 = vunpack.c.l.b16 %v5685
    %v5782 = vunpack.c.h.b16 %v5685
    %v5783 = vunpack.c.l.b16 %v5686
    %v5784 = vunpack.c.h.b16 %v5686
    %v5785 = vunpack.c.l.b16 %v5687
    %v5786 = vunpack.c.h.b16 %v5687
    %v5787 = vunpack.c.l.b16 %v5688
    %v5788 = vunpack.c.h.b16 %v5688
    %v5789 = vunpack.c.l.b16 %v5689
    %v5790 = vunpack.c.h.b16 %v5689
    %v5791 = vunpack.c.l.b16 %v5690
    %v5792 = vunpack.c.h.b16 %v5690
    %v5793 = vunpack.c.l.b16 %v5691
    %v5794 = vunpack.c.h.b16 %v5691
    %v5795 = vunpack.c.l.b16 %v5692
    %v5796 = vunpack.c.h.b16 %v5692
    %v5797 = vunpack.c.l.b16 %v5693
    %v5798 = vunpack.c.h.b16 %v5693
    %v5799 = vunpack.c.l.b16 %v5694
    %v5800 = vunpack.c.h.b16 %v5694
    %v5801 = vunpack.c.l.b16 %v5695
    %v5802 = vunpack.c.h.b16 %v5695
    %v5803 = vunpack.c.l.b16 %v5696
    %v5804 = vunpack.c.h.b16 %v5696
    %v5805 = vunpack.c.l.b16 %v5697
    %v5806 = vunpack.c.h.b16 %v5697
    %v5807 = vunpack.c.l.b16 %v5698
    %v5808 = vunpack.c.h.b16 %v5698
    %v5809 = vunpack.c.l.b16 %v5699
    %v5810 = vunpack.c.h.b16 %v5699
    %v5811 = vunpack.c.l.b16 %v5700
    %v5812 = vunpack.c.h.b16 %v5700
    %v5813 = vunpack.c.l.b16 %v5701
    %v5814 = vunpack.c.h.b16 %v5701
    %v5815 = vunpack.c.l.b16 %v5702
    %v5816 = vunpack.c.h.b16 %v5702
    %v5817 = vunpack.c.l.b16 %v5703
    %v5818 = vunpack.c.h.b16 %v5703
    %v5819 = vunpack.c.l.b16 %v5704
    %v5820 = vunpack.c.h.b16 %v5704
    %v5821 = vunpack.c.l.b16 %v5705
    %v5822 = vunpack.c.h.b16 %v5705
    %v5823 = vunpack.c.l.b16 %v5706
    %v5824 = vunpack.c.h.b16 %v5706
    %v5825 = vunpack.c.l.b16 %v5707
    %v5826 = vunpack.c.h.b16 %v5707
    %v5827 = vpack.c.b16 %v5767, %v5763
    %v5828 = vpack.c.b16 %v5768, %v5764
    %v5829 = vpack.c.b16 %v5769, %v5765
    %v5830 = vpack.c.b16 %v5770, %v5766
    %v5831 = vpack.c.b16 %v5775, %v5771
    %v5832 = vpack.c.b16 %v5776, %v5772
    %v5833 = vpack.c.b16 %v5777, %v5773
    %v5834 = vpack.c.b16 %v5778, %v5774
    %v5835 = vpack.c.b16 %v5783, %v5779
    %v5836 = vpack.c.b16 %v5784, %v5780
    %v5837 = vpack.c.b16 %v5785, %v5781
    %v5838 = vpack.c.b16 %v5786, %v5782
    %v5839 = vpack.c.b16 %v5791, %v5787
    %v5840 = vpack.c.b16 %v5792, %v5788
    %v5841 = vpack.c.b16 %v5793, %v5789
    %v5842 = vpack.c.b16 %v5794, %v5790
    %v5843 = vpack.c.b16 %v5799, %v5795
    %v5844 = vpack.c.b16 %v5800, %v5796
    %v5845 = vpack.c.b16 %v5801, %v5797
    %v5846 = vpack.c.b16 %v5802, %v5798
    %v5847 = vpack.c.b16 %v5807, %v5803
    %v5848 = vpack.c.b16 %v5808, %v5804
    %v5849 = vpack.c.b16 %v5809, %v5805
    %v5850 = vpack.c.b16 %v5810, %v5806
    %v5851 = vpack.c.b16 %v5815, %v5811
    %v5852 = vpack.c.b16 %v5816, %v5812
    %v5853 = vpack.c.b16 %v5817, %v5813
    %v5854 = vpack.c.b16 %v5818, %v5814
    %v5855 = vpack.c.b16 %v5823, %v5819
    %v5856 = vpack.c.b16 %v5824, %v5820
    %v5857 = vpack.c.b16 %v5825, %v5821
    %v5858 = vpack.c.b16 %v5826, %v5822
    %5891 = vmatprep.subr.bf16.mxu0 %v5856
    %5892 = vmatpush1.bf16.msra.mxu0 %v5855
    %5893 = vmatprep.subr.bf16.mxu0 %v5852
    %5894 = vmatpush1.bf16.msra.mxu0 %v5851
    %5895 = vmatprep.subr.bf16.mxu0 %v5848
    %5896 = vmatpush1.bf16.msra.mxu0 %v5847
    %5897 = vmatprep.subr.bf16.mxu0 %v5844
    %5898 = vmatpush1.bf16.msra.mxu0 %v5843
    %5899 = vmatprep.subr.bf16.mxu0 %v5840
    %5900 = vmatpush1.bf16.msra.mxu0 %v5839
    %5901 = vmatprep.subr.bf16.mxu0 %v5836
    %5902 = vmatpush1.bf16.msra.mxu0 %v5835
    %5903 = vmatprep.subr.bf16.mxu0 %v5832
    %5904 = vmatpush1.bf16.msra.mxu0 %v5831
    %5905 = vmatprep.subr.bf16.mxu0 %v5828
    %5906 = vmatpush1.bf16.msra.mxu0 %v5827
    %5907 = vmatprep.subr.bf16.mxu0 0
    %5908 = vmatpush2.bf16.msra.mxu0 0
    %5909 = vmatprep.subr.bf16.mxu0 0
    %5910 = vmatpush2.bf16.msra.mxu0 0
    %5911 = vmatprep.subr.bf16.mxu0 0
    %5912 = vmatpush2.bf16.msra.mxu0 0
    %5913 = vmatprep.subr.bf16.mxu0 0
    %5914 = vmatpush2.bf16.msra.mxu0 0
    %5915 = vmatprep.subr.bf16.mxu0 0
    %5916 = vmatpush2.bf16.msra.mxu0 0
    %5917 = vmatprep.subr.bf16.mxu0 0
    %5918 = vmatpush2.bf16.msra.mxu0 0
    %5919 = vmatprep.subr.bf16.mxu0 0
    %5920 = vmatpush2.bf16.msra.mxu0 0
    %5921 = vmatprep.subr.bf16.mxu0 0
    %5922 = vmatpush2.bf16.msra.mxu0 0
    %5923 = vmatprep.mubr.bf16.mxu0 0
    %5924 = vmatmul.mubr.bf16.gmra.mxu0 %v5674
    %v5925 = vpop.f32.mrf.mxu0
    %v5926 = vadd.f32 %v5714, %v5925
    %v5927 = vpop.f32.mrf.mxu0
    %v5928 = vadd.f32 %v5718, %v5927
    %v5929 = vpop.f32.mrf.mxu0
    %v5930 = vadd.f32 %v5714, %v5929
    %v5931 = vpop.f32.mrf.mxu0
    %v5932 = vadd.f32 %v5718, %v5931
    %5933 = vdwg.mxu0
    %5934 = vmatprep.subr.bf16.mxu0 %v5858
    %5935 = vmatpush1.bf16.msra.mxu0 %v5857
    %5936 = vmatprep.subr.bf16.mxu0 %v5854
    %5937 = vmatpush1.bf16.msra.mxu0 %v5853
    %5938 = vmatprep.subr.bf16.mxu0 %v5850
    %5939 = vmatpush1.bf16.msra.mxu0 %v5849
    %5940 = vmatprep.subr.bf16.mxu0 %v5846
    %5941 = vmatpush1.bf16.msra.mxu0 %v5845
    %5942 = vmatprep.subr.bf16.mxu0 %v5842
    %5943 = vmatpush1.bf16.msra.mxu0 %v5841
    %5944 = vmatprep.subr.bf16.mxu0 %v5838
    %5945 = vmatpush1.bf16.msra.mxu0 %v5837
    %5946 = vmatprep.subr.bf16.mxu0 %v5834
    %5947 = vmatpush1.bf16.msra.mxu0 %v5833
    %5948 = vmatprep.subr.bf16.mxu0 %v5830
    %5949 = vmatpush1.bf16.msra.mxu0 %v5829
    %5950 = vmatprep.subr.bf16.mxu0 0
    %5951 = vmatpush2.bf16.msra.mxu0 0
    %5952 = vmatprep.subr.bf16.mxu0 0
    %5953 = vmatpush2.bf16.msra.mxu0 0
    %5954 = vmatprep.subr.bf16.mxu0 0
    %5955 = vmatpush2.bf16.msra.mxu0 0
    %5956 = vmatprep.subr.bf16.mxu0 0
    %5957 = vmatpush2.bf16.msra.mxu0 0
    %5958 = vmatprep.subr.bf16.mxu0 0
    %5959 = vmatpush2.bf16.msra.mxu0 0
    %5960 = vmatprep.subr.bf16.mxu0 0
    %5961 = vmatpush2.bf16.msra.mxu0 0
    %5962 = vmatprep.subr.bf16.mxu0 0
    %5963 = vmatpush2.bf16.msra.mxu0 0
    %5964 = vmatprep.subr.bf16.mxu0 0
    %5965 = vmatpush2.bf16.msra.mxu0 0
    %5966 = vmatprep.mubr.bf16.mxu0 0
    %5967 = vmatmul.mubr.bf16.gmra.mxu0 %v5674
    %v5968 = vpop.f32.mrf.mxu0
    %v5969 = vadd.f32 %v5722, %v5968
    %v5970 = vpop.f32.mrf.mxu0
    %v5971 = vadd.f32 %v5726, %v5970
    %v5972 = vpop.f32.mrf.mxu0
    %v5973 = vadd.f32 %v5722, %v5972
    %v5974 = vpop.f32.mrf.mxu0
    %v5975 = vadd.f32 %v5726, %v5974
    %5976 = vdwg.mxu0
    %vm5977 = vcmp.gt.f32.partialorder %v5926, 0.0
    %vm5978 = vcmp.gt.f32.partialorder %v5928, 0.0
    %vm5979 = vcmp.gt.f32.partialorder %v5969, 0.0
    %vm5980 = vcmp.gt.f32.partialorder %v5971, 0.0
    %vm5981 = vcmp.gt.f32.partialorder %v5930, 0.0
    %vm5982 = vcmp.gt.f32.partialorder %v5932, 0.0
    %vm5983 = vcmp.gt.f32.partialorder %v5973, 0.0
    %vm5984 = vcmp.gt.f32.partialorder %v5975, 0.0
    %s5985 = scalar_lea.vmem [#allocation17], 2
    %v5986 = vld [vmem:[%s5985] ss:$4 sm:$0xf]
    %v5988 = vlaneseq
    %v5989 = vshrl.u32 %v5988, 7
    %v5990 = vsub.s32 0, %v5989
    %v5991 = vrot.slane %v5986, %v5990
    %v5992 = vlaneseq
    %v5993 = vshrl.u32 %v5992, 7
    %v5994 = vsub.s32 1, %v5993
    %v5995 = vrot.slane %v5986, %v5994
    %v5996 = vlaneseq
    %v5997 = vshrl.u32 %v5996, 7
    %v5998 = vsub.s32 2, %v5997
    %v5999 = vrot.slane %v5986, %v5998
    %v6000 = vlaneseq
    %v6001 = vshrl.u32 %v6000, 7
    %v6002 = vsub.s32 3, %v6001
    %v6003 = vrot.slane %v5986, %v6002
    %v6008 = vmul.f32 %v5991, %v5926
    %v6009 = vmul.f32 %v5995, %v5928
    %v6010 = vmul.f32 %v5999, %v5969
    %v6011 = vmul.f32 %v6003, %v5971
    %v6012 = vmul.f32 %v5991, %v5930
    %v6013 = vmul.f32 %v5995, %v5932
    %v6014 = vmul.f32 %v5999, %v5973
    %v6015 = vmul.f32 %v6003, %v5975
    %v6016 = vsel %vm5977, %v5926, %v6008
    %v6017 = vsel %vm5978, %v5928, %v6009
    %v6018 = vsel %vm5979, %v5969, %v6010
    %v6019 = vsel %vm5980, %v5971, %v6011
    %v6020 = vsel %vm5981, %v5930, %v6012
    %v6021 = vsel %vm5982, %v5932, %v6013
    %v6022 = vsel %vm5983, %v5973, %v6014
    %v6023 = vsel %vm5984, %v5975, %v6015
    %v6024 = vadd.f32 %v4083, %v6016
    %v6025 = vadd.f32 %v4084, %v6017
    %v6026 = vadd.f32 %v4085, %v6018
    %v6027 = vadd.f32 %v4086, %v6019
    %v6028 = vadd.f32 %v4087, %v6020
    %v6029 = vadd.f32 %v4088, %v6021
    %v6030 = vadd.f32 %v4089, %v6022
    %v6031 = vadd.f32 %v4090, %v6023
    %6032 = vst [vmem:[#allocation19] sm:$0xff] %v6024
    %6033 = vst [vmem:[#allocation19 + $0x8] sm:$0xff] %v6025
    %6034 = vst [vmem:[#allocation19 + $0x10] sm:$0xff] %v6026
    %6035 = vst [vmem:[#allocation19 + $0x18] sm:$0xff] %v6027
    %6036 = vst [vmem:[#allocation19 + $0x20] sm:$0xff] %v6028
    %6037 = vst [vmem:[#allocation19 + $0x28] sm:$0xff] %v6029
    %6038 = vst [vmem:[#allocation19 + $0x30] sm:$0xff] %v6030
    %6039 = vst [vmem:[#allocation19 + $0x38] sm:$0xff] %v6031
    // Predicated region
    $region82: #{tpu_custom_call.1} parent=1 // pred_check
      _
    $region83: #{tpu_custom_call.1} parent=1 // pred_check_branch
      %6041 = sbr.rel (0) target = $region85
    $region84: #{tpu_custom_call.1} parent=1 // pred_region
      %s6043 = ssub.s32 1024, 1024
      %6044 = vsyncadd [#allocation4], %s6043
      %s6045 = sshll.u32 [#allocation19], 4
      %s6046 = int_to_ptr.vmem [resolvable:$true] %s6045
      %6051 = dma.vmem_to_hbm [thread:$0]  %s6046, 1024, %s10, [#allocation4], 512, 512, 32
    $region85: #{tpu_custom_call.1} parent=1 // pred_fallthru
      _
    // Predicated region
    $region86: #{tpu_custom_call.1} parent=1 // pred_check
      _
    $region87: #{tpu_custom_call.1} parent=1 // pred_check_branch
      %6053 = sbr.rel (0) target = $region89
    $region88: #{tpu_custom_call.1} parent=1 // pred_region
      %6054 = dma.done [#allocation4], 1024
    $region89: #{tpu_custom_call.1} parent=1 // pred_fallthru
      _
    %6055 = vsyncpa [#allocation3], 1
    %6056 = vsyncpa [#allocation6], 1
    %6057 = vsyncpa [#allocation9], 1
    %6058 = vsyncpa [#allocation12], 1
    %6059 = vsyncpa [#allocation15], 1
    %6060 = vsyncpa [#allocation18], 1
    %6061 = vsyncpa [#allocation4], 1

</llo_original>
